<compile_context>
chip_gen: v5e
topology: v5e:2x2
jax: 0.10.0
libtpu: 0.0.40
codegen_flags: <defaults>
</compile_context>

<pallas_src>
import functools

import jax
import jax.numpy as jnp
from jax import lax
from jax.experimental import pallas as pl
from jax.experimental.pallas import tpu as pltpu


# ---------------------------------------------------------------------------
# Kernel
# ---------------------------------------------------------------------------
def _basenet2b_kernel(x_ref, w0_ref, b0_ref, wh_ref, bh_ref, w2_ref, b2_ref,
                      o_ref, *, n_layers, activation, act_dtype):
    def _act(z):
        if activation == "softplus":
            return jax.nn.softplus(z)
        elif activation == "relu":
            return jnp.maximum(z, 0.0)
        elif activation == "elu":
            # clamp the exp argument so the dead branch doesn't blow up to inf
            return jnp.where(z > 0.0, z, jnp.expm1(jnp.minimum(z, 0.0)))
        raise ValueError("unknown activation:" + activation)

    # Layer 0 (Sin). x arrives in native (tn, x_dim) layout; contract x_dim of
    # both operands (A @ B.T form) so we get (h_dim, tn) directly -- batch on
    # the 128-lane axis, no transpose materialized in HBM or VMEM.
    # W0 already includes x_scale (folded once at parameter-prep time).
    z0 = lax.dot_general(
        w0_ref[...], x_ref[...],
        dimension_numbers=(((1,), (1,)), ((), ())),
        preferred_element_type=jnp.float32,
    ) + b0_ref[...]                                           # (h_dim, tn) f32
    h = jnp.sin(z0)

    # Hidden stack: n_layers x (Linear(h_dim -> h_dim) + activation).
    # Weights are pre-cast (bf16 on v6e/v7x if requested) -- no per-step casts.
    for l in range(n_layers):
        rhs = h if h.dtype == wh_ref.dtype else h.astype(wh_ref.dtype)
        z = jnp.dot(wh_ref[l], rhs,
                    preferred_element_type=jnp.float32) + bh_ref[l]
        if act_dtype is not None and z.dtype != act_dtype:
            # bf16 transcendentals (EUP runs bf16 at ~2x rate on v6e/v7x); the
            # next matmul wants a bf16 rhs anyway when weights are bf16.
            z = z.astype(act_dtype)
        h = _act(z)

    # Output layer (weight pre-scaled by gamma, bias zeroed at init time).
    rhs = h if h.dtype == w2_ref.dtype else h.astype(w2_ref.dtype)
    y = jnp.dot(w2_ref[...], rhs,
                preferred_element_type=jnp.float32) + b2_ref[...]
    o_ref[...] = y.astype(o_ref.dtype)                        # lane-dense store


# ---------------------------------------------------------------------------
# Tiling / VMEM helpers
# ---------------------------------------------------------------------------
def _round_up(v, m):
    return -(-v // m) * m


def _choose_tn(n, tn_target, min_steps=2):
    """Largest batch tile that (a) divides N, (b) is a multiple of 128, and
    (c) leaves at least `min_steps` grid steps so a v7x megacore keeps both
    TensorCores busy. Falls back to a single full-array step otherwise."""
    if n % 128 != 0:
        return n                       # single step, full-dim block is legal
    limit = min(tn_target, n // min_steps)
    if limit < 128:
        return n                       # too small to split: single step
    best = 128 if n % 128 == 0 else n
    t = 128
    while t <= limit:
        if n % t == 0:
            best = t
        t += 128
    return best


def _vmem_limit_bytes(tn, x_dim, h_dim, y_dim, n_layers, w_itemsize):
    """Rough padded working-set estimate (double-buffered I/O blocks + live
    activations + resident weights), x2 margin, clamped to [8 MiB, 32 MiB]."""
    x_blk = 4 * _round_up(tn, 8) * _round_up(x_dim, 128)
    y_blk = 4 * _round_up(y_dim, 8) * _round_up(tn, 128)
    h_blk = 4 * _round_up(h_dim, 8) * _round_up(tn, 128)
    w_bytes = (4 * _round_up(h_dim, 8) * _round_up(x_dim, 128)
               + w_itemsize * n_layers * _round_up(h_dim, 8) * _round_up(h_dim, 128)
               + w_itemsize * _round_up(y_dim, 8) * _round_up(h_dim, 128)
               + 4 * (1 + n_layers + 1) * _round_up(h_dim, 8) * 128)
    footprint = 2 * x_blk + 2 * y_blk + (n_layers + 4) * h_blk + 2 * w_bytes
    return int(min(max(2 * footprint, 8 << 20), 32 << 20))


# ---------------------------------------------------------------------------
# Wrapper
# ---------------------------------------------------------------------------
def basenet2b_forward(x, prepared_params, *, n_layers, activation="softplus",
                      tn=2048, act_dtype=None, transpose_output=True):
    """x: (N, x_dim) float32. Returns (N, y_dim) f32 (or (y_dim, N) if
    transpose_output=False and the consumer accepts the lane-dense layout).

    prepared_params come from `prepare_basenet2b_params` (x_scale folded into
    w0, biases shaped (dim, 1), weights in (out_dim, in_dim), optionally
    pre-cast to bf16).  On v5e keep act_dtype=None and tn ~512-1024; on
    v6e/v7x use weights_dtype=act_dtype=jnp.bfloat16 and tn 2048-8192.
    """
    w0, b0, wh, bh, w2, b2 = prepared_params
    N, x_dim = x.shape
    h_dim = w0.shape[0]
    y_dim = w2.shape[0]

    tn = _choose_tn(N, min(tn, N))
    assert N % tn == 0

    kernel = functools.partial(
        _basenet2b_kernel,
        n_layers=n_layers, activation=activation, act_dtype=act_dtype,
    )

    # Advisory cost estimate for XLA's scheduler.
    flops = 2 * N * (x_dim * h_dim + n_layers * h_dim * h_dim + h_dim * y_dim)
    if activation == "softplus":
        transcendentals = N * h_dim * (1 + 2 * n_layers)   # sin + (exp, log1p)*L
    elif activation == "elu":
        transcendentals = N * h_dim * (1 + n_layers)       # sin + expm1*L
    else:
        transcendentals = N * h_dim                        # sin only
    w_itemsize = jnp.dtype(wh.dtype).itemsize
    bytes_accessed = (4 * (x.size + N * y_dim + w0.size + b0.size + bh.size + b2.size)
                      + w_itemsize * (wh.size + w2.size))
    cost = pl.CostEstimate(flops=flops, transcendentals=transcendentals,
                           bytes_accessed=bytes_accessed)

    grid_spec = pl.GridSpec(
        grid=(N // tn,),
        in_specs=[
            # x: tiled over the batch dimension in its native (N, x_dim) layout
            pl.BlockSpec((tn, x_dim), lambda i: (i, 0)),
            # weights / biases: full arrays, resident across grid steps
            pl.BlockSpec((h_dim, x_dim), lambda i: (0, 0)),
            pl.BlockSpec((h_dim, 1), lambda i: (0, 0)),
            pl.BlockSpec((n_layers, h_dim, h_dim), lambda i: (0, 0, 0)),
            pl.BlockSpec((n_layers, h_dim, 1), lambda i: (0, 0, 0)),
            pl.BlockSpec((y_dim, h_dim), lambda i: (0, 0)),
            pl.BlockSpec((y_dim, 1), lambda i: (0, 0)),
        ],
        # (y_dim, tn) output block: batch on lanes -> unmasked, dense vst's
        out_specs=pl.BlockSpec((y_dim, tn), lambda i: (0, i)),
    )

    y_t = pl.pallas_call(
        kernel,
        out_shape=jax.ShapeDtypeStruct((y_dim, N), jnp.float32),
        grid_spec=grid_spec,
        compiler_params=pltpu.CompilerParams(
            dimension_semantics=("parallel",),
            vmem_limit_bytes=_vmem_limit_bytes(tn, x_dim, h_dim, y_dim,
                                               n_layers, w_itemsize),
        ),
        cost_estimate=cost,
    )(x, w0, b0, wh, bh, w2, b2)

    return y_t.T if transpose_output else y_t


# ---------------------------------------------------------------------------
# Parameter init (PyTorch-layout) + kernel-side preparation
# ---------------------------------------------------------------------------
def init_basenet2b_params(key, x_dim, h_dim, n_layers, y_dim, gamma):
    """Synthetic init mirroring the PyTorch module (weights are (out, in))."""
    ks = jax.random.split(key, 8)

    # layer0 (Sin, is_first=True): weight ~ U(-1/in_dim, 1/in_dim)
    w0 = jax.random.uniform(ks[0], (h_dim, x_dim), jnp.float32,
                            minval=-1.0 / x_dim, maxval=1.0 / x_dim)
    b0 = jax.random.uniform(ks[1], (h_dim,), jnp.float32,
                            minval=-1.0 / jnp.sqrt(float(x_dim)),
                            maxval=1.0 / jnp.sqrt(float(x_dim)))

    # hidden Linear(h_dim, h_dim) stack: PyTorch-default uniform init
    bound_h = 1.0 / jnp.sqrt(float(h_dim))
    wh = jax.random.uniform(ks[2], (n_layers, h_dim, h_dim), jnp.float32,
                            minval=-bound_h, maxval=bound_h)
    bh = jax.random.uniform(ks[3], (n_layers, h_dim), jnp.float32,
                            minval=-bound_h, maxval=bound_h)

    # layer2: weight *= gamma, bias *= 0
    w2 = gamma * jax.random.uniform(ks[4], (y_dim, h_dim), jnp.float32,
                                    minval=-bound_h, maxval=bound_h)
    b2 = jnp.zeros((y_dim,), jnp.float32)
    return (w0, b0, wh, bh, w2, b2)


def prepare_basenet2b_params(params, x_scale, weights_dtype=None):
    """One-time transform: fold x_scale into w0, shape biases as (dim, 1), and
    optionally pre-cast the hidden / output matmul weights (e.g. bf16 on
    v6e/v7x) so no per-step casts happen inside the kernel. w0 and all biases
    stay f32 (layer-0 precision + f32 accumulation)."""
    w0, b0, wh, bh, w2, b2 = params
    if weights_dtype is not None:
        wh = wh.astype(weights_dtype)
        w2 = w2.astype(weights_dtype)
    return (x_scale * w0, b0[:, None], wh, bh[:, :, None], w2, b2[:, None])


# ---------------------------------------------------------------------------
# Pure-JAX reference (PyTorch semantics)
# ---------------------------------------------------------------------------
def _reference_forward(x, params, x_scale, n_layers, activation):
    w0, b0, wh, bh, w2, b2 = params
    h = jnp.sin((x_scale * x) @ w0.T + b0)
    for l in range(n_layers):
        z = h @ wh[l].T + bh[l]
        if activation == "softplus":
            h = jax.nn.softplus(z)
        elif activation == "relu":
            h = jnp.maximum(z, 0.0)
        else:  # elu
            h = jnp.where(z > 0.0, z, jnp.expm1(jnp.minimum(z, 0.0)))
    return h @ w2.T + b2


if __name__ == "__main__":
    # Module hyperparameters (small, consistent with the forward pass).
    x_dim, h_dim, n_layers, y_dim = 3, 32, 3, 3
    x_scale, gamma = 2.0, 0.1
    N = 1024        # small demo batch; tile chooser -> tn=512, 2 parallel steps

    key = jax.random.PRNGKey(0)
    k_param, k_x = jax.random.split(key)

    params = init_basenet2b_params(k_param, x_dim, h_dim, n_layers, y_dim, gamma)
    x = jax.random.normal(k_x, (N, x_dim), jnp.float32)
    y_ref = _reference_forward(x, params, x_scale, n_layers, "softplus")

    # --- f32 path (default): must match the PyTorch semantics tightly. ------
    prep_f32 = prepare_basenet2b_params(params, x_scale)
    y = basenet2b_forward(x, prep_f32, n_layers=n_layers, activation="softplus")
    y = jax.block_until_ready(y)
    assert y.shape == (N, y_dim)
    assert jnp.allclose(y, y_ref, atol=1e-5, rtol=1e-5)

    # --- bf16 weights + bf16 activations path (v6e/v7x fast path): ----------
    # validated with a looser tolerance as per the review before anyone turns
    # it on by default.  On v5e keep act_dtype=None (no bf16 VPU/EUP).
    prep_bf16 = prepare_basenet2b_params(params, x_scale,
                                         weights_dtype=jnp.bfloat16)
    y_bf16 = basenet2b_forward(x, prep_bf16, n_layers=n_layers,
                               activation="softplus",
                               act_dtype=jnp.bfloat16)
    y_bf16 = jax.block_until_ready(y_bf16)
    assert jnp.allclose(y_bf16, y_ref, atol=5e-2, rtol=5e-2)

    print("KERNEL_OK")
</pallas_src>

<mosaic_0001>
module attributes {stable_mosaic.version = 11 : i64} {
  func.func @_basenet2b_kernel(%arg0: i32, %arg1: memref<512x3xf32, #tpu.memory_space<vmem>>, %arg2: memref<32x3xf32, #tpu.memory_space<vmem>>, %arg3: memref<32x1xf32, #tpu.memory_space<vmem>>, %arg4: memref<3x32x32xf32, #tpu.memory_space<vmem>>, %arg5: memref<3x32x1xf32, #tpu.memory_space<vmem>>, %arg6: memref<3x32xf32, #tpu.memory_space<vmem>>, %arg7: memref<3x1xf32, #tpu.memory_space<vmem>>, %arg8: memref<3x512xf32, #tpu.memory_space<vmem>>) attributes {dimension_semantics = [#tpu.dimension_semantics<parallel>], iteration_bounds = array<i64: 2>, scalar_prefetch = 0 : i64, scratch_operands = 0 : i64, tpu.core_type = #tpu.core_type<tc>, window_params = [{transform_indices = @transform_0, window_bounds = array<i64: 512, 3>}, {pipeline_mode = #tpu.pipeline_mode<synchronous>, transform_indices = @transform_1, window_bounds = array<i64: 32, 3>}, {pipeline_mode = #tpu.pipeline_mode<synchronous>, transform_indices = @transform_2, window_bounds = array<i64: 32, 1>}, {pipeline_mode = #tpu.pipeline_mode<synchronous>, transform_indices = @transform_3, window_bounds = array<i64: 3, 32, 32>}, {pipeline_mode = #tpu.pipeline_mode<synchronous>, transform_indices = @transform_4, window_bounds = array<i64: 3, 32, 1>}, {pipeline_mode = #tpu.pipeline_mode<synchronous>, transform_indices = @transform_5, window_bounds = array<i64: 3, 32>}, {pipeline_mode = #tpu.pipeline_mode<synchronous>, transform_indices = @transform_6, window_bounds = array<i64: 3, 1>}, {transform_indices = @transform_7, window_bounds = array<i64: 3, 512>}]} {
    %c0 = arith.constant 0 : index
    %c0_0 = arith.constant 0 : index
    %0 = vector.load %arg2[%c0, %c0_0] : memref<32x3xf32, #tpu.memory_space<vmem>>, vector<32x3xf32>
    %c0_1 = arith.constant 0 : index
    %c0_2 = arith.constant 0 : index
    %1 = vector.load %arg1[%c0_1, %c0_2] : memref<512x3xf32, #tpu.memory_space<vmem>>, vector<512x3xf32>
    %cst = arith.constant dense<0.000000e+00> : vector<32x512xf32>
    %2 = tpu.matmul %0, %1, %cst {dimension_numbers = #tpu.dot_dimension_numbers<[1], [1], [0], [0], [0, 0, 1, 0], [], []>} : vector<32x3xf32>, vector<512x3xf32>, vector<32x512xf32> -> vector<32x512xf32>
    %c0_3 = arith.constant 0 : index
    %c0_4 = arith.constant 0 : index
    %3 = vector.load %arg3[%c0_3, %c0_4] : memref<32x1xf32, #tpu.memory_space<vmem>>, vector<32x1xf32>
    %4 = vector.broadcast %3 : vector<32x1xf32> to vector<32x512xf32>
    %5 = arith.addf %2, %4 : vector<32x512xf32>
    %6 = math.sin %5 : vector<32x512xf32>
    %c0_5 = arith.constant 0 : index
    %c0_6 = arith.constant 0 : index
    %c0_7 = arith.constant 0 : index
    %7 = vector.load %arg4[%c0_5, %c0_6, %c0_7] : memref<3x32x32xf32, #tpu.memory_space<vmem>>, vector<1x32x32xf32>
    %8 = vector.shape_cast %7 : vector<1x32x32xf32> to vector<32x32xf32>
    %cst_8 = arith.constant dense<0.000000e+00> : vector<32x512xf32>
    %9 = tpu.matmul %8, %6, %cst_8 {dimension_numbers = #tpu.dot_dimension_numbers<[1], [0], [0], [1], [0, 0, 1, 1], [], []>} : vector<32x32xf32>, vector<32x512xf32>, vector<32x512xf32> -> vector<32x512xf32>
    %c0_9 = arith.constant 0 : index
    %c0_10 = arith.constant 0 : index
    %c0_11 = arith.constant 0 : index
    %10 = vector.load %arg5[%c0_9, %c0_10, %c0_11] : memref<3x32x1xf32, #tpu.memory_space<vmem>>, vector<1x32x1xf32>
    %11 = vector.shape_cast %10 : vector<1x32x1xf32> to vector<32x1xf32>
    %12 = vector.broadcast %11 : vector<32x1xf32> to vector<32x512xf32>
    %13 = arith.addf %9, %12 : vector<32x512xf32>
    %cst_12 = arith.constant 0.000000e+00 : f32
    %14 = vector.broadcast %cst_12 : f32 to vector<32x512xf32>
    %15 = arith.maximumf %13, %14 : vector<32x512xf32>
    %16 = vector.broadcast %cst_12 : f32 to vector<32x512xf32>
    %17 = arith.subf %13, %16 : vector<32x512xf32>
    %18 = arith.cmpf one, %17, %17 : vector<32x512xf32>
    %19 = vector.broadcast %cst_12 : f32 to vector<32x512xf32>
    %20 = arith.addf %13, %19 : vector<32x512xf32>
    %21 = math.absf %17 : vector<32x512xf32>
    %cst_13 = arith.constant 0.000000e+00 : f32
    %22 = vector.broadcast %cst_13 : f32 to vector<32x512xf32>
    %23 = arith.subf %22, %21 : vector<32x512xf32>
    %24 = math.exp %23 : vector<32x512xf32>
    %25 = math.log1p %24 : vector<32x512xf32>
    %26 = arith.addf %15, %25 : vector<32x512xf32>
    %27 = arith.select %18, %20, %26 : vector<32x512xi1>, vector<32x512xf32>
    %c1 = arith.constant 1 : index
    %c0_14 = arith.constant 0 : index
    %c0_15 = arith.constant 0 : index
    %28 = vector.load %arg4[%c1, %c0_14, %c0_15] : memref<3x32x32xf32, #tpu.memory_space<vmem>>, vector<1x32x32xf32>
    %29 = vector.shape_cast %28 : vector<1x32x32xf32> to vector<32x32xf32>
    %cst_16 = arith.constant dense<0.000000e+00> : vector<32x512xf32>
    %30 = tpu.matmul %29, %27, %cst_16 {dimension_numbers = #tpu.dot_dimension_numbers<[1], [0], [0], [1], [0, 0, 1, 1], [], []>} : vector<32x32xf32>, vector<32x512xf32>, vector<32x512xf32> -> vector<32x512xf32>
    %c1_17 = arith.constant 1 : index
    %c0_18 = arith.constant 0 : index
    %c0_19 = arith.constant 0 : index
    %31 = vector.load %arg5[%c1_17, %c0_18, %c0_19] : memref<3x32x1xf32, #tpu.memory_space<vmem>>, vector<1x32x1xf32>
    %32 = vector.shape_cast %31 : vector<1x32x1xf32> to vector<32x1xf32>
    %33 = vector.broadcast %32 : vector<32x1xf32> to vector<32x512xf32>
    %34 = arith.addf %30, %33 : vector<32x512xf32>
    %cst_20 = arith.constant 0.000000e+00 : f32
    %35 = vector.broadcast %cst_20 : f32 to vector<32x512xf32>
    %36 = arith.maximumf %34, %35 : vector<32x512xf32>
    %37 = vector.broadcast %cst_20 : f32 to vector<32x512xf32>
    %38 = arith.subf %34, %37 : vector<32x512xf32>
    %39 = arith.cmpf one, %38, %38 : vector<32x512xf32>
    %40 = vector.broadcast %cst_20 : f32 to vector<32x512xf32>
    %41 = arith.addf %34, %40 : vector<32x512xf32>
    %42 = math.absf %38 : vector<32x512xf32>
    %cst_21 = arith.constant 0.000000e+00 : f32
    %43 = vector.broadcast %cst_21 : f32 to vector<32x512xf32>
    %44 = arith.subf %43, %42 : vector<32x512xf32>
    %45 = math.exp %44 : vector<32x512xf32>
    %46 = math.log1p %45 : vector<32x512xf32>
    %47 = arith.addf %36, %46 : vector<32x512xf32>
    %48 = arith.select %39, %41, %47 : vector<32x512xi1>, vector<32x512xf32>
    %c2 = arith.constant 2 : index
    %c0_22 = arith.constant 0 : index
    %c0_23 = arith.constant 0 : index
    %49 = vector.load %arg4[%c2, %c0_22, %c0_23] : memref<3x32x32xf32, #tpu.memory_space<vmem>>, vector<1x32x32xf32>
    %50 = vector.shape_cast %49 : vector<1x32x32xf32> to vector<32x32xf32>
    %cst_24 = arith.constant dense<0.000000e+00> : vector<32x512xf32>
    %51 = tpu.matmul %50, %48, %cst_24 {dimension_numbers = #tpu.dot_dimension_numbers<[1], [0], [0], [1], [0, 0, 1, 1], [], []>} : vector<32x32xf32>, vector<32x512xf32>, vector<32x512xf32> -> vector<32x512xf32>
    %c2_25 = arith.constant 2 : index
    %c0_26 = arith.constant 0 : index
    %c0_27 = arith.constant 0 : index
    %52 = vector.load %arg5[%c2_25, %c0_26, %c0_27] : memref<3x32x1xf32, #tpu.memory_space<vmem>>, vector<1x32x1xf32>
    %53 = vector.shape_cast %52 : vector<1x32x1xf32> to vector<32x1xf32>
    %54 = vector.broadcast %53 : vector<32x1xf32> to vector<32x512xf32>
    %55 = arith.addf %51, %54 : vector<32x512xf32>
    %cst_28 = arith.constant 0.000000e+00 : f32
    %56 = vector.broadcast %cst_28 : f32 to vector<32x512xf32>
    %57 = arith.maximumf %55, %56 : vector<32x512xf32>
    %58 = vector.broadcast %cst_28 : f32 to vector<32x512xf32>
    %59 = arith.subf %55, %58 : vector<32x512xf32>
    %60 = arith.cmpf one, %59, %59 : vector<32x512xf32>
    %61 = vector.broadcast %cst_28 : f32 to vector<32x512xf32>
    %62 = arith.addf %55, %61 : vector<32x512xf32>
    %63 = math.absf %59 : vector<32x512xf32>
    %cst_29 = arith.constant 0.000000e+00 : f32
    %64 = vector.broadcast %cst_29 : f32 to vector<32x512xf32>
    %65 = arith.subf %64, %63 : vector<32x512xf32>
    %66 = math.exp %65 : vector<32x512xf32>
    %67 = math.log1p %66 : vector<32x512xf32>
    %68 = arith.addf %57, %67 : vector<32x512xf32>
    %69 = arith.select %60, %62, %68 : vector<32x512xi1>, vector<32x512xf32>
    %c0_30 = arith.constant 0 : index
    %c0_31 = arith.constant 0 : index
    %70 = vector.load %arg6[%c0_30, %c0_31] : memref<3x32xf32, #tpu.memory_space<vmem>>, vector<3x32xf32>
    %cst_32 = arith.constant dense<0.000000e+00> : vector<3x512xf32>
    %71 = tpu.matmul %70, %69, %cst_32 {dimension_numbers = #tpu.dot_dimension_numbers<[1], [0], [0], [1], [0, 0, 1, 1], [], []>} : vector<3x32xf32>, vector<32x512xf32>, vector<3x512xf32> -> vector<3x512xf32>
    %c0_33 = arith.constant 0 : index
    %c0_34 = arith.constant 0 : index
    %72 = vector.load %arg7[%c0_33, %c0_34] : memref<3x1xf32, #tpu.memory_space<vmem>>, vector<3x1xf32>
    %73 = vector.broadcast %72 : vector<3x1xf32> to vector<3x512xf32>
    %74 = arith.addf %71, %73 : vector<3x512xf32>
    %c0_35 = arith.constant 0 : index
    %c0_36 = arith.constant 0 : index
    %75 = vector.load %arg8[%c0_35, %c0_36] : memref<3x512xf32, #tpu.memory_space<vmem>>, vector<3x512xf32>
    tpu.vector_store %arg8[%c0_35, %c0_36], %74 {strides = array<i32>} : memref<3x512xf32, #tpu.memory_space<vmem>>, vector<3x512xf32>,
    return
  }
  func.func @transform_0(%arg0: i32) -> (i32, i32) {
    %c0_i32 = arith.constant 0 : i32
    %c0_i32_0 = arith.constant 0 : i32
    return %arg0, %c0_i32 : i32, i32
  }
  func.func @transform_1(%arg0: i32) -> (i32, i32) {
    %c0_i32 = arith.constant 0 : i32
    %c0_i32_0 = arith.constant 0 : i32
    %c0_i32_1 = arith.constant 0 : i32
    return %c0_i32, %c0_i32_0 : i32, i32
  }
  func.func @transform_2(%arg0: i32) -> (i32, i32) {
    %c0_i32 = arith.constant 0 : i32
    %c0_i32_0 = arith.constant 0 : i32
    %c0_i32_1 = arith.constant 0 : i32
    return %c0_i32, %c0_i32_0 : i32, i32
  }
  func.func @transform_3(%arg0: i32) -> (i32, i32, i32) {
    %c0_i32 = arith.constant 0 : i32
    %c0_i32_0 = arith.constant 0 : i32
    %c0_i32_1 = arith.constant 0 : i32
    %c0_i32_2 = arith.constant 0 : i32
    return %c0_i32, %c0_i32_0, %c0_i32_1 : i32, i32, i32
  }
  func.func @transform_4(%arg0: i32) -> (i32, i32, i32) {
    %c0_i32 = arith.constant 0 : i32
    %c0_i32_0 = arith.constant 0 : i32
    %c0_i32_1 = arith.constant 0 : i32
    %c0_i32_2 = arith.constant 0 : i32
    return %c0_i32, %c0_i32_0, %c0_i32_1 : i32, i32, i32
  }
  func.func @transform_5(%arg0: i32) -> (i32, i32) {
    %c0_i32 = arith.constant 0 : i32
    %c0_i32_0 = arith.constant 0 : i32
    %c0_i32_1 = arith.constant 0 : i32
    return %c0_i32, %c0_i32_0 : i32, i32
  }
  func.func @transform_6(%arg0: i32) -> (i32, i32) {
    %c0_i32 = arith.constant 0 : i32
    %c0_i32_0 = arith.constant 0 : i32
    %c0_i32_1 = arith.constant 0 : i32
    return %c0_i32, %c0_i32_0 : i32, i32
  }
  func.func @transform_7(%arg0: i32) -> (i32, i32) {
    %c0_i32 = arith.constant 0 : i32
    %c0_i32_0 = arith.constant 0 : i32
    return %c0_i32, %arg0 : i32, i32
  }
}

</mosaic_0001>

<llo_original>
// kernel: tpu_custom_call.1
$region0: #{tpu_custom_call.1}
  #allocation0 [shape = 'u32[]', space=smem, size = 0x4, offset = 0x4, fixed_abs, tag = 'smem constant byte address 0x4 - core index']
  #allocation1 [shape = 'u32[72,128]{1,0:T(1,128)}', space=vmem, size = 0x9000, scoped, tag = 'internal scratch']
  %s0 = inlined_call_operand.vmem [shape: f32[1024,3], index: 0, kind: input, shape index: {}]
  %s1 = inlined_call_operand.vmem [shape: f32[32,3], index: 1, kind: input, shape index: {}]
  %s2 = inlined_call_operand.vmem [shape: f32[32,1], index: 2, kind: input, shape index: {}]
  %s3 = inlined_call_operand.vmem [shape: f32[3,32,32], index: 3, kind: input, shape index: {}]
  %s4 = inlined_call_operand.vmem [shape: f32[3,32,1], index: 4, kind: input, shape index: {}]
  %s5 = inlined_call_operand.vmem [shape: f32[3,32], index: 5, kind: input, shape index: {}]
  %s6 = inlined_call_operand.vmem [shape: f32[3,1], index: 6, kind: input, shape index: {}]
  %s7 = inlined_call_operand.hbm [shape: f32[3,1024], index: 7, kind: output, shape index: {}]
  %s8 = sld [smem:[#allocation0]]
  $region61: #{tpu_custom_call.1} parent=0
    _
  %s10 = ssub.s32 1, %s8
  %s11 = scalar_select 0, %s10, %s8
  $region1: #{tpu_custom_call.1} parent=0
    #allocation2 [shape = 'u8[16384]{0}', space=vmem, size = 0x4000, scoped, tag = 'output window, operand 0']
    #allocation3 [shape = 's32[2]{0}', space=sflag, size = 0x8, scoped, tag = 'scoped memory for tpu_custom_call.1']
    %12 = vsyncpa [#allocation3], 0
    %s13 = scalar_lea.sflag [#allocation3], 1
    %14 = vsyncpa %s13, 0
    loop: start=0, step=1, limit=4
    $region2: #{tpu_custom_call.1} parent=1 // loop_pre_header
      _
    $region3: #{tpu_custom_call.1} parent=1 // loop_header
      %s16 = sphi 0, %s20
      %p17 = scmp.ge.s32.totalorder %s16, 4
      %s26 = sphi 0, %s28
      %s29 = sphi 0, %s26
      %s30 = sphi 0, %s29
      %s46 = sphi 0, %s30
      %s50 = sphi 0, %s50
      %s52 = sphi 0, %s50
      %s53 = sphi 0, %s52
      %s67 = sphi 0, %s53
      %s71 = sphi 0, %s71
      %s73 = sphi 0, %s71
      %s74 = sphi 0, %s73
      %s88 = sphi 0, %s74
      %s92 = sphi 0, %s92
      %s94 = sphi 0, %s92
      %s95 = sphi 0, %s94
      %s109 = sphi 0, %s95
      %s113 = sphi 0, %s113
      %s115 = sphi 0, %s113
      %s116 = sphi 0, %s115
      %s130 = sphi 0, %s116
      %s134 = sphi 0, %s134
      %s136 = sphi 0, %s134
      %s137 = sphi 0, %s136
      %s151 = sphi 0, %s137
      %s155 = sphi 0, %s155
      %s157 = sphi 0, %s155
      %s158 = sphi 0, %s157
      %s172 = sphi 0, %s158
      %s178 = sphi 0, %s180
      %s181 = sphi 0, %s178
      %s182 = sphi 0, %s181
      %s198 = sphi 0, %s182
    $region4: #{tpu_custom_call.1} parent=1 // loop_header_branch
      %19 = sbr.rel (%p17) target = $region8
    $region5: #{tpu_custom_call.1} parent=1 // loop_body
      %s21 = ssub.s32 %s16, 1
      %s22 = ssub.s32 %s16, 2
      %s23 = sadd.s32 %s16, 1
      %s24 = ssub.s32 %s16, %s23
      %p25 = scmp.eq.s32.totalorder %s24, 0
      %s27 = sadd.s32 %s26, 1
      %s28 = scalar_select %p25, %s26, %s27
      %p31 = pneg %p25
      %p32 = scmp.eq.s32.totalorder %s16, 1
      %p33 = por %p31, %p32
      %p34 = scmp.ne.s32.totalorder %s26, %s29
      %p35 = scmp.eq.s32.totalorder %s16, 0
      %p36 = por %p34, %p35
      %p37 = scmp.ne.s32.totalorder %s26, %s29
      %p38 = scmp.eq.s32.totalorder %s21, 1
      %p39 = por %p37, %p38
      %p40 = scmp.ne.s32.totalorder %s29, %s30
      %p41 = scmp.eq.s32.totalorder %s21, 0
      %p42 = por %p40, %p41
      %p43 = scmp.ne.s32.totalorder %s29, %s30
      %p44 = scmp.eq.s32.totalorder %s22, 1
      %p45 = por %p43, %p44
      %p47 = scmp.ne.s32.totalorder %s30, %s46
      %p48 = scmp.eq.s32.totalorder %s22, 0
      %p49 = por %p47, %p48
      %s51 = sadd.s32 %s50, 1
      %p54 = scmp.eq.s32.totalorder %s16, 1
      %p55 = scmp.ne.s32.totalorder %s50, %s52
      %p56 = scmp.eq.s32.totalorder %s16, 0
      %p57 = por %p55, %p56
      %p58 = scmp.ne.s32.totalorder %s50, %s52
      %p59 = scmp.eq.s32.totalorder %s21, 1
      %p60 = por %p58, %p59
      %p61 = scmp.ne.s32.totalorder %s52, %s53
      %p62 = scmp.eq.s32.totalorder %s21, 0
      %p63 = por %p61, %p62
      %p64 = scmp.ne.s32.totalorder %s52, %s53
      %p65 = scmp.eq.s32.totalorder %s22, 1
      %p66 = por %p64, %p65
      %p68 = scmp.ne.s32.totalorder %s53, %s67
      %p69 = scmp.eq.s32.totalorder %s22, 0
      %p70 = por %p68, %p69
      %s72 = sadd.s32 %s71, 1
      %p75 = scmp.eq.s32.totalorder %s16, 1
      %p76 = scmp.ne.s32.totalorder %s71, %s73
      %p77 = scmp.eq.s32.totalorder %s16, 0
      %p78 = por %p76, %p77
      %p79 = scmp.ne.s32.totalorder %s71, %s73
      %p80 = scmp.eq.s32.totalorder %s21, 1
      %p81 = por %p79, %p80
      %p82 = scmp.ne.s32.totalorder %s73, %s74
      %p83 = scmp.eq.s32.totalorder %s21, 0
      %p84 = por %p82, %p83
      %p85 = scmp.ne.s32.totalorder %s73, %s74
      %p86 = scmp.eq.s32.totalorder %s22, 1
      %p87 = por %p85, %p86
      %p89 = scmp.ne.s32.totalorder %s74, %s88
      %p90 = scmp.eq.s32.totalorder %s22, 0
      %p91 = por %p89, %p90
      %s93 = sadd.s32 %s92, 1
      %p96 = scmp.eq.s32.totalorder %s16, 1
      %p97 = scmp.ne.s32.totalorder %s92, %s94
      %p98 = scmp.eq.s32.totalorder %s16, 0
      %p99 = por %p97, %p98
      %p100 = scmp.ne.s32.totalorder %s92, %s94
      %p101 = scmp.eq.s32.totalorder %s21, 1
      %p102 = por %p100, %p101
      %p103 = scmp.ne.s32.totalorder %s94, %s95
      %p104 = scmp.eq.s32.totalorder %s21, 0
      %p105 = por %p103, %p104
      %p106 = scmp.ne.s32.totalorder %s94, %s95
      %p107 = scmp.eq.s32.totalorder %s22, 1
      %p108 = por %p106, %p107
      %p110 = scmp.ne.s32.totalorder %s95, %s109
      %p111 = scmp.eq.s32.totalorder %s22, 0
      %p112 = por %p110, %p111
      %s114 = sadd.s32 %s113, 1
      %p117 = scmp.eq.s32.totalorder %s16, 1
      %p118 = scmp.ne.s32.totalorder %s113, %s115
      %p119 = scmp.eq.s32.totalorder %s16, 0
      %p120 = por %p118, %p119
      %p121 = scmp.ne.s32.totalorder %s113, %s115
      %p122 = scmp.eq.s32.totalorder %s21, 1
      %p123 = por %p121, %p122
      %p124 = scmp.ne.s32.totalorder %s115, %s116
      %p125 = scmp.eq.s32.totalorder %s21, 0
      %p126 = por %p124, %p125
      %p127 = scmp.ne.s32.totalorder %s115, %s116
      %p128 = scmp.eq.s32.totalorder %s22, 1
      %p129 = por %p127, %p128
      %p131 = scmp.ne.s32.totalorder %s116, %s130
      %p132 = scmp.eq.s32.totalorder %s22, 0
      %p133 = por %p131, %p132
      %s135 = sadd.s32 %s134, 1
      %p138 = scmp.eq.s32.totalorder %s16, 1
      %p139 = scmp.ne.s32.totalorder %s134, %s136
      %p140 = scmp.eq.s32.totalorder %s16, 0
      %p141 = por %p139, %p140
      %p142 = scmp.ne.s32.totalorder %s134, %s136
      %p143 = scmp.eq.s32.totalorder %s21, 1
      %p144 = por %p142, %p143
      %p145 = scmp.ne.s32.totalorder %s136, %s137
      %p146 = scmp.eq.s32.totalorder %s21, 0
      %p147 = por %p145, %p146
      %p148 = scmp.ne.s32.totalorder %s136, %s137
      %p149 = scmp.eq.s32.totalorder %s22, 1
      %p150 = por %p148, %p149
      %p152 = scmp.ne.s32.totalorder %s137, %s151
      %p153 = scmp.eq.s32.totalorder %s22, 0
      %p154 = por %p152, %p153
      %s156 = sadd.s32 %s155, 1
      %p159 = scmp.eq.s32.totalorder %s16, 1
      %p160 = scmp.ne.s32.totalorder %s155, %s157
      %p161 = scmp.eq.s32.totalorder %s16, 0
      %p162 = por %p160, %p161
      %p163 = scmp.ne.s32.totalorder %s155, %s157
      %p164 = scmp.eq.s32.totalorder %s21, 1
      %p165 = por %p163, %p164
      %p166 = scmp.ne.s32.totalorder %s157, %s158
      %p167 = scmp.eq.s32.totalorder %s21, 0
      %p168 = por %p166, %p167
      %p169 = scmp.ne.s32.totalorder %s157, %s158
      %p170 = scmp.eq.s32.totalorder %s22, 1
      %p171 = por %p169, %p170
      %p173 = scmp.ne.s32.totalorder %s158, %s172
      %p174 = scmp.eq.s32.totalorder %s22, 0
      %p175 = por %p173, %p174
      %s176 = ssub.s32 %s16, %s23
      %p177 = scmp.eq.s32.totalorder %s176, 0
      %s179 = sadd.s32 %s178, 1
      %s180 = scalar_select %p177, %s178, %s179
      %p183 = pneg %p177
      %p184 = scmp.eq.s32.totalorder %s16, 1
      %p185 = por %p183, %p184
      %p186 = scmp.ne.s32.totalorder %s178, %s181
      %p187 = scmp.eq.s32.totalorder %s16, 0
      %p188 = por %p186, %p187
      %p189 = scmp.ne.s32.totalorder %s178, %s181
      %p190 = scmp.eq.s32.totalorder %s21, 1
      %p191 = por %p189, %p190
      %p192 = scmp.ne.s32.totalorder %s181, %s182
      %p193 = scmp.eq.s32.totalorder %s21, 0
      %p194 = por %p192, %p193
      %p195 = scmp.ne.s32.totalorder %s181, %s182
      %p196 = scmp.eq.s32.totalorder %s22, 1
      %p197 = por %p195, %p196
      %p199 = scmp.ne.s32.totalorder %s182, %s198
      %p200 = scmp.eq.s32.totalorder %s22, 0
      %p201 = por %p199, %p200
      %p202 = scmp.le.s32.totalorder 1, %s16
      %p203 = scmp.lt.s32.totalorder %s16, 3
      %p204 = pnand %p202, %p203
      %p205 = pneg %p204
      // Predicated region
      $region9: #{tpu_custom_call.1} parent=5 // pred_check
        _
      $region10: #{tpu_custom_call.1} parent=5 // pred_check_branch
        %207 = sbr.rel (%p204) target = $region12
      $region11: #{tpu_custom_call.1} parent=5 // pred_region
        %s208 = ssub.s32 %s16, 1
        // Predicated region
        $region13: #{tpu_custom_call.1} parent=11 // pred_check
          %p209 = pneg %p63
        $region14: #{tpu_custom_call.1} parent=11 // pred_check_branch
          %211 = sbr.rel (%p209) target = $region16
        $region15: #{tpu_custom_call.1} parent=11 // pred_region
          _
        $region16: #{tpu_custom_call.1} parent=11 // pred_fallthru
          _
        // Predicated region
        $region17: #{tpu_custom_call.1} parent=11 // pred_check
          %p212 = pneg %p84
        $region18: #{tpu_custom_call.1} parent=11 // pred_check_branch
          %214 = sbr.rel (%p212) target = $region20
        $region19: #{tpu_custom_call.1} parent=11 // pred_region
          _
        $region20: #{tpu_custom_call.1} parent=11 // pred_fallthru
          _
        // Predicated region
        $region21: #{tpu_custom_call.1} parent=11 // pred_check
          %p215 = pneg %p105
        $region22: #{tpu_custom_call.1} parent=11 // pred_check_branch
          %217 = sbr.rel (%p215) target = $region24
        $region23: #{tpu_custom_call.1} parent=11 // pred_region
          _
        $region24: #{tpu_custom_call.1} parent=11 // pred_fallthru
          _
        // Predicated region
        $region25: #{tpu_custom_call.1} parent=11 // pred_check
          %p218 = pneg %p126
        $region26: #{tpu_custom_call.1} parent=11 // pred_check_branch
          %220 = sbr.rel (%p218) target = $region28
        $region27: #{tpu_custom_call.1} parent=11 // pred_region
          _
        $region28: #{tpu_custom_call.1} parent=11 // pred_fallthru
          _
        // Predicated region
        $region29: #{tpu_custom_call.1} parent=11 // pred_check
          %p221 = pneg %p147
        $region30: #{tpu_custom_call.1} parent=11 // pred_check_branch
          %223 = sbr.rel (%p221) target = $region32
        $region31: #{tpu_custom_call.1} parent=11 // pred_region
          _
        $region32: #{tpu_custom_call.1} parent=11 // pred_fallthru
          _
        // Predicated region
        $region33: #{tpu_custom_call.1} parent=11 // pred_check
          %p224 = pneg %p168
        $region34: #{tpu_custom_call.1} parent=11 // pred_check_branch
          %226 = sbr.rel (%p224) target = $region36
        $region35: #{tpu_custom_call.1} parent=11 // pred_region
          _
        $region36: #{tpu_custom_call.1} parent=11 // pred_fallthru
          _
      $region12: #{tpu_custom_call.1} parent=5 // pred_fallthru
        _
      %p227 = scmp.lt.s32.totalorder %s16, 2
      // Predicated region
      $region37: #{tpu_custom_call.1} parent=5 // pred_check
        %p228 = pneg %p227
      $region38: #{tpu_custom_call.1} parent=5 // pred_check_branch
        %230 = sbr.rel (%p228) target = $region40
      $region39: #{tpu_custom_call.1} parent=5 // pred_region
        // Predicated region
        $region41: #{tpu_custom_call.1} parent=39 // pred_check
          %p231 = pneg %p36
        $region42: #{tpu_custom_call.1} parent=39 // pred_check_branch
          %233 = sbr.rel (%p231) target = $region44
        $region43: #{tpu_custom_call.1} parent=39 // pred_region
          %s234 = smul.u32 64, %s16
          %p235 = scmp.lt.s32.totalorder %s234, 127
          %s236 = scalar_select %p235, %s234, 127
          %s237 = smul.addr %s236, 8
          %s238 = scalar_lea.vmem %s0, %s237
          %s239 = smul.u32 64, %s16
        $region44: #{tpu_custom_call.1} parent=39 // pred_fallthru
          _
      $region40: #{tpu_custom_call.1} parent=5 // pred_fallthru
        _
      %p240 = scmp.le.s32.totalorder 1, %s16
      %p241 = scmp.lt.s32.totalorder %s16, 3
      %p242 = pnand %p240, %p241
      %p243 = pneg %p242
      // Predicated region
      $region45: #{tpu_custom_call.1} parent=5 // pred_check
        _
      $region46: #{tpu_custom_call.1} parent=5 // pred_check_branch
        %245 = sbr.rel (%p242) target = $region48
      $region47: #{tpu_custom_call.1} parent=5 // pred_region
        %s246 = ssub.s32 %s16, 1
        %s247 = smul.u32 64, %s21
        %p248 = scmp.lt.s32.totalorder %s247, 127
        %s249 = scalar_select %p248, %s247, 127
        %s250 = smul.addr %s249, 8
        %s251 = scalar_lea.vmem %s0, %s250
        %p252 = pneg %p42
        %p253 = pneg %p39
        %p254 = pneg %p63
        %p255 = pneg %p60
        %p256 = pneg %p84
        %p257 = pneg %p81
        %p258 = pneg %p105
        %p259 = pneg %p102
        %p260 = pneg %p126
        %p261 = pneg %p123
        %p262 = pneg %p147
        %p263 = pneg %p144
        %p264 = pneg %p168
        %p265 = pneg %p165
        %p266 = pneg %p194
        %p267 = pneg %p191
        %s268 = sand.u32 %s181, 1
        %s269 = scalar_lea.sflag [#allocation3], %s268
        %s270 = sand.u32 %s181, 1
        %s271 = smul.addr %s270, 16
        %s272 = scalar_lea.vmem [#allocation2], %s271
        %s273 = smul.u32 64, %s21
        %p274 = scmp.lt.s32.totalorder %s273, 127
        %s275 = scalar_select %p274, %s273, 127
        %s276 = smul.addr %s275, 8
        %s277 = scalar_lea.vmem %s0, %s276
        %s278 = smul.u32 64, %s21
        %s279 = smul.u32 4, %s21
        %v280 = vld [vmem:[%s1] sm:$0xff]
        %v281 = vld [vmem:[%s1 + $0x8] sm:$0xff]
        %v282 = vld [vmem:[%s1 + $0x10] sm:$0xff]
        %v283 = vld [vmem:[%s1 + $0x18] sm:$0xff]
        %v284 = vld [vmem:[%s277] sm:$0xff]
        %v285 = vld [vmem:[%s277 + $0x8] sm:$0xff]
        %v286 = vld [vmem:[%s277 + $0x10] sm:$0xff]
        %v287 = vld [vmem:[%s277 + $0x18] sm:$0xff]
        %v288 = vld [vmem:[%s277 + $0x20] sm:$0xff]
        %v289 = vld [vmem:[%s277 + $0x28] sm:$0xff]
        %v290 = vld [vmem:[%s277 + $0x30] sm:$0xff]
        %v291 = vld [vmem:[%s277 + $0x38] sm:$0xff]
        %v292 = vld [vmem:[%s277 + $0x40] sm:$0xff]
        %v293 = vld [vmem:[%s277 + $0x48] sm:$0xff]
        %v294 = vld [vmem:[%s277 + $0x50] sm:$0xff]
        %v295 = vld [vmem:[%s277 + $0x58] sm:$0xff]
        %v296 = vld [vmem:[%s277 + $0x60] sm:$0xff]
        %v297 = vld [vmem:[%s277 + $0x68] sm:$0xff]
        %v298 = vld [vmem:[%s277 + $0x70] sm:$0xff]
        %v299 = vld [vmem:[%s277 + $0x78] sm:$0xff]
        %v300 = vld [vmem:[%s277 + $0x80] sm:$0xff]
        %v301 = vld [vmem:[%s277 + $0x88] sm:$0xff]
        %v302 = vld [vmem:[%s277 + $0x90] sm:$0xff]
        %v303 = vld [vmem:[%s277 + $0x98] sm:$0xff]
        %v304 = vld [vmem:[%s277 + $0xa0] sm:$0xff]
        %v305 = vld [vmem:[%s277 + $0xa8] sm:$0xff]
        %v306 = vld [vmem:[%s277 + $0xb0] sm:$0xff]
        %v307 = vld [vmem:[%s277 + $0xb8] sm:$0xff]
        %v308 = vld [vmem:[%s277 + $0xc0] sm:$0xff]
        %v309 = vld [vmem:[%s277 + $0xc8] sm:$0xff]
        %v310 = vld [vmem:[%s277 + $0xd0] sm:$0xff]
        %v311 = vld [vmem:[%s277 + $0xd8] sm:$0xff]
        %v312 = vld [vmem:[%s277 + $0xe0] sm:$0xff]
        %v313 = vld [vmem:[%s277 + $0xe8] sm:$0xff]
        %v314 = vld [vmem:[%s277 + $0xf0] sm:$0xff]
        %v315 = vld [vmem:[%s277 + $0xf8] sm:$0xff]
        %v316 = vld [vmem:[%s277 + $0x100] sm:$0xff]
        %v317 = vld [vmem:[%s277 + $0x108] sm:$0xff]
        %v318 = vld [vmem:[%s277 + $0x110] sm:$0xff]
        %v319 = vld [vmem:[%s277 + $0x118] sm:$0xff]
        %v320 = vld [vmem:[%s277 + $0x120] sm:$0xff]
        %v321 = vld [vmem:[%s277 + $0x128] sm:$0xff]
        %v322 = vld [vmem:[%s277 + $0x130] sm:$0xff]
        %v323 = vld [vmem:[%s277 + $0x138] sm:$0xff]
        %v324 = vld [vmem:[%s277 + $0x140] sm:$0xff]
        %v325 = vld [vmem:[%s277 + $0x148] sm:$0xff]
        %v326 = vld [vmem:[%s277 + $0x150] sm:$0xff]
        %v327 = vld [vmem:[%s277 + $0x158] sm:$0xff]
        %v328 = vld [vmem:[%s277 + $0x160] sm:$0xff]
        %v329 = vld [vmem:[%s277 + $0x168] sm:$0xff]
        %v330 = vld [vmem:[%s277 + $0x170] sm:$0xff]
        %v331 = vld [vmem:[%s277 + $0x178] sm:$0xff]
        %v332 = vld [vmem:[%s277 + $0x180] sm:$0xff]
        %v333 = vld [vmem:[%s277 + $0x188] sm:$0xff]
        %v334 = vld [vmem:[%s277 + $0x190] sm:$0xff]
        %v335 = vld [vmem:[%s277 + $0x198] sm:$0xff]
        %v336 = vld [vmem:[%s277 + $0x1a0] sm:$0xff]
        %v337 = vld [vmem:[%s277 + $0x1a8] sm:$0xff]
        %v338 = vld [vmem:[%s277 + $0x1b0] sm:$0xff]
        %v339 = vld [vmem:[%s277 + $0x1b8] sm:$0xff]
        %v340 = vld [vmem:[%s277 + $0x1c0] sm:$0xff]
        %v341 = vld [vmem:[%s277 + $0x1c8] sm:$0xff]
        %v342 = vld [vmem:[%s277 + $0x1d0] sm:$0xff]
        %v343 = vld [vmem:[%s277 + $0x1d8] sm:$0xff]
        %v344 = vld [vmem:[%s277 + $0x1e0] sm:$0xff]
        %v345 = vld [vmem:[%s277 + $0x1e8] sm:$0xff]
        %v346 = vld [vmem:[%s277 + $0x1f0] sm:$0xff]
        %v347 = vld [vmem:[%s277 + $0x1f8] sm:$0xff]
        %v348 = vld [vmem:[%s2] sm:$0xff]
        %v349 = vld [vmem:[%s2 + $0x8] sm:$0xff]
        %v350 = vld [vmem:[%s2 + $0x10] sm:$0xff]
        %v351 = vld [vmem:[%s2 + $0x18] sm:$0xff]
        %353 = vset.pattern.permute.xlu0 0
        %354 = vperm.xlu0 %353, %v348
        %v355 = vpop.permute.xlu0 %354
        %358 = vset.pattern.permute.xlu0 0
        %359 = vperm.xlu0 %358, %v349
        %v360 = vpop.permute.xlu0 %359
        %363 = vset.pattern.permute.xlu0 0
        %364 = vperm.xlu0 %363, %v350
        %v365 = vpop.permute.xlu0 %364
        %368 = vset.pattern.permute.xlu0 0
        %369 = vperm.xlu0 %368, %v351
        %v370 = vpop.permute.xlu0 %369
        %vm372 = vcmask 23552
        %v374 = vsel %vm372, %v280, 0
        %v377 = vsel %vm372, %v281, 0
        %v380 = vsel %vm372, %v282, 0
        %v383 = vsel %vm372, %v283, 0
        %v386 = vsel %vm372, %v284, 0
        %v389 = vsel %vm372, %v285, 0
        %v392 = vsel %vm372, %v286, 0
        %v395 = vsel %vm372, %v287, 0
        %v398 = vsel %vm372, %v288, 0
        %v401 = vsel %vm372, %v289, 0
        %v404 = vsel %vm372, %v290, 0
        %v407 = vsel %vm372, %v291, 0
        %v410 = vsel %vm372, %v292, 0
        %v413 = vsel %vm372, %v293, 0
        %v416 = vsel %vm372, %v294, 0
        %v419 = vsel %vm372, %v295, 0
        %v422 = vsel %vm372, %v296, 0
        %v425 = vsel %vm372, %v297, 0
        %v428 = vsel %vm372, %v298, 0
        %v431 = vsel %vm372, %v299, 0
        %v434 = vsel %vm372, %v300, 0
        %v437 = vsel %vm372, %v301, 0
        %v440 = vsel %vm372, %v302, 0
        %v443 = vsel %vm372, %v303, 0
        %v446 = vsel %vm372, %v304, 0
        %v449 = vsel %vm372, %v305, 0
        %v452 = vsel %vm372, %v306, 0
        %v455 = vsel %vm372, %v307, 0
        %v458 = vsel %vm372, %v308, 0
        %v461 = vsel %vm372, %v309, 0
        %v464 = vsel %vm372, %v310, 0
        %v467 = vsel %vm372, %v311, 0
        %v470 = vsel %vm372, %v312, 0
        %v473 = vsel %vm372, %v313, 0
        %v476 = vsel %vm372, %v314, 0
        %v479 = vsel %vm372, %v315, 0
        %v482 = vsel %vm372, %v316, 0
        %v485 = vsel %vm372, %v317, 0
        %v488 = vsel %vm372, %v318, 0
        %v491 = vsel %vm372, %v319, 0
        %v494 = vsel %vm372, %v320, 0
        %v497 = vsel %vm372, %v321, 0
        %v500 = vsel %vm372, %v322, 0
        %v503 = vsel %vm372, %v323, 0
        %v506 = vsel %vm372, %v324, 0
        %v509 = vsel %vm372, %v325, 0
        %v512 = vsel %vm372, %v326, 0
        %v515 = vsel %vm372, %v327, 0
        %v518 = vsel %vm372, %v328, 0
        %v521 = vsel %vm372, %v329, 0
        %v524 = vsel %vm372, %v330, 0
        %v527 = vsel %vm372, %v331, 0
        %v530 = vsel %vm372, %v332, 0
        %v533 = vsel %vm372, %v333, 0
        %v536 = vsel %vm372, %v334, 0
        %v539 = vsel %vm372, %v335, 0
        %v542 = vsel %vm372, %v336, 0
        %v545 = vsel %vm372, %v337, 0
        %v548 = vsel %vm372, %v338, 0
        %v551 = vsel %vm372, %v339, 0
        %v554 = vsel %vm372, %v340, 0
        %v557 = vsel %vm372, %v341, 0
        %v560 = vsel %vm372, %v342, 0
        %v563 = vsel %vm372, %v343, 0
        %v566 = vsel %vm372, %v344, 0
        %v569 = vsel %vm372, %v345, 0
        %v572 = vsel %vm372, %v346, 0
        %v575 = vsel %vm372, %v347, 0
        %577 = vmatpush.xpose.msra.mxu0 %v431
        %578 = vmatpush.xpose.msra.mxu0 %v428
        %579 = vmatpush.xpose.msra.mxu0 %v425
        %580 = vmatpush.xpose.msra.mxu0 %v422
        %581 = vmatpush.xpose.msra.mxu0 %v419
        %582 = vmatpush.xpose.msra.mxu0 %v416
        %583 = vmatpush.xpose.msra.mxu0 %v413
        %584 = vmatpush.xpose.msra.mxu0 %v410
        %585 = vmatpush.xpose.msra.mxu0 %v407
        %586 = vmatpush.xpose.msra.mxu0 %v404
        %587 = vmatpush.xpose.msra.mxu0 %v401
        %588 = vmatpush.xpose.msra.mxu0 %v398
        %589 = vmatpush.xpose.msra.mxu0 %v395
        %590 = vmatpush.xpose.msra.mxu0 %v392
        %591 = vmatpush.xpose.msra.mxu0 %v389
        %592 = vmatpush.xpose.msra.mxu0 %v386
        %593 = vmatmul.f32.gmra.mxu0 %v374
        %v594 = vpop.f32.mrf.mxu0
        %v595 = vadd.f32 %v355, %v594
        %596 = vmatmul.f32.gmra.mxu0 %v377
        %v597 = vpop.f32.mrf.mxu0
        %v598 = vadd.f32 %v360, %v597
        %599 = vmatmul.f32.gmra.mxu0 %v380
        %v600 = vpop.f32.mrf.mxu0
        %v601 = vadd.f32 %v365, %v600
        %602 = vmatmul.f32.gmra.mxu0 %v383
        %v603 = vpop.f32.mrf.mxu0
        %v604 = vadd.f32 %v370, %v603
        %605 = vdwg.mxu0
        %606 = vmatpush.xpose.msra.mxu0 %v479
        %607 = vmatpush.xpose.msra.mxu0 %v476
        %608 = vmatpush.xpose.msra.mxu0 %v473
        %609 = vmatpush.xpose.msra.mxu0 %v470
        %610 = vmatpush.xpose.msra.mxu0 %v467
        %611 = vmatpush.xpose.msra.mxu0 %v464
        %612 = vmatpush.xpose.msra.mxu0 %v461
        %613 = vmatpush.xpose.msra.mxu0 %v458
        %614 = vmatpush.xpose.msra.mxu0 %v455
        %615 = vmatpush.xpose.msra.mxu0 %v452
        %616 = vmatpush.xpose.msra.mxu0 %v449
        %617 = vmatpush.xpose.msra.mxu0 %v446
        %618 = vmatpush.xpose.msra.mxu0 %v443
        %619 = vmatpush.xpose.msra.mxu0 %v440
        %620 = vmatpush.xpose.msra.mxu0 %v437
        %621 = vmatpush.xpose.msra.mxu0 %v434
        %622 = vmatmul.f32.gmra.mxu0 %v374
        %v623 = vpop.f32.mrf.mxu0
        %v624 = vadd.f32 %v355, %v623
        %625 = vmatmul.f32.gmra.mxu0 %v377
        %v626 = vpop.f32.mrf.mxu0
        %v627 = vadd.f32 %v360, %v626
        %628 = vmatmul.f32.gmra.mxu0 %v380
        %v629 = vpop.f32.mrf.mxu0
        %v630 = vadd.f32 %v365, %v629
        %631 = vmatmul.f32.gmra.mxu0 %v383
        %v632 = vpop.f32.mrf.mxu0
        %v633 = vadd.f32 %v370, %v632
        %634 = vdwg.mxu0
        %635 = vmatpush.xpose.msra.mxu0 %v527
        %636 = vmatpush.xpose.msra.mxu0 %v524
        %637 = vmatpush.xpose.msra.mxu0 %v521
        %638 = vmatpush.xpose.msra.mxu0 %v518
        %639 = vmatpush.xpose.msra.mxu0 %v515
        %640 = vmatpush.xpose.msra.mxu0 %v512
        %641 = vmatpush.xpose.msra.mxu0 %v509
        %642 = vmatpush.xpose.msra.mxu0 %v506
        %643 = vmatpush.xpose.msra.mxu0 %v503
        %644 = vmatpush.xpose.msra.mxu0 %v500
        %645 = vmatpush.xpose.msra.mxu0 %v497
        %646 = vmatpush.xpose.msra.mxu0 %v494
        %647 = vmatpush.xpose.msra.mxu0 %v491
        %648 = vmatpush.xpose.msra.mxu0 %v488
        %649 = vmatpush.xpose.msra.mxu0 %v485
        %650 = vmatpush.xpose.msra.mxu0 %v482
        %651 = vmatmul.f32.gmra.mxu0 %v374
        %v652 = vpop.f32.mrf.mxu0
        %v653 = vadd.f32 %v355, %v652
        %654 = vmatmul.f32.gmra.mxu0 %v377
        %v655 = vpop.f32.mrf.mxu0
        %v656 = vadd.f32 %v360, %v655
        %657 = vmatmul.f32.gmra.mxu0 %v380
        %v658 = vpop.f32.mrf.mxu0
        %v659 = vadd.f32 %v365, %v658
        %660 = vmatmul.f32.gmra.mxu0 %v383
        %v661 = vpop.f32.mrf.mxu0
        %v662 = vadd.f32 %v370, %v661
        %663 = vdwg.mxu0
        %664 = vmatpush.xpose.msra.mxu0 %v575
        %665 = vmatpush.xpose.msra.mxu0 %v572
        %666 = vmatpush.xpose.msra.mxu0 %v569
        %667 = vmatpush.xpose.msra.mxu0 %v566
        %668 = vmatpush.xpose.msra.mxu0 %v563
        %669 = vmatpush.xpose.msra.mxu0 %v560
        %670 = vmatpush.xpose.msra.mxu0 %v557
        %671 = vmatpush.xpose.msra.mxu0 %v554
        %672 = vmatpush.xpose.msra.mxu0 %v551
        %673 = vmatpush.xpose.msra.mxu0 %v548
        %674 = vmatpush.xpose.msra.mxu0 %v545
        %675 = vmatpush.xpose.msra.mxu0 %v542
        %676 = vmatpush.xpose.msra.mxu0 %v539
        %677 = vmatpush.xpose.msra.mxu0 %v536
        %678 = vmatpush.xpose.msra.mxu0 %v533
        %679 = vmatpush.xpose.msra.mxu0 %v530
        %680 = vmatmul.f32.gmra.mxu0 %v374
        %v681 = vpop.f32.mrf.mxu0
        %v682 = vadd.f32 %v355, %v681
        %683 = vmatmul.f32.gmra.mxu0 %v377
        %v684 = vpop.f32.mrf.mxu0
        %v685 = vadd.f32 %v360, %v684
        %686 = vmatmul.f32.gmra.mxu0 %v380
        %v687 = vpop.f32.mrf.mxu0
        %v688 = vadd.f32 %v365, %v687
        %689 = vmatmul.f32.gmra.mxu0 %v383
        %v690 = vpop.f32.mrf.mxu0
        %v691 = vadd.f32 %v370, %v690
        %692 = vdwg.mxu0
        %v693 = vand.u32 2147483647, %v595
        %vm694 = vcmp.le.f32.partialorder %v693, 0.7853982
        %vm695 = vcmp.lt.s32.totalorder %v595, 0
        %v696 = vand.u32 %v595, 2139095040
        %v697 = vshrl.u32 %v696, 23
        %v698 = vsub.s32 %v697, 127
        %v699 = vand.u32 2147483647, %v595
        %v700 = vand.u32 %v699, 8388607
        %v701 = vor.u32 %v700, 8388608
        %v702 = vsub.s32 0, %v701
        %v703 = vadd.s32 %v698, 1
        %vm704 = vcmp.gt.s32.totalorder %v703, 0
        %v705 = vsel %vm704, %v703, 0
        %v706 = vshrl.u32 %v705, 5
        %v707 = vand.u32 %v705, 31
        %v708 = vsub.s32 32, %v707
        %v709 = vshrl.u32 683565275, %v708
        %v710 = vshll.u32 683565275, %v707
        %v711 = vshrl.u32 2475754826, %v708
        %v712 = vor.u32 %v710, %v711
        %v713 = vshll.u32 2475754826, %v707
        %v714 = vshrl.u32 2131351028, %v708
        %v715 = vor.u32 %v713, %v714
        %v716 = vshll.u32 2131351028, %v707
        %v717 = vshrl.u32 2102212464, %v708
        %v718 = vor.u32 %v716, %v717
        %v719 = vshll.u32 2102212464, %v707
        %v720 = vshrl.u32 920167782, %v708
        %v721 = vor.u32 %v719, %v720
        %v722 = vshll.u32 920167782, %v707
        %v723 = vshrl.u32 1326507024, %v708
        %v724 = vor.u32 %v722, %v723
        %vm725 = vcmp.lt.s32.totalorder %v706, 1
        %vm726 = vcmp.lt.s32.totalorder %v706, 2
        %vm727 = vcmp.lt.s32.totalorder %v706, 3
        %vm728 = vcmp.lt.s32.totalorder %v706, 4
        %v729 = vsel %vm725, %v709, %v712
        %v730 = vsel %vm728, %v718, 2102212464
        %v731 = vsel %vm727, %v715, %v730
        %v732 = vsel %vm726, %v729, %v731
        %v733 = vsel %vm725, %v712, %v715
        %v734 = vsel %vm728, %v721, 920167782
        %v735 = vsel %vm727, %v718, %v734
        %v736 = vsel %vm726, %v733, %v735
        %v737 = vsel %vm725, %v715, %v718
        %v738 = vsel %vm728, %v724, 1326507024
        %v739 = vsel %vm727, %v721, %v738
        %v740 = vsel %vm726, %v737, %v739
        %v741 = vshll.u32 %v701, 8
        %v742 = vand.u32 %v741, 65535
        %v743 = vshrl.u32 %v741, 16
        %v744 = vand.u32 %v740, 65535
        %v745 = vshrl.u32 %v740, 16
        %v746 = vmul.u32 %v742, %v744
        %v747 = vmul.u32 %v742, %v745
        %v748 = vmul.u32 %v743, %v744
        %v749 = vmul.u32 %v743, %v745
        %v750 = vshll.u32 %v747, 16
        %v751 = vshrl.u32 %v747, 16
        %v752 = vshll.u32 %v748, 16
        %v753 = vshrl.u32 %v748, 16
        %vm754 = vc.u32 %v746, %v750
        %v755 = vsel %vm754, 1, 0
        %v756 = vadd.s32 %v746, %v750
        %v757 = vadd.s32 %v749, %v755
        %vm758 = vc.u32 %v756, %v752
        %v759 = vsel %vm758, 1, 0
        %v760 = vadd.s32 %v756, %v752
        %v761 = vadd.s32 %v757, %v759
        %v762 = vadd.s32 %v761, %v751
        %v763 = vadd.s32 %v762, %v753
        %v764 = vand.u32 %v741, 65535
        %v765 = vshrl.u32 %v741, 16
        %v766 = vand.u32 %v736, 65535
        %v767 = vshrl.u32 %v736, 16
        %v768 = vmul.u32 %v764, %v766
        %v769 = vmul.u32 %v764, %v767
        %v770 = vmul.u32 %v765, %v766
        %v771 = vmul.u32 %v765, %v767
        %v772 = vshll.u32 %v769, 16
        %v773 = vshrl.u32 %v769, 16
        %v774 = vshll.u32 %v770, 16
        %v775 = vshrl.u32 %v770, 16
        %vm776 = vc.u32 %v768, %v772
        %v777 = vsel %vm776, 1, 0
        %v778 = vadd.s32 %v768, %v772
        %v779 = vadd.s32 %v771, %v777
        %vm780 = vc.u32 %v778, %v774
        %v781 = vsel %vm780, 1, 0
        %v782 = vadd.s32 %v778, %v774
        %v783 = vadd.s32 %v779, %v781
        %v784 = vadd.s32 %v783, %v773
        %v785 = vadd.s32 %v784, %v775
        %v786 = vmul.u32 %v741, %v732
        %v787 = vadd.s32 %v763, %v782
        %vm788 = vc.u32 %v763, %v782
        %v789 = vadd.s32 %v785, 1
        %v790 = vsel %vm788, %v789, %v785
        %v791 = vadd.s32 %v786, %v790
        %v792 = vadd.s32 %v791, 536870912
        %v793 = vshrl.u32 %v792, 30
        %v794 = vshll.u32 %v793, 30
        %v795 = vsub.s32 %v791, %v794
        %vm796 = vcmp.lt.s32.totalorder %v795, 0
        %v797 = vsub.s32 0, %v795
        %v798 = vsel %vm796, %v797, %v795
        %v799 = vclz %v798
        %v800 = vsub.s32 %v799, 2
        %vm801 = vcmp.gt.s32.totalorder 0, %v800
        %v802 = vsel %vm801, 0, %v800
        %v803 = vsub.s32 32, %v802
        %v804 = vshll.u32 %v795, %v802
        %v805 = vshrl.u32 %v787, %v803
        %v806 = vor.u32 %v804, %v805
        %v807 = vsub.s32 4294967266, %v802
        %v808 = vadd.s32 %v807, 127
        %v809 = vshll.u32 %v808, 23
        %v810 = vor.u32 4788187, %v809
        %v811 = vand.u32 2147483647, %v810
        %v813 = vcvt.s32.f32 %v806
        %v814 = vmul.f32 %v813, %v811
        %v815 = vxor.u32 %v814, 2147483648
        %v816 = vsel %vm695, %v815, %v814
        %v817 = vsub.s32 4, %v793
        %v818 = vsel %vm695, %v817, %v793
        %v819 = vsel %vm694, %v595, %v816
        %v820 = vsel %vm694, 0, %v818
        %v821 = vmul.f32 %v819, %v819
        %v822 = vmul.f32 %v821, -0.001358992
        %v823 = vadd.f32 %v822, 0.041655596
        %v824 = vmul.f32 %v821, %v823
        %v825 = vadd.f32 %v824, -0.4999988
        %v826 = vmul.f32 %v821, %v825
        %v827 = vadd.f32 1.0, %v826
        %v828 = vmul.f32 %v819, %v819
        %v829 = vmul.f32 %v828, -0.00019511016
        %v830 = vadd.f32 %v829, 0.008332121
        %v831 = vmul.f32 %v828, %v830
        %v832 = vadd.f32 %v831, -0.16666654
        %v833 = vmul.f32 %v828, %v832
        %v834 = vadd.f32 %v833, 1.0
        %v835 = vmul.f32 %v834, %v819
        %vm836 = vweird.f32 %v595
        %v837 = vadd.s32 %v820, 3
        %v838 = vand.u32 %v837, 3
        %vm839 = vcmp.lt.s32.totalorder %v838, 2
        %vm840 = vcmp.eq.s32.totalorder %v838, 0
        %v841 = vxor.u32 %v835, 2147483648
        %v842 = vsel %vm840, %v827, %v841
        %vm843 = vcmp.eq.s32.totalorder %v838, 2
        %v844 = vxor.u32 %v827, 2147483648
        %v845 = vsel %vm843, %v844, %v835
        %v846 = vsel %vm839, %v842, %v845
        %v847 = vsel %vm836, nan, %v846
        %v848 = vand.u32 2147483647, %v624
        %vm849 = vcmp.le.f32.partialorder %v848, 0.7853982
        %vm850 = vcmp.lt.s32.totalorder %v624, 0
        %v851 = vand.u32 %v624, 2139095040
        %v852 = vshrl.u32 %v851, 23
        %v853 = vsub.s32 %v852, 127
        %v854 = vand.u32 2147483647, %v624
        %v855 = vand.u32 %v854, 8388607
        %v856 = vor.u32 %v855, 8388608
        %v857 = vsub.s32 0, %v856
        %v858 = vadd.s32 %v853, 1
        %vm859 = vcmp.gt.s32.totalorder %v858, 0
        %v860 = vsel %vm859, %v858, 0
        %v861 = vshrl.u32 %v860, 5
        %v862 = vand.u32 %v860, 31
        %v863 = vsub.s32 32, %v862
        %v864 = vshrl.u32 683565275, %v863
        %v865 = vshll.u32 683565275, %v862
        %v866 = vshrl.u32 2475754826, %v863
        %v867 = vor.u32 %v865, %v866
        %v868 = vshll.u32 2475754826, %v862
        %v869 = vshrl.u32 2131351028, %v863
        %v870 = vor.u32 %v868, %v869
        %v871 = vshll.u32 2131351028, %v862
        %v872 = vshrl.u32 2102212464, %v863
        %v873 = vor.u32 %v871, %v872
        %v874 = vshll.u32 2102212464, %v862
        %v875 = vshrl.u32 920167782, %v863
        %v876 = vor.u32 %v874, %v875
        %v877 = vshll.u32 920167782, %v862
        %v878 = vshrl.u32 1326507024, %v863
        %v879 = vor.u32 %v877, %v878
        %vm880 = vcmp.lt.s32.totalorder %v861, 1
        %vm881 = vcmp.lt.s32.totalorder %v861, 2
        %vm882 = vcmp.lt.s32.totalorder %v861, 3
        %vm883 = vcmp.lt.s32.totalorder %v861, 4
        %v884 = vsel %vm880, %v864, %v867
        %v885 = vsel %vm883, %v873, 2102212464
        %v886 = vsel %vm882, %v870, %v885
        %v887 = vsel %vm881, %v884, %v886
        %v888 = vsel %vm880, %v867, %v870
        %v889 = vsel %vm883, %v876, 920167782
        %v890 = vsel %vm882, %v873, %v889
        %v891 = vsel %vm881, %v888, %v890
        %v892 = vsel %vm880, %v870, %v873
        %v893 = vsel %vm883, %v879, 1326507024
        %v894 = vsel %vm882, %v876, %v893
        %v895 = vsel %vm881, %v892, %v894
        %v896 = vshll.u32 %v856, 8
        %v897 = vand.u32 %v896, 65535
        %v898 = vshrl.u32 %v896, 16
        %v899 = vand.u32 %v895, 65535
        %v900 = vshrl.u32 %v895, 16
        %v901 = vmul.u32 %v897, %v899
        %v902 = vmul.u32 %v897, %v900
        %v903 = vmul.u32 %v898, %v899
        %v904 = vmul.u32 %v898, %v900
        %v905 = vshll.u32 %v902, 16
        %v906 = vshrl.u32 %v902, 16
        %v907 = vshll.u32 %v903, 16
        %v908 = vshrl.u32 %v903, 16
        %vm909 = vc.u32 %v901, %v905
        %v910 = vsel %vm909, 1, 0
        %v911 = vadd.s32 %v901, %v905
        %v912 = vadd.s32 %v904, %v910
        %vm913 = vc.u32 %v911, %v907
        %v914 = vsel %vm913, 1, 0
        %v915 = vadd.s32 %v911, %v907
        %v916 = vadd.s32 %v912, %v914
        %v917 = vadd.s32 %v916, %v906
        %v918 = vadd.s32 %v917, %v908
        %v919 = vand.u32 %v896, 65535
        %v920 = vshrl.u32 %v896, 16
        %v921 = vand.u32 %v891, 65535
        %v922 = vshrl.u32 %v891, 16
        %v923 = vmul.u32 %v919, %v921
        %v924 = vmul.u32 %v919, %v922
        %v925 = vmul.u32 %v920, %v921
        %v926 = vmul.u32 %v920, %v922
        %v927 = vshll.u32 %v924, 16
        %v928 = vshrl.u32 %v924, 16
        %v929 = vshll.u32 %v925, 16
        %v930 = vshrl.u32 %v925, 16
        %vm931 = vc.u32 %v923, %v927
        %v932 = vsel %vm931, 1, 0
        %v933 = vadd.s32 %v923, %v927
        %v934 = vadd.s32 %v926, %v932
        %vm935 = vc.u32 %v933, %v929
        %v936 = vsel %vm935, 1, 0
        %v937 = vadd.s32 %v933, %v929
        %v938 = vadd.s32 %v934, %v936
        %v939 = vadd.s32 %v938, %v928
        %v940 = vadd.s32 %v939, %v930
        %v941 = vmul.u32 %v896, %v887
        %v942 = vadd.s32 %v918, %v937
        %vm943 = vc.u32 %v918, %v937
        %v944 = vadd.s32 %v940, 1
        %v945 = vsel %vm943, %v944, %v940
        %v946 = vadd.s32 %v941, %v945
        %v947 = vadd.s32 %v946, 536870912
        %v948 = vshrl.u32 %v947, 30
        %v949 = vshll.u32 %v948, 30
        %v950 = vsub.s32 %v946, %v949
        %vm951 = vcmp.lt.s32.totalorder %v950, 0
        %v952 = vsub.s32 0, %v950
        %v953 = vsel %vm951, %v952, %v950
        %v954 = vclz %v953
        %v955 = vsub.s32 %v954, 2
        %vm956 = vcmp.gt.s32.totalorder 0, %v955
        %v957 = vsel %vm956, 0, %v955
        %v958 = vsub.s32 32, %v957
        %v959 = vshll.u32 %v950, %v957
        %v960 = vshrl.u32 %v942, %v958
        %v961 = vor.u32 %v959, %v960
        %v962 = vsub.s32 4294967266, %v957
        %v963 = vadd.s32 %v962, 127
        %v964 = vshll.u32 %v963, 23
        %v965 = vor.u32 4788187, %v964
        %v966 = vand.u32 2147483647, %v965
        %v968 = vcvt.s32.f32 %v961
        %v969 = vmul.f32 %v968, %v966
        %v970 = vxor.u32 %v969, 2147483648
        %v971 = vsel %vm850, %v970, %v969
        %v972 = vsub.s32 4, %v948
        %v973 = vsel %vm850, %v972, %v948
        %v974 = vsel %vm849, %v624, %v971
        %v975 = vsel %vm849, 0, %v973
        %v976 = vmul.f32 %v974, %v974
        %v977 = vmul.f32 %v976, -0.001358992
        %v978 = vadd.f32 %v977, 0.041655596
        %v979 = vmul.f32 %v976, %v978
        %v980 = vadd.f32 %v979, -0.4999988
        %v981 = vmul.f32 %v976, %v980
        %v982 = vadd.f32 1.0, %v981
        %v983 = vmul.f32 %v974, %v974
        %v984 = vmul.f32 %v983, -0.00019511016
        %v985 = vadd.f32 %v984, 0.008332121
        %v986 = vmul.f32 %v983, %v985
        %v987 = vadd.f32 %v986, -0.16666654
        %v988 = vmul.f32 %v983, %v987
        %v989 = vadd.f32 %v988, 1.0
        %v990 = vmul.f32 %v989, %v974
        %vm991 = vweird.f32 %v624
        %v992 = vadd.s32 %v975, 3
        %v993 = vand.u32 %v992, 3
        %vm994 = vcmp.lt.s32.totalorder %v993, 2
        %vm995 = vcmp.eq.s32.totalorder %v993, 0
        %v996 = vxor.u32 %v990, 2147483648
        %v997 = vsel %vm995, %v982, %v996
        %vm998 = vcmp.eq.s32.totalorder %v993, 2
        %v999 = vxor.u32 %v982, 2147483648
        %v1000 = vsel %vm998, %v999, %v990
        %v1001 = vsel %vm994, %v997, %v1000
        %v1002 = vsel %vm991, nan, %v1001
        %v1003 = vand.u32 2147483647, %v653
        %vm1004 = vcmp.le.f32.partialorder %v1003, 0.7853982
        %vm1005 = vcmp.lt.s32.totalorder %v653, 0
        %v1006 = vand.u32 %v653, 2139095040
        %v1007 = vshrl.u32 %v1006, 23
        %v1008 = vsub.s32 %v1007, 127
        %v1009 = vand.u32 2147483647, %v653
        %v1010 = vand.u32 %v1009, 8388607
        %v1011 = vor.u32 %v1010, 8388608
        %v1012 = vsub.s32 0, %v1011
        %v1013 = vadd.s32 %v1008, 1
        %vm1014 = vcmp.gt.s32.totalorder %v1013, 0
        %v1015 = vsel %vm1014, %v1013, 0
        %v1016 = vshrl.u32 %v1015, 5
        %v1017 = vand.u32 %v1015, 31
        %v1018 = vsub.s32 32, %v1017
        %v1019 = vshrl.u32 683565275, %v1018
        %v1020 = vshll.u32 683565275, %v1017
        %v1021 = vshrl.u32 2475754826, %v1018
        %v1022 = vor.u32 %v1020, %v1021
        %v1023 = vshll.u32 2475754826, %v1017
        %v1024 = vshrl.u32 2131351028, %v1018
        %v1025 = vor.u32 %v1023, %v1024
        %v1026 = vshll.u32 2131351028, %v1017
        %v1027 = vshrl.u32 2102212464, %v1018
        %v1028 = vor.u32 %v1026, %v1027
        %v1029 = vshll.u32 2102212464, %v1017
        %v1030 = vshrl.u32 920167782, %v1018
        %v1031 = vor.u32 %v1029, %v1030
        %v1032 = vshll.u32 920167782, %v1017
        %v1033 = vshrl.u32 1326507024, %v1018
        %v1034 = vor.u32 %v1032, %v1033
        %vm1035 = vcmp.lt.s32.totalorder %v1016, 1
        %vm1036 = vcmp.lt.s32.totalorder %v1016, 2
        %vm1037 = vcmp.lt.s32.totalorder %v1016, 3
        %vm1038 = vcmp.lt.s32.totalorder %v1016, 4
        %v1039 = vsel %vm1035, %v1019, %v1022
        %v1040 = vsel %vm1038, %v1028, 2102212464
        %v1041 = vsel %vm1037, %v1025, %v1040
        %v1042 = vsel %vm1036, %v1039, %v1041
        %v1043 = vsel %vm1035, %v1022, %v1025
        %v1044 = vsel %vm1038, %v1031, 920167782
        %v1045 = vsel %vm1037, %v1028, %v1044
        %v1046 = vsel %vm1036, %v1043, %v1045
        %v1047 = vsel %vm1035, %v1025, %v1028
        %v1048 = vsel %vm1038, %v1034, 1326507024
        %v1049 = vsel %vm1037, %v1031, %v1048
        %v1050 = vsel %vm1036, %v1047, %v1049
        %v1051 = vshll.u32 %v1011, 8
        %v1052 = vand.u32 %v1051, 65535
        %v1053 = vshrl.u32 %v1051, 16
        %v1054 = vand.u32 %v1050, 65535
        %v1055 = vshrl.u32 %v1050, 16
        %v1056 = vmul.u32 %v1052, %v1054
        %v1057 = vmul.u32 %v1052, %v1055
        %v1058 = vmul.u32 %v1053, %v1054
        %v1059 = vmul.u32 %v1053, %v1055
        %v1060 = vshll.u32 %v1057, 16
        %v1061 = vshrl.u32 %v1057, 16
        %v1062 = vshll.u32 %v1058, 16
        %v1063 = vshrl.u32 %v1058, 16
        %vm1064 = vc.u32 %v1056, %v1060
        %v1065 = vsel %vm1064, 1, 0
        %v1066 = vadd.s32 %v1056, %v1060
        %v1067 = vadd.s32 %v1059, %v1065
        %vm1068 = vc.u32 %v1066, %v1062
        %v1069 = vsel %vm1068, 1, 0
        %v1070 = vadd.s32 %v1066, %v1062
        %v1071 = vadd.s32 %v1067, %v1069
        %v1072 = vadd.s32 %v1071, %v1061
        %v1073 = vadd.s32 %v1072, %v1063
        %v1074 = vand.u32 %v1051, 65535
        %v1075 = vshrl.u32 %v1051, 16
        %v1076 = vand.u32 %v1046, 65535
        %v1077 = vshrl.u32 %v1046, 16
        %v1078 = vmul.u32 %v1074, %v1076
        %v1079 = vmul.u32 %v1074, %v1077
        %v1080 = vmul.u32 %v1075, %v1076
        %v1081 = vmul.u32 %v1075, %v1077
        %v1082 = vshll.u32 %v1079, 16
        %v1083 = vshrl.u32 %v1079, 16
        %v1084 = vshll.u32 %v1080, 16
        %v1085 = vshrl.u32 %v1080, 16
        %vm1086 = vc.u32 %v1078, %v1082
        %v1087 = vsel %vm1086, 1, 0
        %v1088 = vadd.s32 %v1078, %v1082
        %v1089 = vadd.s32 %v1081, %v1087
        %vm1090 = vc.u32 %v1088, %v1084
        %v1091 = vsel %vm1090, 1, 0
        %v1092 = vadd.s32 %v1088, %v1084
        %v1093 = vadd.s32 %v1089, %v1091
        %v1094 = vadd.s32 %v1093, %v1083
        %v1095 = vadd.s32 %v1094, %v1085
        %v1096 = vmul.u32 %v1051, %v1042
        %v1097 = vadd.s32 %v1073, %v1092
        %vm1098 = vc.u32 %v1073, %v1092
        %v1099 = vadd.s32 %v1095, 1
        %v1100 = vsel %vm1098, %v1099, %v1095
        %v1101 = vadd.s32 %v1096, %v1100
        %v1102 = vadd.s32 %v1101, 536870912
        %v1103 = vshrl.u32 %v1102, 30
        %v1104 = vshll.u32 %v1103, 30
        %v1105 = vsub.s32 %v1101, %v1104
        %vm1106 = vcmp.lt.s32.totalorder %v1105, 0
        %v1107 = vsub.s32 0, %v1105
        %v1108 = vsel %vm1106, %v1107, %v1105
        %v1109 = vclz %v1108
        %v1110 = vsub.s32 %v1109, 2
        %vm1111 = vcmp.gt.s32.totalorder 0, %v1110
        %v1112 = vsel %vm1111, 0, %v1110
        %v1113 = vsub.s32 32, %v1112
        %v1114 = vshll.u32 %v1105, %v1112
        %v1115 = vshrl.u32 %v1097, %v1113
        %v1116 = vor.u32 %v1114, %v1115
        %v1117 = vsub.s32 4294967266, %v1112
        %v1118 = vadd.s32 %v1117, 127
        %v1119 = vshll.u32 %v1118, 23
        %v1120 = vor.u32 4788187, %v1119
        %v1121 = vand.u32 2147483647, %v1120
        %v1123 = vcvt.s32.f32 %v1116
        %v1124 = vmul.f32 %v1123, %v1121
        %v1125 = vxor.u32 %v1124, 2147483648
        %v1126 = vsel %vm1005, %v1125, %v1124
        %v1127 = vsub.s32 4, %v1103
        %v1128 = vsel %vm1005, %v1127, %v1103
        %v1129 = vsel %vm1004, %v653, %v1126
        %v1130 = vsel %vm1004, 0, %v1128
        %v1131 = vmul.f32 %v1129, %v1129
        %v1132 = vmul.f32 %v1131, -0.001358992
        %v1133 = vadd.f32 %v1132, 0.041655596
        %v1134 = vmul.f32 %v1131, %v1133
        %v1135 = vadd.f32 %v1134, -0.4999988
        %v1136 = vmul.f32 %v1131, %v1135
        %v1137 = vadd.f32 1.0, %v1136
        %v1138 = vmul.f32 %v1129, %v1129
        %v1139 = vmul.f32 %v1138, -0.00019511016
        %v1140 = vadd.f32 %v1139, 0.008332121
        %v1141 = vmul.f32 %v1138, %v1140
        %v1142 = vadd.f32 %v1141, -0.16666654
        %v1143 = vmul.f32 %v1138, %v1142
        %v1144 = vadd.f32 %v1143, 1.0
        %v1145 = vmul.f32 %v1144, %v1129
        %vm1146 = vweird.f32 %v653
        %v1147 = vadd.s32 %v1130, 3
        %v1148 = vand.u32 %v1147, 3
        %vm1149 = vcmp.lt.s32.totalorder %v1148, 2
        %vm1150 = vcmp.eq.s32.totalorder %v1148, 0
        %v1151 = vxor.u32 %v1145, 2147483648
        %v1152 = vsel %vm1150, %v1137, %v1151
        %vm1153 = vcmp.eq.s32.totalorder %v1148, 2
        %v1154 = vxor.u32 %v1137, 2147483648
        %v1155 = vsel %vm1153, %v1154, %v1145
        %v1156 = vsel %vm1149, %v1152, %v1155
        %v1157 = vsel %vm1146, nan, %v1156
        %v1158 = vand.u32 2147483647, %v682
        %vm1159 = vcmp.le.f32.partialorder %v1158, 0.7853982
        %vm1160 = vcmp.lt.s32.totalorder %v682, 0
        %v1161 = vand.u32 %v682, 2139095040
        %v1162 = vshrl.u32 %v1161, 23
        %v1163 = vsub.s32 %v1162, 127
        %v1164 = vand.u32 2147483647, %v682
        %v1165 = vand.u32 %v1164, 8388607
        %v1166 = vor.u32 %v1165, 8388608
        %v1167 = vsub.s32 0, %v1166
        %v1168 = vadd.s32 %v1163, 1
        %vm1169 = vcmp.gt.s32.totalorder %v1168, 0
        %v1170 = vsel %vm1169, %v1168, 0
        %v1171 = vshrl.u32 %v1170, 5
        %v1172 = vand.u32 %v1170, 31
        %v1173 = vsub.s32 32, %v1172
        %v1174 = vshrl.u32 683565275, %v1173
        %v1175 = vshll.u32 683565275, %v1172
        %v1176 = vshrl.u32 2475754826, %v1173
        %v1177 = vor.u32 %v1175, %v1176
        %v1178 = vshll.u32 2475754826, %v1172
        %v1179 = vshrl.u32 2131351028, %v1173
        %v1180 = vor.u32 %v1178, %v1179
        %v1181 = vshll.u32 2131351028, %v1172
        %v1182 = vshrl.u32 2102212464, %v1173
        %v1183 = vor.u32 %v1181, %v1182
        %v1184 = vshll.u32 2102212464, %v1172
        %v1185 = vshrl.u32 920167782, %v1173
        %v1186 = vor.u32 %v1184, %v1185
        %v1187 = vshll.u32 920167782, %v1172
        %v1188 = vshrl.u32 1326507024, %v1173
        %v1189 = vor.u32 %v1187, %v1188
        %vm1190 = vcmp.lt.s32.totalorder %v1171, 1
        %vm1191 = vcmp.lt.s32.totalorder %v1171, 2
        %vm1192 = vcmp.lt.s32.totalorder %v1171, 3
        %vm1193 = vcmp.lt.s32.totalorder %v1171, 4
        %v1194 = vsel %vm1190, %v1174, %v1177
        %v1195 = vsel %vm1193, %v1183, 2102212464
        %v1196 = vsel %vm1192, %v1180, %v1195
        %v1197 = vsel %vm1191, %v1194, %v1196
        %v1198 = vsel %vm1190, %v1177, %v1180
        %v1199 = vsel %vm1193, %v1186, 920167782
        %v1200 = vsel %vm1192, %v1183, %v1199
        %v1201 = vsel %vm1191, %v1198, %v1200
        %v1202 = vsel %vm1190, %v1180, %v1183
        %v1203 = vsel %vm1193, %v1189, 1326507024
        %v1204 = vsel %vm1192, %v1186, %v1203
        %v1205 = vsel %vm1191, %v1202, %v1204
        %v1206 = vshll.u32 %v1166, 8
        %v1207 = vand.u32 %v1206, 65535
        %v1208 = vshrl.u32 %v1206, 16
        %v1209 = vand.u32 %v1205, 65535
        %v1210 = vshrl.u32 %v1205, 16
        %v1211 = vmul.u32 %v1207, %v1209
        %v1212 = vmul.u32 %v1207, %v1210
        %v1213 = vmul.u32 %v1208, %v1209
        %v1214 = vmul.u32 %v1208, %v1210
        %v1215 = vshll.u32 %v1212, 16
        %v1216 = vshrl.u32 %v1212, 16
        %v1217 = vshll.u32 %v1213, 16
        %v1218 = vshrl.u32 %v1213, 16
        %vm1219 = vc.u32 %v1211, %v1215
        %v1220 = vsel %vm1219, 1, 0
        %v1221 = vadd.s32 %v1211, %v1215
        %v1222 = vadd.s32 %v1214, %v1220
        %vm1223 = vc.u32 %v1221, %v1217
        %v1224 = vsel %vm1223, 1, 0
        %v1225 = vadd.s32 %v1221, %v1217
        %v1226 = vadd.s32 %v1222, %v1224
        %v1227 = vadd.s32 %v1226, %v1216
        %v1228 = vadd.s32 %v1227, %v1218
        %v1229 = vand.u32 %v1206, 65535
        %v1230 = vshrl.u32 %v1206, 16
        %v1231 = vand.u32 %v1201, 65535
        %v1232 = vshrl.u32 %v1201, 16
        %v1233 = vmul.u32 %v1229, %v1231
        %v1234 = vmul.u32 %v1229, %v1232
        %v1235 = vmul.u32 %v1230, %v1231
        %v1236 = vmul.u32 %v1230, %v1232
        %v1237 = vshll.u32 %v1234, 16
        %v1238 = vshrl.u32 %v1234, 16
        %v1239 = vshll.u32 %v1235, 16
        %v1240 = vshrl.u32 %v1235, 16
        %vm1241 = vc.u32 %v1233, %v1237
        %v1242 = vsel %vm1241, 1, 0
        %v1243 = vadd.s32 %v1233, %v1237
        %v1244 = vadd.s32 %v1236, %v1242
        %vm1245 = vc.u32 %v1243, %v1239
        %v1246 = vsel %vm1245, 1, 0
        %v1247 = vadd.s32 %v1243, %v1239
        %v1248 = vadd.s32 %v1244, %v1246
        %v1249 = vadd.s32 %v1248, %v1238
        %v1250 = vadd.s32 %v1249, %v1240
        %v1251 = vmul.u32 %v1206, %v1197
        %v1252 = vadd.s32 %v1228, %v1247
        %vm1253 = vc.u32 %v1228, %v1247
        %v1254 = vadd.s32 %v1250, 1
        %v1255 = vsel %vm1253, %v1254, %v1250
        %v1256 = vadd.s32 %v1251, %v1255
        %v1257 = vadd.s32 %v1256, 536870912
        %v1258 = vshrl.u32 %v1257, 30
        %v1259 = vshll.u32 %v1258, 30
        %v1260 = vsub.s32 %v1256, %v1259
        %vm1261 = vcmp.lt.s32.totalorder %v1260, 0
        %v1262 = vsub.s32 0, %v1260
        %v1263 = vsel %vm1261, %v1262, %v1260
        %v1264 = vclz %v1263
        %v1265 = vsub.s32 %v1264, 2
        %vm1266 = vcmp.gt.s32.totalorder 0, %v1265
        %v1267 = vsel %vm1266, 0, %v1265
        %v1268 = vsub.s32 32, %v1267
        %v1269 = vshll.u32 %v1260, %v1267
        %v1270 = vshrl.u32 %v1252, %v1268
        %v1271 = vor.u32 %v1269, %v1270
        %v1272 = vsub.s32 4294967266, %v1267
        %v1273 = vadd.s32 %v1272, 127
        %v1274 = vshll.u32 %v1273, 23
        %v1275 = vor.u32 4788187, %v1274
        %v1276 = vand.u32 2147483647, %v1275
        %v1278 = vcvt.s32.f32 %v1271
        %v1279 = vmul.f32 %v1278, %v1276
        %v1280 = vxor.u32 %v1279, 2147483648
        %v1281 = vsel %vm1160, %v1280, %v1279
        %v1282 = vsub.s32 4, %v1258
        %v1283 = vsel %vm1160, %v1282, %v1258
        %v1284 = vsel %vm1159, %v682, %v1281
        %v1285 = vsel %vm1159, 0, %v1283
        %v1286 = vmul.f32 %v1284, %v1284
        %v1287 = vmul.f32 %v1286, -0.001358992
        %v1288 = vadd.f32 %v1287, 0.041655596
        %v1289 = vmul.f32 %v1286, %v1288
        %v1290 = vadd.f32 %v1289, -0.4999988
        %v1291 = vmul.f32 %v1286, %v1290
        %v1292 = vadd.f32 1.0, %v1291
        %v1293 = vmul.f32 %v1284, %v1284
        %v1294 = vmul.f32 %v1293, -0.00019511016
        %v1295 = vadd.f32 %v1294, 0.008332121
        %v1296 = vmul.f32 %v1293, %v1295
        %v1297 = vadd.f32 %v1296, -0.16666654
        %v1298 = vmul.f32 %v1293, %v1297
        %v1299 = vadd.f32 %v1298, 1.0
        %v1300 = vmul.f32 %v1299, %v1284
        %vm1301 = vweird.f32 %v682
        %v1302 = vadd.s32 %v1285, 3
        %v1303 = vand.u32 %v1302, 3
        %vm1304 = vcmp.lt.s32.totalorder %v1303, 2
        %vm1305 = vcmp.eq.s32.totalorder %v1303, 0
        %v1306 = vxor.u32 %v1300, 2147483648
        %v1307 = vsel %vm1305, %v1292, %v1306
        %vm1308 = vcmp.eq.s32.totalorder %v1303, 2
        %v1309 = vxor.u32 %v1292, 2147483648
        %v1310 = vsel %vm1308, %v1309, %v1300
        %v1311 = vsel %vm1304, %v1307, %v1310
        %v1312 = vsel %vm1301, nan, %v1311
        %v1313 = vand.u32 2147483647, %v598
        %vm1314 = vcmp.le.f32.partialorder %v1313, 0.7853982
        %vm1315 = vcmp.lt.s32.totalorder %v598, 0
        %v1316 = vand.u32 %v598, 2139095040
        %v1317 = vshrl.u32 %v1316, 23
        %v1318 = vsub.s32 %v1317, 127
        %v1319 = vand.u32 2147483647, %v598
        %v1320 = vand.u32 %v1319, 8388607
        %v1321 = vor.u32 %v1320, 8388608
        %v1322 = vsub.s32 0, %v1321
        %v1323 = vadd.s32 %v1318, 1
        %vm1324 = vcmp.gt.s32.totalorder %v1323, 0
        %v1325 = vsel %vm1324, %v1323, 0
        %v1326 = vshrl.u32 %v1325, 5
        %v1327 = vand.u32 %v1325, 31
        %v1328 = vsub.s32 32, %v1327
        %v1329 = vshrl.u32 683565275, %v1328
        %v1330 = vshll.u32 683565275, %v1327
        %v1331 = vshrl.u32 2475754826, %v1328
        %v1332 = vor.u32 %v1330, %v1331
        %v1333 = vshll.u32 2475754826, %v1327
        %v1334 = vshrl.u32 2131351028, %v1328
        %v1335 = vor.u32 %v1333, %v1334
        %v1336 = vshll.u32 2131351028, %v1327
        %v1337 = vshrl.u32 2102212464, %v1328
        %v1338 = vor.u32 %v1336, %v1337
        %v1339 = vshll.u32 2102212464, %v1327
        %v1340 = vshrl.u32 920167782, %v1328
        %v1341 = vor.u32 %v1339, %v1340
        %v1342 = vshll.u32 920167782, %v1327
        %v1343 = vshrl.u32 1326507024, %v1328
        %v1344 = vor.u32 %v1342, %v1343
        %vm1345 = vcmp.lt.s32.totalorder %v1326, 1
        %vm1346 = vcmp.lt.s32.totalorder %v1326, 2
        %vm1347 = vcmp.lt.s32.totalorder %v1326, 3
        %vm1348 = vcmp.lt.s32.totalorder %v1326, 4
        %v1349 = vsel %vm1345, %v1329, %v1332
        %v1350 = vsel %vm1348, %v1338, 2102212464
        %v1351 = vsel %vm1347, %v1335, %v1350
        %v1352 = vsel %vm1346, %v1349, %v1351
        %v1353 = vsel %vm1345, %v1332, %v1335
        %v1354 = vsel %vm1348, %v1341, 920167782
        %v1355 = vsel %vm1347, %v1338, %v1354
        %v1356 = vsel %vm1346, %v1353, %v1355
        %v1357 = vsel %vm1345, %v1335, %v1338
        %v1358 = vsel %vm1348, %v1344, 1326507024
        %v1359 = vsel %vm1347, %v1341, %v1358
        %v1360 = vsel %vm1346, %v1357, %v1359
        %v1361 = vshll.u32 %v1321, 8
        %v1362 = vand.u32 %v1361, 65535
        %v1363 = vshrl.u32 %v1361, 16
        %v1364 = vand.u32 %v1360, 65535
        %v1365 = vshrl.u32 %v1360, 16
        %v1366 = vmul.u32 %v1362, %v1364
        %v1367 = vmul.u32 %v1362, %v1365
        %v1368 = vmul.u32 %v1363, %v1364
        %v1369 = vmul.u32 %v1363, %v1365
        %v1370 = vshll.u32 %v1367, 16
        %v1371 = vshrl.u32 %v1367, 16
        %v1372 = vshll.u32 %v1368, 16
        %v1373 = vshrl.u32 %v1368, 16
        %vm1374 = vc.u32 %v1366, %v1370
        %v1375 = vsel %vm1374, 1, 0
        %v1376 = vadd.s32 %v1366, %v1370
        %v1377 = vadd.s32 %v1369, %v1375
        %vm1378 = vc.u32 %v1376, %v1372
        %v1379 = vsel %vm1378, 1, 0
        %v1380 = vadd.s32 %v1376, %v1372
        %v1381 = vadd.s32 %v1377, %v1379
        %v1382 = vadd.s32 %v1381, %v1371
        %v1383 = vadd.s32 %v1382, %v1373
        %v1384 = vand.u32 %v1361, 65535
        %v1385 = vshrl.u32 %v1361, 16
        %v1386 = vand.u32 %v1356, 65535
        %v1387 = vshrl.u32 %v1356, 16
        %v1388 = vmul.u32 %v1384, %v1386
        %v1389 = vmul.u32 %v1384, %v1387
        %v1390 = vmul.u32 %v1385, %v1386
        %v1391 = vmul.u32 %v1385, %v1387
        %v1392 = vshll.u32 %v1389, 16
        %v1393 = vshrl.u32 %v1389, 16
        %v1394 = vshll.u32 %v1390, 16
        %v1395 = vshrl.u32 %v1390, 16
        %vm1396 = vc.u32 %v1388, %v1392
        %v1397 = vsel %vm1396, 1, 0
        %v1398 = vadd.s32 %v1388, %v1392
        %v1399 = vadd.s32 %v1391, %v1397
        %vm1400 = vc.u32 %v1398, %v1394
        %v1401 = vsel %vm1400, 1, 0
        %v1402 = vadd.s32 %v1398, %v1394
        %v1403 = vadd.s32 %v1399, %v1401
        %v1404 = vadd.s32 %v1403, %v1393
        %v1405 = vadd.s32 %v1404, %v1395
        %v1406 = vmul.u32 %v1361, %v1352
        %v1407 = vadd.s32 %v1383, %v1402
        %vm1408 = vc.u32 %v1383, %v1402
        %v1409 = vadd.s32 %v1405, 1
        %v1410 = vsel %vm1408, %v1409, %v1405
        %v1411 = vadd.s32 %v1406, %v1410
        %v1412 = vadd.s32 %v1411, 536870912
        %v1413 = vshrl.u32 %v1412, 30
        %v1414 = vshll.u32 %v1413, 30
        %v1415 = vsub.s32 %v1411, %v1414
        %vm1416 = vcmp.lt.s32.totalorder %v1415, 0
        %v1417 = vsub.s32 0, %v1415
        %v1418 = vsel %vm1416, %v1417, %v1415
        %v1419 = vclz %v1418
        %v1420 = vsub.s32 %v1419, 2
        %vm1421 = vcmp.gt.s32.totalorder 0, %v1420
        %v1422 = vsel %vm1421, 0, %v1420
        %v1423 = vsub.s32 32, %v1422
        %v1424 = vshll.u32 %v1415, %v1422
        %v1425 = vshrl.u32 %v1407, %v1423
        %v1426 = vor.u32 %v1424, %v1425
        %v1427 = vsub.s32 4294967266, %v1422
        %v1428 = vadd.s32 %v1427, 127
        %v1429 = vshll.u32 %v1428, 23
        %v1430 = vor.u32 4788187, %v1429
        %v1431 = vand.u32 2147483647, %v1430
        %v1433 = vcvt.s32.f32 %v1426
        %v1434 = vmul.f32 %v1433, %v1431
        %v1435 = vxor.u32 %v1434, 2147483648
        %v1436 = vsel %vm1315, %v1435, %v1434
        %v1437 = vsub.s32 4, %v1413
        %v1438 = vsel %vm1315, %v1437, %v1413
        %v1439 = vsel %vm1314, %v598, %v1436
        %v1440 = vsel %vm1314, 0, %v1438
        %v1441 = vmul.f32 %v1439, %v1439
        %v1442 = vmul.f32 %v1441, -0.001358992
        %v1443 = vadd.f32 %v1442, 0.041655596
        %v1444 = vmul.f32 %v1441, %v1443
        %v1445 = vadd.f32 %v1444, -0.4999988
        %v1446 = vmul.f32 %v1441, %v1445
        %v1447 = vadd.f32 1.0, %v1446
        %v1448 = vmul.f32 %v1439, %v1439
        %v1449 = vmul.f32 %v1448, -0.00019511016
        %v1450 = vadd.f32 %v1449, 0.008332121
        %v1451 = vmul.f32 %v1448, %v1450
        %v1452 = vadd.f32 %v1451, -0.16666654
        %v1453 = vmul.f32 %v1448, %v1452
        %v1454 = vadd.f32 %v1453, 1.0
        %v1455 = vmul.f32 %v1454, %v1439
        %vm1456 = vweird.f32 %v598
        %v1457 = vadd.s32 %v1440, 3
        %v1458 = vand.u32 %v1457, 3
        %vm1459 = vcmp.lt.s32.totalorder %v1458, 2
        %vm1460 = vcmp.eq.s32.totalorder %v1458, 0
        %v1461 = vxor.u32 %v1455, 2147483648
        %v1462 = vsel %vm1460, %v1447, %v1461
        %vm1463 = vcmp.eq.s32.totalorder %v1458, 2
        %v1464 = vxor.u32 %v1447, 2147483648
        %v1465 = vsel %vm1463, %v1464, %v1455
        %v1466 = vsel %vm1459, %v1462, %v1465
        %v1467 = vsel %vm1456, nan, %v1466
        %v1468 = vand.u32 2147483647, %v627
        %vm1469 = vcmp.le.f32.partialorder %v1468, 0.7853982
        %vm1470 = vcmp.lt.s32.totalorder %v627, 0
        %v1471 = vand.u32 %v627, 2139095040
        %v1472 = vshrl.u32 %v1471, 23
        %v1473 = vsub.s32 %v1472, 127
        %v1474 = vand.u32 2147483647, %v627
        %v1475 = vand.u32 %v1474, 8388607
        %v1476 = vor.u32 %v1475, 8388608
        %v1477 = vsub.s32 0, %v1476
        %v1478 = vadd.s32 %v1473, 1
        %vm1479 = vcmp.gt.s32.totalorder %v1478, 0
        %v1480 = vsel %vm1479, %v1478, 0
        %v1481 = vshrl.u32 %v1480, 5
        %v1482 = vand.u32 %v1480, 31
        %v1483 = vsub.s32 32, %v1482
        %v1484 = vshrl.u32 683565275, %v1483
        %v1485 = vshll.u32 683565275, %v1482
        %v1486 = vshrl.u32 2475754826, %v1483
        %v1487 = vor.u32 %v1485, %v1486
        %v1488 = vshll.u32 2475754826, %v1482
        %v1489 = vshrl.u32 2131351028, %v1483
        %v1490 = vor.u32 %v1488, %v1489
        %v1491 = vshll.u32 2131351028, %v1482
        %v1492 = vshrl.u32 2102212464, %v1483
        %v1493 = vor.u32 %v1491, %v1492
        %v1494 = vshll.u32 2102212464, %v1482
        %v1495 = vshrl.u32 920167782, %v1483
        %v1496 = vor.u32 %v1494, %v1495
        %v1497 = vshll.u32 920167782, %v1482
        %v1498 = vshrl.u32 1326507024, %v1483
        %v1499 = vor.u32 %v1497, %v1498
        %vm1500 = vcmp.lt.s32.totalorder %v1481, 1
        %vm1501 = vcmp.lt.s32.totalorder %v1481, 2
        %vm1502 = vcmp.lt.s32.totalorder %v1481, 3
        %vm1503 = vcmp.lt.s32.totalorder %v1481, 4
        %v1504 = vsel %vm1500, %v1484, %v1487
        %v1505 = vsel %vm1503, %v1493, 2102212464
        %v1506 = vsel %vm1502, %v1490, %v1505
        %v1507 = vsel %vm1501, %v1504, %v1506
        %v1508 = vsel %vm1500, %v1487, %v1490
        %v1509 = vsel %vm1503, %v1496, 920167782
        %v1510 = vsel %vm1502, %v1493, %v1509
        %v1511 = vsel %vm1501, %v1508, %v1510
        %v1512 = vsel %vm1500, %v1490, %v1493
        %v1513 = vsel %vm1503, %v1499, 1326507024
        %v1514 = vsel %vm1502, %v1496, %v1513
        %v1515 = vsel %vm1501, %v1512, %v1514
        %v1516 = vshll.u32 %v1476, 8
        %v1517 = vand.u32 %v1516, 65535
        %v1518 = vshrl.u32 %v1516, 16
        %v1519 = vand.u32 %v1515, 65535
        %v1520 = vshrl.u32 %v1515, 16
        %v1521 = vmul.u32 %v1517, %v1519
        %v1522 = vmul.u32 %v1517, %v1520
        %v1523 = vmul.u32 %v1518, %v1519
        %v1524 = vmul.u32 %v1518, %v1520
        %v1525 = vshll.u32 %v1522, 16
        %v1526 = vshrl.u32 %v1522, 16
        %v1527 = vshll.u32 %v1523, 16
        %v1528 = vshrl.u32 %v1523, 16
        %vm1529 = vc.u32 %v1521, %v1525
        %v1530 = vsel %vm1529, 1, 0
        %v1531 = vadd.s32 %v1521, %v1525
        %v1532 = vadd.s32 %v1524, %v1530
        %vm1533 = vc.u32 %v1531, %v1527
        %v1534 = vsel %vm1533, 1, 0
        %v1535 = vadd.s32 %v1531, %v1527
        %v1536 = vadd.s32 %v1532, %v1534
        %v1537 = vadd.s32 %v1536, %v1526
        %v1538 = vadd.s32 %v1537, %v1528
        %v1539 = vand.u32 %v1516, 65535
        %v1540 = vshrl.u32 %v1516, 16
        %v1541 = vand.u32 %v1511, 65535
        %v1542 = vshrl.u32 %v1511, 16
        %v1543 = vmul.u32 %v1539, %v1541
        %v1544 = vmul.u32 %v1539, %v1542
        %v1545 = vmul.u32 %v1540, %v1541
        %v1546 = vmul.u32 %v1540, %v1542
        %v1547 = vshll.u32 %v1544, 16
        %v1548 = vshrl.u32 %v1544, 16
        %v1549 = vshll.u32 %v1545, 16
        %v1550 = vshrl.u32 %v1545, 16
        %vm1551 = vc.u32 %v1543, %v1547
        %v1552 = vsel %vm1551, 1, 0
        %v1553 = vadd.s32 %v1543, %v1547
        %v1554 = vadd.s32 %v1546, %v1552
        %vm1555 = vc.u32 %v1553, %v1549
        %v1556 = vsel %vm1555, 1, 0
        %v1557 = vadd.s32 %v1553, %v1549
        %v1558 = vadd.s32 %v1554, %v1556
        %v1559 = vadd.s32 %v1558, %v1548
        %v1560 = vadd.s32 %v1559, %v1550
        %v1561 = vmul.u32 %v1516, %v1507
        %v1562 = vadd.s32 %v1538, %v1557
        %vm1563 = vc.u32 %v1538, %v1557
        %v1564 = vadd.s32 %v1560, 1
        %v1565 = vsel %vm1563, %v1564, %v1560
        %v1566 = vadd.s32 %v1561, %v1565
        %v1567 = vadd.s32 %v1566, 536870912
        %v1568 = vshrl.u32 %v1567, 30
        %v1569 = vshll.u32 %v1568, 30
        %v1570 = vsub.s32 %v1566, %v1569
        %vm1571 = vcmp.lt.s32.totalorder %v1570, 0
        %v1572 = vsub.s32 0, %v1570
        %v1573 = vsel %vm1571, %v1572, %v1570
        %v1574 = vclz %v1573
        %v1575 = vsub.s32 %v1574, 2
        %vm1576 = vcmp.gt.s32.totalorder 0, %v1575
        %v1577 = vsel %vm1576, 0, %v1575
        %v1578 = vsub.s32 32, %v1577
        %v1579 = vshll.u32 %v1570, %v1577
        %v1580 = vshrl.u32 %v1562, %v1578
        %v1581 = vor.u32 %v1579, %v1580
        %v1582 = vsub.s32 4294967266, %v1577
        %v1583 = vadd.s32 %v1582, 127
        %v1584 = vshll.u32 %v1583, 23
        %v1585 = vor.u32 4788187, %v1584
        %v1586 = vand.u32 2147483647, %v1585
        %v1588 = vcvt.s32.f32 %v1581
        %v1589 = vmul.f32 %v1588, %v1586
        %v1590 = vxor.u32 %v1589, 2147483648
        %v1591 = vsel %vm1470, %v1590, %v1589
        %v1592 = vsub.s32 4, %v1568
        %v1593 = vsel %vm1470, %v1592, %v1568
        %v1594 = vsel %vm1469, %v627, %v1591
        %v1595 = vsel %vm1469, 0, %v1593
        %v1596 = vmul.f32 %v1594, %v1594
        %v1597 = vmul.f32 %v1596, -0.001358992
        %v1598 = vadd.f32 %v1597, 0.041655596
        %v1599 = vmul.f32 %v1596, %v1598
        %v1600 = vadd.f32 %v1599, -0.4999988
        %v1601 = vmul.f32 %v1596, %v1600
        %v1602 = vadd.f32 1.0, %v1601
        %v1603 = vmul.f32 %v1594, %v1594
        %v1604 = vmul.f32 %v1603, -0.00019511016
        %v1605 = vadd.f32 %v1604, 0.008332121
        %v1606 = vmul.f32 %v1603, %v1605
        %v1607 = vadd.f32 %v1606, -0.16666654
        %v1608 = vmul.f32 %v1603, %v1607
        %v1609 = vadd.f32 %v1608, 1.0
        %v1610 = vmul.f32 %v1609, %v1594
        %vm1611 = vweird.f32 %v627
        %v1612 = vadd.s32 %v1595, 3
        %v1613 = vand.u32 %v1612, 3
        %vm1614 = vcmp.lt.s32.totalorder %v1613, 2
        %vm1615 = vcmp.eq.s32.totalorder %v1613, 0
        %v1616 = vxor.u32 %v1610, 2147483648
        %v1617 = vsel %vm1615, %v1602, %v1616
        %vm1618 = vcmp.eq.s32.totalorder %v1613, 2
        %v1619 = vxor.u32 %v1602, 2147483648
        %v1620 = vsel %vm1618, %v1619, %v1610
        %v1621 = vsel %vm1614, %v1617, %v1620
        %v1622 = vsel %vm1611, nan, %v1621
        %v1623 = vand.u32 2147483647, %v656
        %vm1624 = vcmp.le.f32.partialorder %v1623, 0.7853982
        %vm1625 = vcmp.lt.s32.totalorder %v656, 0
        %v1626 = vand.u32 %v656, 2139095040
        %v1627 = vshrl.u32 %v1626, 23
        %v1628 = vsub.s32 %v1627, 127
        %v1629 = vand.u32 2147483647, %v656
        %v1630 = vand.u32 %v1629, 8388607
        %v1631 = vor.u32 %v1630, 8388608
        %v1632 = vsub.s32 0, %v1631
        %v1633 = vadd.s32 %v1628, 1
        %vm1634 = vcmp.gt.s32.totalorder %v1633, 0
        %v1635 = vsel %vm1634, %v1633, 0
        %v1636 = vshrl.u32 %v1635, 5
        %v1637 = vand.u32 %v1635, 31
        %v1638 = vsub.s32 32, %v1637
        %v1639 = vshrl.u32 683565275, %v1638
        %v1640 = vshll.u32 683565275, %v1637
        %v1641 = vshrl.u32 2475754826, %v1638
        %v1642 = vor.u32 %v1640, %v1641
        %v1643 = vshll.u32 2475754826, %v1637
        %v1644 = vshrl.u32 2131351028, %v1638
        %v1645 = vor.u32 %v1643, %v1644
        %v1646 = vshll.u32 2131351028, %v1637
        %v1647 = vshrl.u32 2102212464, %v1638
        %v1648 = vor.u32 %v1646, %v1647
        %v1649 = vshll.u32 2102212464, %v1637
        %v1650 = vshrl.u32 920167782, %v1638
        %v1651 = vor.u32 %v1649, %v1650
        %v1652 = vshll.u32 920167782, %v1637
        %v1653 = vshrl.u32 1326507024, %v1638
        %v1654 = vor.u32 %v1652, %v1653
        %vm1655 = vcmp.lt.s32.totalorder %v1636, 1
        %vm1656 = vcmp.lt.s32.totalorder %v1636, 2
        %vm1657 = vcmp.lt.s32.totalorder %v1636, 3
        %vm1658 = vcmp.lt.s32.totalorder %v1636, 4
        %v1659 = vsel %vm1655, %v1639, %v1642
        %v1660 = vsel %vm1658, %v1648, 2102212464
        %v1661 = vsel %vm1657, %v1645, %v1660
        %v1662 = vsel %vm1656, %v1659, %v1661
        %v1663 = vsel %vm1655, %v1642, %v1645
        %v1664 = vsel %vm1658, %v1651, 920167782
        %v1665 = vsel %vm1657, %v1648, %v1664
        %v1666 = vsel %vm1656, %v1663, %v1665
        %v1667 = vsel %vm1655, %v1645, %v1648
        %v1668 = vsel %vm1658, %v1654, 1326507024
        %v1669 = vsel %vm1657, %v1651, %v1668
        %v1670 = vsel %vm1656, %v1667, %v1669
        %v1671 = vshll.u32 %v1631, 8
        %v1672 = vand.u32 %v1671, 65535
        %v1673 = vshrl.u32 %v1671, 16
        %v1674 = vand.u32 %v1670, 65535
        %v1675 = vshrl.u32 %v1670, 16
        %v1676 = vmul.u32 %v1672, %v1674
        %v1677 = vmul.u32 %v1672, %v1675
        %v1678 = vmul.u32 %v1673, %v1674
        %v1679 = vmul.u32 %v1673, %v1675
        %v1680 = vshll.u32 %v1677, 16
        %v1681 = vshrl.u32 %v1677, 16
        %v1682 = vshll.u32 %v1678, 16
        %v1683 = vshrl.u32 %v1678, 16
        %vm1684 = vc.u32 %v1676, %v1680
        %v1685 = vsel %vm1684, 1, 0
        %v1686 = vadd.s32 %v1676, %v1680
        %v1687 = vadd.s32 %v1679, %v1685
        %vm1688 = vc.u32 %v1686, %v1682
        %v1689 = vsel %vm1688, 1, 0
        %v1690 = vadd.s32 %v1686, %v1682
        %v1691 = vadd.s32 %v1687, %v1689
        %v1692 = vadd.s32 %v1691, %v1681
        %v1693 = vadd.s32 %v1692, %v1683
        %v1694 = vand.u32 %v1671, 65535
        %v1695 = vshrl.u32 %v1671, 16
        %v1696 = vand.u32 %v1666, 65535
        %v1697 = vshrl.u32 %v1666, 16
        %v1698 = vmul.u32 %v1694, %v1696
        %v1699 = vmul.u32 %v1694, %v1697
        %v1700 = vmul.u32 %v1695, %v1696
        %v1701 = vmul.u32 %v1695, %v1697
        %v1702 = vshll.u32 %v1699, 16
        %v1703 = vshrl.u32 %v1699, 16
        %v1704 = vshll.u32 %v1700, 16
        %v1705 = vshrl.u32 %v1700, 16
        %vm1706 = vc.u32 %v1698, %v1702
        %v1707 = vsel %vm1706, 1, 0
        %v1708 = vadd.s32 %v1698, %v1702
        %v1709 = vadd.s32 %v1701, %v1707
        %vm1710 = vc.u32 %v1708, %v1704
        %v1711 = vsel %vm1710, 1, 0
        %v1712 = vadd.s32 %v1708, %v1704
        %v1713 = vadd.s32 %v1709, %v1711
        %v1714 = vadd.s32 %v1713, %v1703
        %v1715 = vadd.s32 %v1714, %v1705
        %v1716 = vmul.u32 %v1671, %v1662
        %v1717 = vadd.s32 %v1693, %v1712
        %vm1718 = vc.u32 %v1693, %v1712
        %v1719 = vadd.s32 %v1715, 1
        %v1720 = vsel %vm1718, %v1719, %v1715
        %v1721 = vadd.s32 %v1716, %v1720
        %v1722 = vadd.s32 %v1721, 536870912
        %v1723 = vshrl.u32 %v1722, 30
        %v1724 = vshll.u32 %v1723, 30
        %v1725 = vsub.s32 %v1721, %v1724
        %vm1726 = vcmp.lt.s32.totalorder %v1725, 0
        %v1727 = vsub.s32 0, %v1725
        %v1728 = vsel %vm1726, %v1727, %v1725
        %v1729 = vclz %v1728
        %v1730 = vsub.s32 %v1729, 2
        %vm1731 = vcmp.gt.s32.totalorder 0, %v1730
        %v1732 = vsel %vm1731, 0, %v1730
        %v1733 = vsub.s32 32, %v1732
        %v1734 = vshll.u32 %v1725, %v1732
        %v1735 = vshrl.u32 %v1717, %v1733
        %v1736 = vor.u32 %v1734, %v1735
        %v1737 = vsub.s32 4294967266, %v1732
        %v1738 = vadd.s32 %v1737, 127
        %v1739 = vshll.u32 %v1738, 23
        %v1740 = vor.u32 4788187, %v1739
        %v1741 = vand.u32 2147483647, %v1740
        %v1743 = vcvt.s32.f32 %v1736
        %v1744 = vmul.f32 %v1743, %v1741
        %v1745 = vxor.u32 %v1744, 2147483648
        %v1746 = vsel %vm1625, %v1745, %v1744
        %v1747 = vsub.s32 4, %v1723
        %v1748 = vsel %vm1625, %v1747, %v1723
        %v1749 = vsel %vm1624, %v656, %v1746
        %v1750 = vsel %vm1624, 0, %v1748
        %v1751 = vmul.f32 %v1749, %v1749
        %v1752 = vmul.f32 %v1751, -0.001358992
        %v1753 = vadd.f32 %v1752, 0.041655596
        %v1754 = vmul.f32 %v1751, %v1753
        %v1755 = vadd.f32 %v1754, -0.4999988
        %v1756 = vmul.f32 %v1751, %v1755
        %v1757 = vadd.f32 1.0, %v1756
        %v1758 = vmul.f32 %v1749, %v1749
        %v1759 = vmul.f32 %v1758, -0.00019511016
        %v1760 = vadd.f32 %v1759, 0.008332121
        %v1761 = vmul.f32 %v1758, %v1760
        %v1762 = vadd.f32 %v1761, -0.16666654
        %v1763 = vmul.f32 %v1758, %v1762
        %v1764 = vadd.f32 %v1763, 1.0
        %v1765 = vmul.f32 %v1764, %v1749
        %vm1766 = vweird.f32 %v656
        %v1767 = vadd.s32 %v1750, 3
        %v1768 = vand.u32 %v1767, 3
        %vm1769 = vcmp.lt.s32.totalorder %v1768, 2
        %vm1770 = vcmp.eq.s32.totalorder %v1768, 0
        %v1771 = vxor.u32 %v1765, 2147483648
        %v1772 = vsel %vm1770, %v1757, %v1771
        %vm1773 = vcmp.eq.s32.totalorder %v1768, 2
        %v1774 = vxor.u32 %v1757, 2147483648
        %v1775 = vsel %vm1773, %v1774, %v1765
        %v1776 = vsel %vm1769, %v1772, %v1775
        %v1777 = vsel %vm1766, nan, %v1776
        %v1778 = vand.u32 2147483647, %v685
        %vm1779 = vcmp.le.f32.partialorder %v1778, 0.7853982
        %vm1780 = vcmp.lt.s32.totalorder %v685, 0
        %v1781 = vand.u32 %v685, 2139095040
        %v1782 = vshrl.u32 %v1781, 23
        %v1783 = vsub.s32 %v1782, 127
        %v1784 = vand.u32 2147483647, %v685
        %v1785 = vand.u32 %v1784, 8388607
        %v1786 = vor.u32 %v1785, 8388608
        %v1787 = vsub.s32 0, %v1786
        %v1788 = vadd.s32 %v1783, 1
        %vm1789 = vcmp.gt.s32.totalorder %v1788, 0
        %v1790 = vsel %vm1789, %v1788, 0
        %v1791 = vshrl.u32 %v1790, 5
        %v1792 = vand.u32 %v1790, 31
        %v1793 = vsub.s32 32, %v1792
        %v1794 = vshrl.u32 683565275, %v1793
        %v1795 = vshll.u32 683565275, %v1792
        %v1796 = vshrl.u32 2475754826, %v1793
        %v1797 = vor.u32 %v1795, %v1796
        %v1798 = vshll.u32 2475754826, %v1792
        %v1799 = vshrl.u32 2131351028, %v1793
        %v1800 = vor.u32 %v1798, %v1799
        %v1801 = vshll.u32 2131351028, %v1792
        %v1802 = vshrl.u32 2102212464, %v1793
        %v1803 = vor.u32 %v1801, %v1802
        %v1804 = vshll.u32 2102212464, %v1792
        %v1805 = vshrl.u32 920167782, %v1793
        %v1806 = vor.u32 %v1804, %v1805
        %v1807 = vshll.u32 920167782, %v1792
        %v1808 = vshrl.u32 1326507024, %v1793
        %v1809 = vor.u32 %v1807, %v1808
        %vm1810 = vcmp.lt.s32.totalorder %v1791, 1
        %vm1811 = vcmp.lt.s32.totalorder %v1791, 2
        %vm1812 = vcmp.lt.s32.totalorder %v1791, 3
        %vm1813 = vcmp.lt.s32.totalorder %v1791, 4
        %v1814 = vsel %vm1810, %v1794, %v1797
        %v1815 = vsel %vm1813, %v1803, 2102212464
        %v1816 = vsel %vm1812, %v1800, %v1815
        %v1817 = vsel %vm1811, %v1814, %v1816
        %v1818 = vsel %vm1810, %v1797, %v1800
        %v1819 = vsel %vm1813, %v1806, 920167782
        %v1820 = vsel %vm1812, %v1803, %v1819
        %v1821 = vsel %vm1811, %v1818, %v1820
        %v1822 = vsel %vm1810, %v1800, %v1803
        %v1823 = vsel %vm1813, %v1809, 1326507024
        %v1824 = vsel %vm1812, %v1806, %v1823
        %v1825 = vsel %vm1811, %v1822, %v1824
        %v1826 = vshll.u32 %v1786, 8
        %v1827 = vand.u32 %v1826, 65535
        %v1828 = vshrl.u32 %v1826, 16
        %v1829 = vand.u32 %v1825, 65535
        %v1830 = vshrl.u32 %v1825, 16
        %v1831 = vmul.u32 %v1827, %v1829
        %v1832 = vmul.u32 %v1827, %v1830
        %v1833 = vmul.u32 %v1828, %v1829
        %v1834 = vmul.u32 %v1828, %v1830
        %v1835 = vshll.u32 %v1832, 16
        %v1836 = vshrl.u32 %v1832, 16
        %v1837 = vshll.u32 %v1833, 16
        %v1838 = vshrl.u32 %v1833, 16
        %vm1839 = vc.u32 %v1831, %v1835
        %v1840 = vsel %vm1839, 1, 0
        %v1841 = vadd.s32 %v1831, %v1835
        %v1842 = vadd.s32 %v1834, %v1840
        %vm1843 = vc.u32 %v1841, %v1837
        %v1844 = vsel %vm1843, 1, 0
        %v1845 = vadd.s32 %v1841, %v1837
        %v1846 = vadd.s32 %v1842, %v1844
        %v1847 = vadd.s32 %v1846, %v1836
        %v1848 = vadd.s32 %v1847, %v1838
        %v1849 = vand.u32 %v1826, 65535
        %v1850 = vshrl.u32 %v1826, 16
        %v1851 = vand.u32 %v1821, 65535
        %v1852 = vshrl.u32 %v1821, 16
        %v1853 = vmul.u32 %v1849, %v1851
        %v1854 = vmul.u32 %v1849, %v1852
        %v1855 = vmul.u32 %v1850, %v1851
        %v1856 = vmul.u32 %v1850, %v1852
        %v1857 = vshll.u32 %v1854, 16
        %v1858 = vshrl.u32 %v1854, 16
        %v1859 = vshll.u32 %v1855, 16
        %v1860 = vshrl.u32 %v1855, 16
        %vm1861 = vc.u32 %v1853, %v1857
        %v1862 = vsel %vm1861, 1, 0
        %v1863 = vadd.s32 %v1853, %v1857
        %v1864 = vadd.s32 %v1856, %v1862
        %vm1865 = vc.u32 %v1863, %v1859
        %v1866 = vsel %vm1865, 1, 0
        %v1867 = vadd.s32 %v1863, %v1859
        %v1868 = vadd.s32 %v1864, %v1866
        %v1869 = vadd.s32 %v1868, %v1858
        %v1870 = vadd.s32 %v1869, %v1860
        %v1871 = vmul.u32 %v1826, %v1817
        %v1872 = vadd.s32 %v1848, %v1867
        %vm1873 = vc.u32 %v1848, %v1867
        %v1874 = vadd.s32 %v1870, 1
        %v1875 = vsel %vm1873, %v1874, %v1870
        %v1876 = vadd.s32 %v1871, %v1875
        %v1877 = vadd.s32 %v1876, 536870912
        %v1878 = vshrl.u32 %v1877, 30
        %v1879 = vshll.u32 %v1878, 30
        %v1880 = vsub.s32 %v1876, %v1879
        %vm1881 = vcmp.lt.s32.totalorder %v1880, 0
        %v1882 = vsub.s32 0, %v1880
        %v1883 = vsel %vm1881, %v1882, %v1880
        %v1884 = vclz %v1883
        %v1885 = vsub.s32 %v1884, 2
        %vm1886 = vcmp.gt.s32.totalorder 0, %v1885
        %v1887 = vsel %vm1886, 0, %v1885
        %v1888 = vsub.s32 32, %v1887
        %v1889 = vshll.u32 %v1880, %v1887
        %v1890 = vshrl.u32 %v1872, %v1888
        %v1891 = vor.u32 %v1889, %v1890
        %v1892 = vsub.s32 4294967266, %v1887
        %v1893 = vadd.s32 %v1892, 127
        %v1894 = vshll.u32 %v1893, 23
        %v1895 = vor.u32 4788187, %v1894
        %v1896 = vand.u32 2147483647, %v1895
        %v1898 = vcvt.s32.f32 %v1891
        %v1899 = vmul.f32 %v1898, %v1896
        %v1900 = vxor.u32 %v1899, 2147483648
        %v1901 = vsel %vm1780, %v1900, %v1899
        %v1902 = vsub.s32 4, %v1878
        %v1903 = vsel %vm1780, %v1902, %v1878
        %v1904 = vsel %vm1779, %v685, %v1901
        %v1905 = vsel %vm1779, 0, %v1903
        %v1906 = vmul.f32 %v1904, %v1904
        %v1907 = vmul.f32 %v1906, -0.001358992
        %v1908 = vadd.f32 %v1907, 0.041655596
        %v1909 = vmul.f32 %v1906, %v1908
        %v1910 = vadd.f32 %v1909, -0.4999988
        %v1911 = vmul.f32 %v1906, %v1910
        %v1912 = vadd.f32 1.0, %v1911
        %v1913 = vmul.f32 %v1904, %v1904
        %v1914 = vmul.f32 %v1913, -0.00019511016
        %v1915 = vadd.f32 %v1914, 0.008332121
        %v1916 = vmul.f32 %v1913, %v1915
        %v1917 = vadd.f32 %v1916, -0.16666654
        %v1918 = vmul.f32 %v1913, %v1917
        %v1919 = vadd.f32 %v1918, 1.0
        %v1920 = vmul.f32 %v1919, %v1904
        %vm1921 = vweird.f32 %v685
        %v1922 = vadd.s32 %v1905, 3
        %v1923 = vand.u32 %v1922, 3
        %vm1924 = vcmp.lt.s32.totalorder %v1923, 2
        %vm1925 = vcmp.eq.s32.totalorder %v1923, 0
        %v1926 = vxor.u32 %v1920, 2147483648
        %v1927 = vsel %vm1925, %v1912, %v1926
        %vm1928 = vcmp.eq.s32.totalorder %v1923, 2
        %v1929 = vxor.u32 %v1912, 2147483648
        %v1930 = vsel %vm1928, %v1929, %v1920
        %v1931 = vsel %vm1924, %v1927, %v1930
        %v1932 = vsel %vm1921, nan, %v1931
        %v1933 = vand.u32 2147483647, %v601
        %vm1934 = vcmp.le.f32.partialorder %v1933, 0.7853982
        %vm1935 = vcmp.lt.s32.totalorder %v601, 0
        %v1936 = vand.u32 %v601, 2139095040
        %v1937 = vshrl.u32 %v1936, 23
        %v1938 = vsub.s32 %v1937, 127
        %v1939 = vand.u32 2147483647, %v601
        %v1940 = vand.u32 %v1939, 8388607
        %v1941 = vor.u32 %v1940, 8388608
        %v1942 = vsub.s32 0, %v1941
        %v1943 = vadd.s32 %v1938, 1
        %vm1944 = vcmp.gt.s32.totalorder %v1943, 0
        %v1945 = vsel %vm1944, %v1943, 0
        %v1946 = vshrl.u32 %v1945, 5
        %v1947 = vand.u32 %v1945, 31
        %v1948 = vsub.s32 32, %v1947
        %v1949 = vshrl.u32 683565275, %v1948
        %v1950 = vshll.u32 683565275, %v1947
        %v1951 = vshrl.u32 2475754826, %v1948
        %v1952 = vor.u32 %v1950, %v1951
        %v1953 = vshll.u32 2475754826, %v1947
        %v1954 = vshrl.u32 2131351028, %v1948
        %v1955 = vor.u32 %v1953, %v1954
        %v1956 = vshll.u32 2131351028, %v1947
        %v1957 = vshrl.u32 2102212464, %v1948
        %v1958 = vor.u32 %v1956, %v1957
        %v1959 = vshll.u32 2102212464, %v1947
        %v1960 = vshrl.u32 920167782, %v1948
        %v1961 = vor.u32 %v1959, %v1960
        %v1962 = vshll.u32 920167782, %v1947
        %v1963 = vshrl.u32 1326507024, %v1948
        %v1964 = vor.u32 %v1962, %v1963
        %vm1965 = vcmp.lt.s32.totalorder %v1946, 1
        %vm1966 = vcmp.lt.s32.totalorder %v1946, 2
        %vm1967 = vcmp.lt.s32.totalorder %v1946, 3
        %vm1968 = vcmp.lt.s32.totalorder %v1946, 4
        %v1969 = vsel %vm1965, %v1949, %v1952
        %v1970 = vsel %vm1968, %v1958, 2102212464
        %v1971 = vsel %vm1967, %v1955, %v1970
        %v1972 = vsel %vm1966, %v1969, %v1971
        %v1973 = vsel %vm1965, %v1952, %v1955
        %v1974 = vsel %vm1968, %v1961, 920167782
        %v1975 = vsel %vm1967, %v1958, %v1974
        %v1976 = vsel %vm1966, %v1973, %v1975
        %v1977 = vsel %vm1965, %v1955, %v1958
        %v1978 = vsel %vm1968, %v1964, 1326507024
        %v1979 = vsel %vm1967, %v1961, %v1978
        %v1980 = vsel %vm1966, %v1977, %v1979
        %v1981 = vshll.u32 %v1941, 8
        %v1982 = vand.u32 %v1981, 65535
        %v1983 = vshrl.u32 %v1981, 16
        %v1984 = vand.u32 %v1980, 65535
        %v1985 = vshrl.u32 %v1980, 16
        %v1986 = vmul.u32 %v1982, %v1984
        %v1987 = vmul.u32 %v1982, %v1985
        %v1988 = vmul.u32 %v1983, %v1984
        %v1989 = vmul.u32 %v1983, %v1985
        %v1990 = vshll.u32 %v1987, 16
        %v1991 = vshrl.u32 %v1987, 16
        %v1992 = vshll.u32 %v1988, 16
        %v1993 = vshrl.u32 %v1988, 16
        %vm1994 = vc.u32 %v1986, %v1990
        %v1995 = vsel %vm1994, 1, 0
        %v1996 = vadd.s32 %v1986, %v1990
        %v1997 = vadd.s32 %v1989, %v1995
        %vm1998 = vc.u32 %v1996, %v1992
        %v1999 = vsel %vm1998, 1, 0
        %v2000 = vadd.s32 %v1996, %v1992
        %v2001 = vadd.s32 %v1997, %v1999
        %v2002 = vadd.s32 %v2001, %v1991
        %v2003 = vadd.s32 %v2002, %v1993
        %v2004 = vand.u32 %v1981, 65535
        %v2005 = vshrl.u32 %v1981, 16
        %v2006 = vand.u32 %v1976, 65535
        %v2007 = vshrl.u32 %v1976, 16
        %v2008 = vmul.u32 %v2004, %v2006
        %v2009 = vmul.u32 %v2004, %v2007
        %v2010 = vmul.u32 %v2005, %v2006
        %v2011 = vmul.u32 %v2005, %v2007
        %v2012 = vshll.u32 %v2009, 16
        %v2013 = vshrl.u32 %v2009, 16
        %v2014 = vshll.u32 %v2010, 16
        %v2015 = vshrl.u32 %v2010, 16
        %vm2016 = vc.u32 %v2008, %v2012
        %v2017 = vsel %vm2016, 1, 0
        %v2018 = vadd.s32 %v2008, %v2012
        %v2019 = vadd.s32 %v2011, %v2017
        %vm2020 = vc.u32 %v2018, %v2014
        %v2021 = vsel %vm2020, 1, 0
        %v2022 = vadd.s32 %v2018, %v2014
        %v2023 = vadd.s32 %v2019, %v2021
        %v2024 = vadd.s32 %v2023, %v2013
        %v2025 = vadd.s32 %v2024, %v2015
        %v2026 = vmul.u32 %v1981, %v1972
        %v2027 = vadd.s32 %v2003, %v2022
        %vm2028 = vc.u32 %v2003, %v2022
        %v2029 = vadd.s32 %v2025, 1
        %v2030 = vsel %vm2028, %v2029, %v2025
        %v2031 = vadd.s32 %v2026, %v2030
        %v2032 = vadd.s32 %v2031, 536870912
        %v2033 = vshrl.u32 %v2032, 30
        %v2034 = vshll.u32 %v2033, 30
        %v2035 = vsub.s32 %v2031, %v2034
        %vm2036 = vcmp.lt.s32.totalorder %v2035, 0
        %v2037 = vsub.s32 0, %v2035
        %v2038 = vsel %vm2036, %v2037, %v2035
        %v2039 = vclz %v2038
        %v2040 = vsub.s32 %v2039, 2
        %vm2041 = vcmp.gt.s32.totalorder 0, %v2040
        %v2042 = vsel %vm2041, 0, %v2040
        %v2043 = vsub.s32 32, %v2042
        %v2044 = vshll.u32 %v2035, %v2042
        %v2045 = vshrl.u32 %v2027, %v2043
        %v2046 = vor.u32 %v2044, %v2045
        %v2047 = vsub.s32 4294967266, %v2042
        %v2048 = vadd.s32 %v2047, 127
        %v2049 = vshll.u32 %v2048, 23
        %v2050 = vor.u32 4788187, %v2049
        %v2051 = vand.u32 2147483647, %v2050
        %v2053 = vcvt.s32.f32 %v2046
        %v2054 = vmul.f32 %v2053, %v2051
        %v2055 = vxor.u32 %v2054, 2147483648
        %v2056 = vsel %vm1935, %v2055, %v2054
        %v2057 = vsub.s32 4, %v2033
        %v2058 = vsel %vm1935, %v2057, %v2033
        %v2059 = vsel %vm1934, %v601, %v2056
        %v2060 = vsel %vm1934, 0, %v2058
        %v2061 = vmul.f32 %v2059, %v2059
        %v2062 = vmul.f32 %v2061, -0.001358992
        %v2063 = vadd.f32 %v2062, 0.041655596
        %v2064 = vmul.f32 %v2061, %v2063
        %v2065 = vadd.f32 %v2064, -0.4999988
        %v2066 = vmul.f32 %v2061, %v2065
        %v2067 = vadd.f32 1.0, %v2066
        %v2068 = vmul.f32 %v2059, %v2059
        %v2069 = vmul.f32 %v2068, -0.00019511016
        %v2070 = vadd.f32 %v2069, 0.008332121
        %v2071 = vmul.f32 %v2068, %v2070
        %v2072 = vadd.f32 %v2071, -0.16666654
        %v2073 = vmul.f32 %v2068, %v2072
        %v2074 = vadd.f32 %v2073, 1.0
        %v2075 = vmul.f32 %v2074, %v2059
        %vm2076 = vweird.f32 %v601
        %v2077 = vadd.s32 %v2060, 3
        %v2078 = vand.u32 %v2077, 3
        %vm2079 = vcmp.lt.s32.totalorder %v2078, 2
        %vm2080 = vcmp.eq.s32.totalorder %v2078, 0
        %v2081 = vxor.u32 %v2075, 2147483648
        %v2082 = vsel %vm2080, %v2067, %v2081
        %vm2083 = vcmp.eq.s32.totalorder %v2078, 2
        %v2084 = vxor.u32 %v2067, 2147483648
        %v2085 = vsel %vm2083, %v2084, %v2075
        %v2086 = vsel %vm2079, %v2082, %v2085
        %v2087 = vsel %vm2076, nan, %v2086
        %v2088 = vand.u32 2147483647, %v630
        %vm2089 = vcmp.le.f32.partialorder %v2088, 0.7853982
        %vm2090 = vcmp.lt.s32.totalorder %v630, 0
        %v2091 = vand.u32 %v630, 2139095040
        %v2092 = vshrl.u32 %v2091, 23
        %v2093 = vsub.s32 %v2092, 127
        %v2094 = vand.u32 2147483647, %v630
        %v2095 = vand.u32 %v2094, 8388607
        %v2096 = vor.u32 %v2095, 8388608
        %v2097 = vsub.s32 0, %v2096
        %v2098 = vadd.s32 %v2093, 1
        %vm2099 = vcmp.gt.s32.totalorder %v2098, 0
        %v2100 = vsel %vm2099, %v2098, 0
        %v2101 = vshrl.u32 %v2100, 5
        %v2102 = vand.u32 %v2100, 31
        %v2103 = vsub.s32 32, %v2102
        %v2104 = vshrl.u32 683565275, %v2103
        %v2105 = vshll.u32 683565275, %v2102
        %v2106 = vshrl.u32 2475754826, %v2103
        %v2107 = vor.u32 %v2105, %v2106
        %v2108 = vshll.u32 2475754826, %v2102
        %v2109 = vshrl.u32 2131351028, %v2103
        %v2110 = vor.u32 %v2108, %v2109
        %v2111 = vshll.u32 2131351028, %v2102
        %v2112 = vshrl.u32 2102212464, %v2103
        %v2113 = vor.u32 %v2111, %v2112
        %v2114 = vshll.u32 2102212464, %v2102
        %v2115 = vshrl.u32 920167782, %v2103
        %v2116 = vor.u32 %v2114, %v2115
        %v2117 = vshll.u32 920167782, %v2102
        %v2118 = vshrl.u32 1326507024, %v2103
        %v2119 = vor.u32 %v2117, %v2118
        %vm2120 = vcmp.lt.s32.totalorder %v2101, 1
        %vm2121 = vcmp.lt.s32.totalorder %v2101, 2
        %vm2122 = vcmp.lt.s32.totalorder %v2101, 3
        %vm2123 = vcmp.lt.s32.totalorder %v2101, 4
        %v2124 = vsel %vm2120, %v2104, %v2107
        %v2125 = vsel %vm2123, %v2113, 2102212464
        %v2126 = vsel %vm2122, %v2110, %v2125
        %v2127 = vsel %vm2121, %v2124, %v2126
        %v2128 = vsel %vm2120, %v2107, %v2110
        %v2129 = vsel %vm2123, %v2116, 920167782
        %v2130 = vsel %vm2122, %v2113, %v2129
        %v2131 = vsel %vm2121, %v2128, %v2130
        %v2132 = vsel %vm2120, %v2110, %v2113
        %v2133 = vsel %vm2123, %v2119, 1326507024
        %v2134 = vsel %vm2122, %v2116, %v2133
        %v2135 = vsel %vm2121, %v2132, %v2134
        %v2136 = vshll.u32 %v2096, 8
        %v2137 = vand.u32 %v2136, 65535
        %v2138 = vshrl.u32 %v2136, 16
        %v2139 = vand.u32 %v2135, 65535
        %v2140 = vshrl.u32 %v2135, 16
        %v2141 = vmul.u32 %v2137, %v2139
        %v2142 = vmul.u32 %v2137, %v2140
        %v2143 = vmul.u32 %v2138, %v2139
        %v2144 = vmul.u32 %v2138, %v2140
        %v2145 = vshll.u32 %v2142, 16
        %v2146 = vshrl.u32 %v2142, 16
        %v2147 = vshll.u32 %v2143, 16
        %v2148 = vshrl.u32 %v2143, 16
        %vm2149 = vc.u32 %v2141, %v2145
        %v2150 = vsel %vm2149, 1, 0
        %v2151 = vadd.s32 %v2141, %v2145
        %v2152 = vadd.s32 %v2144, %v2150
        %vm2153 = vc.u32 %v2151, %v2147
        %v2154 = vsel %vm2153, 1, 0
        %v2155 = vadd.s32 %v2151, %v2147
        %v2156 = vadd.s32 %v2152, %v2154
        %v2157 = vadd.s32 %v2156, %v2146
        %v2158 = vadd.s32 %v2157, %v2148
        %v2159 = vand.u32 %v2136, 65535
        %v2160 = vshrl.u32 %v2136, 16
        %v2161 = vand.u32 %v2131, 65535
        %v2162 = vshrl.u32 %v2131, 16
        %v2163 = vmul.u32 %v2159, %v2161
        %v2164 = vmul.u32 %v2159, %v2162
        %v2165 = vmul.u32 %v2160, %v2161
        %v2166 = vmul.u32 %v2160, %v2162
        %v2167 = vshll.u32 %v2164, 16
        %v2168 = vshrl.u32 %v2164, 16
        %v2169 = vshll.u32 %v2165, 16
        %v2170 = vshrl.u32 %v2165, 16
        %vm2171 = vc.u32 %v2163, %v2167
        %v2172 = vsel %vm2171, 1, 0
        %v2173 = vadd.s32 %v2163, %v2167
        %v2174 = vadd.s32 %v2166, %v2172
        %vm2175 = vc.u32 %v2173, %v2169
        %v2176 = vsel %vm2175, 1, 0
        %v2177 = vadd.s32 %v2173, %v2169
        %v2178 = vadd.s32 %v2174, %v2176
        %v2179 = vadd.s32 %v2178, %v2168
        %v2180 = vadd.s32 %v2179, %v2170
        %v2181 = vmul.u32 %v2136, %v2127
        %v2182 = vadd.s32 %v2158, %v2177
        %vm2183 = vc.u32 %v2158, %v2177
        %v2184 = vadd.s32 %v2180, 1
        %v2185 = vsel %vm2183, %v2184, %v2180
        %v2186 = vadd.s32 %v2181, %v2185
        %v2187 = vadd.s32 %v2186, 536870912
        %v2188 = vshrl.u32 %v2187, 30
        %v2189 = vshll.u32 %v2188, 30
        %v2190 = vsub.s32 %v2186, %v2189
        %vm2191 = vcmp.lt.s32.totalorder %v2190, 0
        %v2192 = vsub.s32 0, %v2190
        %v2193 = vsel %vm2191, %v2192, %v2190
        %v2194 = vclz %v2193
        %v2195 = vsub.s32 %v2194, 2
        %vm2196 = vcmp.gt.s32.totalorder 0, %v2195
        %v2197 = vsel %vm2196, 0, %v2195
        %v2198 = vsub.s32 32, %v2197
        %v2199 = vshll.u32 %v2190, %v2197
        %v2200 = vshrl.u32 %v2182, %v2198
        %v2201 = vor.u32 %v2199, %v2200
        %v2202 = vsub.s32 4294967266, %v2197
        %v2203 = vadd.s32 %v2202, 127
        %v2204 = vshll.u32 %v2203, 23
        %v2205 = vor.u32 4788187, %v2204
        %v2206 = vand.u32 2147483647, %v2205
        %v2208 = vcvt.s32.f32 %v2201
        %v2209 = vmul.f32 %v2208, %v2206
        %v2210 = vxor.u32 %v2209, 2147483648
        %v2211 = vsel %vm2090, %v2210, %v2209
        %v2212 = vsub.s32 4, %v2188
        %v2213 = vsel %vm2090, %v2212, %v2188
        %v2214 = vsel %vm2089, %v630, %v2211
        %v2215 = vsel %vm2089, 0, %v2213
        %v2216 = vmul.f32 %v2214, %v2214
        %v2217 = vmul.f32 %v2216, -0.001358992
        %v2218 = vadd.f32 %v2217, 0.041655596
        %v2219 = vmul.f32 %v2216, %v2218
        %v2220 = vadd.f32 %v2219, -0.4999988
        %v2221 = vmul.f32 %v2216, %v2220
        %v2222 = vadd.f32 1.0, %v2221
        %v2223 = vmul.f32 %v2214, %v2214
        %v2224 = vmul.f32 %v2223, -0.00019511016
        %v2225 = vadd.f32 %v2224, 0.008332121
        %v2226 = vmul.f32 %v2223, %v2225
        %v2227 = vadd.f32 %v2226, -0.16666654
        %v2228 = vmul.f32 %v2223, %v2227
        %v2229 = vadd.f32 %v2228, 1.0
        %v2230 = vmul.f32 %v2229, %v2214
        %vm2231 = vweird.f32 %v630
        %v2232 = vadd.s32 %v2215, 3
        %v2233 = vand.u32 %v2232, 3
        %vm2234 = vcmp.lt.s32.totalorder %v2233, 2
        %vm2235 = vcmp.eq.s32.totalorder %v2233, 0
        %v2236 = vxor.u32 %v2230, 2147483648
        %v2237 = vsel %vm2235, %v2222, %v2236
        %vm2238 = vcmp.eq.s32.totalorder %v2233, 2
        %v2239 = vxor.u32 %v2222, 2147483648
        %v2240 = vsel %vm2238, %v2239, %v2230
        %v2241 = vsel %vm2234, %v2237, %v2240
        %v2242 = vsel %vm2231, nan, %v2241
        %v2243 = vand.u32 2147483647, %v659
        %vm2244 = vcmp.le.f32.partialorder %v2243, 0.7853982
        %vm2245 = vcmp.lt.s32.totalorder %v659, 0
        %v2246 = vand.u32 %v659, 2139095040
        %v2247 = vshrl.u32 %v2246, 23
        %v2248 = vsub.s32 %v2247, 127
        %v2249 = vand.u32 2147483647, %v659
        %v2250 = vand.u32 %v2249, 8388607
        %v2251 = vor.u32 %v2250, 8388608
        %v2252 = vsub.s32 0, %v2251
        %v2253 = vadd.s32 %v2248, 1
        %vm2254 = vcmp.gt.s32.totalorder %v2253, 0
        %v2255 = vsel %vm2254, %v2253, 0
        %v2256 = vshrl.u32 %v2255, 5
        %v2257 = vand.u32 %v2255, 31
        %v2258 = vsub.s32 32, %v2257
        %v2259 = vshrl.u32 683565275, %v2258
        %v2260 = vshll.u32 683565275, %v2257
        %v2261 = vshrl.u32 2475754826, %v2258
        %v2262 = vor.u32 %v2260, %v2261
        %v2263 = vshll.u32 2475754826, %v2257
        %v2264 = vshrl.u32 2131351028, %v2258
        %v2265 = vor.u32 %v2263, %v2264
        %v2266 = vshll.u32 2131351028, %v2257
        %v2267 = vshrl.u32 2102212464, %v2258
        %v2268 = vor.u32 %v2266, %v2267
        %v2269 = vshll.u32 2102212464, %v2257
        %v2270 = vshrl.u32 920167782, %v2258
        %v2271 = vor.u32 %v2269, %v2270
        %v2272 = vshll.u32 920167782, %v2257
        %v2273 = vshrl.u32 1326507024, %v2258
        %v2274 = vor.u32 %v2272, %v2273
        %vm2275 = vcmp.lt.s32.totalorder %v2256, 1
        %vm2276 = vcmp.lt.s32.totalorder %v2256, 2
        %vm2277 = vcmp.lt.s32.totalorder %v2256, 3
        %vm2278 = vcmp.lt.s32.totalorder %v2256, 4
        %v2279 = vsel %vm2275, %v2259, %v2262
        %v2280 = vsel %vm2278, %v2268, 2102212464
        %v2281 = vsel %vm2277, %v2265, %v2280
        %v2282 = vsel %vm2276, %v2279, %v2281
        %v2283 = vsel %vm2275, %v2262, %v2265
        %v2284 = vsel %vm2278, %v2271, 920167782
        %v2285 = vsel %vm2277, %v2268, %v2284
        %v2286 = vsel %vm2276, %v2283, %v2285
        %v2287 = vsel %vm2275, %v2265, %v2268
        %v2288 = vsel %vm2278, %v2274, 1326507024
        %v2289 = vsel %vm2277, %v2271, %v2288
        %v2290 = vsel %vm2276, %v2287, %v2289
        %v2291 = vshll.u32 %v2251, 8
        %v2292 = vand.u32 %v2291, 65535
        %v2293 = vshrl.u32 %v2291, 16
        %v2294 = vand.u32 %v2290, 65535
        %v2295 = vshrl.u32 %v2290, 16
        %v2296 = vmul.u32 %v2292, %v2294
        %v2297 = vmul.u32 %v2292, %v2295
        %v2298 = vmul.u32 %v2293, %v2294
        %v2299 = vmul.u32 %v2293, %v2295
        %v2300 = vshll.u32 %v2297, 16
        %v2301 = vshrl.u32 %v2297, 16
        %v2302 = vshll.u32 %v2298, 16
        %v2303 = vshrl.u32 %v2298, 16
        %vm2304 = vc.u32 %v2296, %v2300
        %v2305 = vsel %vm2304, 1, 0
        %v2306 = vadd.s32 %v2296, %v2300
        %v2307 = vadd.s32 %v2299, %v2305
        %vm2308 = vc.u32 %v2306, %v2302
        %v2309 = vsel %vm2308, 1, 0
        %v2310 = vadd.s32 %v2306, %v2302
        %v2311 = vadd.s32 %v2307, %v2309
        %v2312 = vadd.s32 %v2311, %v2301
        %v2313 = vadd.s32 %v2312, %v2303
        %v2314 = vand.u32 %v2291, 65535
        %v2315 = vshrl.u32 %v2291, 16
        %v2316 = vand.u32 %v2286, 65535
        %v2317 = vshrl.u32 %v2286, 16
        %v2318 = vmul.u32 %v2314, %v2316
        %v2319 = vmul.u32 %v2314, %v2317
        %v2320 = vmul.u32 %v2315, %v2316
        %v2321 = vmul.u32 %v2315, %v2317
        %v2322 = vshll.u32 %v2319, 16
        %v2323 = vshrl.u32 %v2319, 16
        %v2324 = vshll.u32 %v2320, 16
        %v2325 = vshrl.u32 %v2320, 16
        %vm2326 = vc.u32 %v2318, %v2322
        %v2327 = vsel %vm2326, 1, 0
        %v2328 = vadd.s32 %v2318, %v2322
        %v2329 = vadd.s32 %v2321, %v2327
        %vm2330 = vc.u32 %v2328, %v2324
        %v2331 = vsel %vm2330, 1, 0
        %v2332 = vadd.s32 %v2328, %v2324
        %v2333 = vadd.s32 %v2329, %v2331
        %v2334 = vadd.s32 %v2333, %v2323
        %v2335 = vadd.s32 %v2334, %v2325
        %v2336 = vmul.u32 %v2291, %v2282
        %v2337 = vadd.s32 %v2313, %v2332
        %vm2338 = vc.u32 %v2313, %v2332
        %v2339 = vadd.s32 %v2335, 1
        %v2340 = vsel %vm2338, %v2339, %v2335
        %v2341 = vadd.s32 %v2336, %v2340
        %v2342 = vadd.s32 %v2341, 536870912
        %v2343 = vshrl.u32 %v2342, 30
        %v2344 = vshll.u32 %v2343, 30
        %v2345 = vsub.s32 %v2341, %v2344
        %vm2346 = vcmp.lt.s32.totalorder %v2345, 0
        %v2347 = vsub.s32 0, %v2345
        %v2348 = vsel %vm2346, %v2347, %v2345
        %v2349 = vclz %v2348
        %v2350 = vsub.s32 %v2349, 2
        %vm2351 = vcmp.gt.s32.totalorder 0, %v2350
        %v2352 = vsel %vm2351, 0, %v2350
        %v2353 = vsub.s32 32, %v2352
        %v2354 = vshll.u32 %v2345, %v2352
        %v2355 = vshrl.u32 %v2337, %v2353
        %v2356 = vor.u32 %v2354, %v2355
        %v2357 = vsub.s32 4294967266, %v2352
        %v2358 = vadd.s32 %v2357, 127
        %v2359 = vshll.u32 %v2358, 23
        %v2360 = vor.u32 4788187, %v2359
        %v2361 = vand.u32 2147483647, %v2360
        %v2363 = vcvt.s32.f32 %v2356
        %v2364 = vmul.f32 %v2363, %v2361
        %v2365 = vxor.u32 %v2364, 2147483648
        %v2366 = vsel %vm2245, %v2365, %v2364
        %v2367 = vsub.s32 4, %v2343
        %v2368 = vsel %vm2245, %v2367, %v2343
        %v2369 = vsel %vm2244, %v659, %v2366
        %v2370 = vsel %vm2244, 0, %v2368
        %v2371 = vmul.f32 %v2369, %v2369
        %v2372 = vmul.f32 %v2371, -0.001358992
        %v2373 = vadd.f32 %v2372, 0.041655596
        %v2374 = vmul.f32 %v2371, %v2373
        %v2375 = vadd.f32 %v2374, -0.4999988
        %v2376 = vmul.f32 %v2371, %v2375
        %v2377 = vadd.f32 1.0, %v2376
        %v2378 = vmul.f32 %v2369, %v2369
        %v2379 = vmul.f32 %v2378, -0.00019511016
        %v2380 = vadd.f32 %v2379, 0.008332121
        %v2381 = vmul.f32 %v2378, %v2380
        %v2382 = vadd.f32 %v2381, -0.16666654
        %v2383 = vmul.f32 %v2378, %v2382
        %v2384 = vadd.f32 %v2383, 1.0
        %v2385 = vmul.f32 %v2384, %v2369
        %vm2386 = vweird.f32 %v659
        %v2387 = vadd.s32 %v2370, 3
        %v2388 = vand.u32 %v2387, 3
        %vm2389 = vcmp.lt.s32.totalorder %v2388, 2
        %vm2390 = vcmp.eq.s32.totalorder %v2388, 0
        %v2391 = vxor.u32 %v2385, 2147483648
        %v2392 = vsel %vm2390, %v2377, %v2391
        %vm2393 = vcmp.eq.s32.totalorder %v2388, 2
        %v2394 = vxor.u32 %v2377, 2147483648
        %v2395 = vsel %vm2393, %v2394, %v2385
        %v2396 = vsel %vm2389, %v2392, %v2395
        %v2397 = vsel %vm2386, nan, %v2396
        %v2398 = vand.u32 2147483647, %v688
        %vm2399 = vcmp.le.f32.partialorder %v2398, 0.7853982
        %vm2400 = vcmp.lt.s32.totalorder %v688, 0
        %v2401 = vand.u32 %v688, 2139095040
        %v2402 = vshrl.u32 %v2401, 23
        %v2403 = vsub.s32 %v2402, 127
        %v2404 = vand.u32 2147483647, %v688
        %v2405 = vand.u32 %v2404, 8388607
        %v2406 = vor.u32 %v2405, 8388608
        %v2407 = vsub.s32 0, %v2406
        %v2408 = vadd.s32 %v2403, 1
        %vm2409 = vcmp.gt.s32.totalorder %v2408, 0
        %v2410 = vsel %vm2409, %v2408, 0
        %v2411 = vshrl.u32 %v2410, 5
        %v2412 = vand.u32 %v2410, 31
        %v2413 = vsub.s32 32, %v2412
        %v2414 = vshrl.u32 683565275, %v2413
        %v2415 = vshll.u32 683565275, %v2412
        %v2416 = vshrl.u32 2475754826, %v2413
        %v2417 = vor.u32 %v2415, %v2416
        %v2418 = vshll.u32 2475754826, %v2412
        %v2419 = vshrl.u32 2131351028, %v2413
        %v2420 = vor.u32 %v2418, %v2419
        %v2421 = vshll.u32 2131351028, %v2412
        %v2422 = vshrl.u32 2102212464, %v2413
        %v2423 = vor.u32 %v2421, %v2422
        %v2424 = vshll.u32 2102212464, %v2412
        %v2425 = vshrl.u32 920167782, %v2413
        %v2426 = vor.u32 %v2424, %v2425
        %v2427 = vshll.u32 920167782, %v2412
        %v2428 = vshrl.u32 1326507024, %v2413
        %v2429 = vor.u32 %v2427, %v2428
        %vm2430 = vcmp.lt.s32.totalorder %v2411, 1
        %vm2431 = vcmp.lt.s32.totalorder %v2411, 2
        %vm2432 = vcmp.lt.s32.totalorder %v2411, 3
        %vm2433 = vcmp.lt.s32.totalorder %v2411, 4
        %v2434 = vsel %vm2430, %v2414, %v2417
        %v2435 = vsel %vm2433, %v2423, 2102212464
        %v2436 = vsel %vm2432, %v2420, %v2435
        %v2437 = vsel %vm2431, %v2434, %v2436
        %v2438 = vsel %vm2430, %v2417, %v2420
        %v2439 = vsel %vm2433, %v2426, 920167782
        %v2440 = vsel %vm2432, %v2423, %v2439
        %v2441 = vsel %vm2431, %v2438, %v2440
        %v2442 = vsel %vm2430, %v2420, %v2423
        %v2443 = vsel %vm2433, %v2429, 1326507024
        %v2444 = vsel %vm2432, %v2426, %v2443
        %v2445 = vsel %vm2431, %v2442, %v2444
        %v2446 = vshll.u32 %v2406, 8
        %v2447 = vand.u32 %v2446, 65535
        %v2448 = vshrl.u32 %v2446, 16
        %v2449 = vand.u32 %v2445, 65535
        %v2450 = vshrl.u32 %v2445, 16
        %v2451 = vmul.u32 %v2447, %v2449
        %v2452 = vmul.u32 %v2447, %v2450
        %v2453 = vmul.u32 %v2448, %v2449
        %v2454 = vmul.u32 %v2448, %v2450
        %v2455 = vshll.u32 %v2452, 16
        %v2456 = vshrl.u32 %v2452, 16
        %v2457 = vshll.u32 %v2453, 16
        %v2458 = vshrl.u32 %v2453, 16
        %vm2459 = vc.u32 %v2451, %v2455
        %v2460 = vsel %vm2459, 1, 0
        %v2461 = vadd.s32 %v2451, %v2455
        %v2462 = vadd.s32 %v2454, %v2460
        %vm2463 = vc.u32 %v2461, %v2457
        %v2464 = vsel %vm2463, 1, 0
        %v2465 = vadd.s32 %v2461, %v2457
        %v2466 = vadd.s32 %v2462, %v2464
        %v2467 = vadd.s32 %v2466, %v2456
        %v2468 = vadd.s32 %v2467, %v2458
        %v2469 = vand.u32 %v2446, 65535
        %v2470 = vshrl.u32 %v2446, 16
        %v2471 = vand.u32 %v2441, 65535
        %v2472 = vshrl.u32 %v2441, 16
        %v2473 = vmul.u32 %v2469, %v2471
        %v2474 = vmul.u32 %v2469, %v2472
        %v2475 = vmul.u32 %v2470, %v2471
        %v2476 = vmul.u32 %v2470, %v2472
        %v2477 = vshll.u32 %v2474, 16
        %v2478 = vshrl.u32 %v2474, 16
        %v2479 = vshll.u32 %v2475, 16
        %v2480 = vshrl.u32 %v2475, 16
        %vm2481 = vc.u32 %v2473, %v2477
        %v2482 = vsel %vm2481, 1, 0
        %v2483 = vadd.s32 %v2473, %v2477
        %v2484 = vadd.s32 %v2476, %v2482
        %vm2485 = vc.u32 %v2483, %v2479
        %v2486 = vsel %vm2485, 1, 0
        %v2487 = vadd.s32 %v2483, %v2479
        %v2488 = vadd.s32 %v2484, %v2486
        %v2489 = vadd.s32 %v2488, %v2478
        %v2490 = vadd.s32 %v2489, %v2480
        %v2491 = vmul.u32 %v2446, %v2437
        %v2492 = vadd.s32 %v2468, %v2487
        %vm2493 = vc.u32 %v2468, %v2487
        %v2494 = vadd.s32 %v2490, 1
        %v2495 = vsel %vm2493, %v2494, %v2490
        %v2496 = vadd.s32 %v2491, %v2495
        %v2497 = vadd.s32 %v2496, 536870912
        %v2498 = vshrl.u32 %v2497, 30
        %v2499 = vshll.u32 %v2498, 30
        %v2500 = vsub.s32 %v2496, %v2499
        %vm2501 = vcmp.lt.s32.totalorder %v2500, 0
        %v2502 = vsub.s32 0, %v2500
        %v2503 = vsel %vm2501, %v2502, %v2500
        %v2504 = vclz %v2503
        %v2505 = vsub.s32 %v2504, 2
        %vm2506 = vcmp.gt.s32.totalorder 0, %v2505
        %v2507 = vsel %vm2506, 0, %v2505
        %v2508 = vsub.s32 32, %v2507
        %v2509 = vshll.u32 %v2500, %v2507
        %v2510 = vshrl.u32 %v2492, %v2508
        %v2511 = vor.u32 %v2509, %v2510
        %v2512 = vsub.s32 4294967266, %v2507
        %v2513 = vadd.s32 %v2512, 127
        %v2514 = vshll.u32 %v2513, 23
        %v2515 = vor.u32 4788187, %v2514
        %v2516 = vand.u32 2147483647, %v2515
        %v2518 = vcvt.s32.f32 %v2511
        %v2519 = vmul.f32 %v2518, %v2516
        %v2520 = vxor.u32 %v2519, 2147483648
        %v2521 = vsel %vm2400, %v2520, %v2519
        %v2522 = vsub.s32 4, %v2498
        %v2523 = vsel %vm2400, %v2522, %v2498
        %v2524 = vsel %vm2399, %v688, %v2521
        %v2525 = vsel %vm2399, 0, %v2523
        %v2526 = vmul.f32 %v2524, %v2524
        %v2527 = vmul.f32 %v2526, -0.001358992
        %v2528 = vadd.f32 %v2527, 0.041655596
        %v2529 = vmul.f32 %v2526, %v2528
        %v2530 = vadd.f32 %v2529, -0.4999988
        %v2531 = vmul.f32 %v2526, %v2530
        %v2532 = vadd.f32 1.0, %v2531
        %v2533 = vmul.f32 %v2524, %v2524
        %v2534 = vmul.f32 %v2533, -0.00019511016
        %v2535 = vadd.f32 %v2534, 0.008332121
        %v2536 = vmul.f32 %v2533, %v2535
        %v2537 = vadd.f32 %v2536, -0.16666654
        %v2538 = vmul.f32 %v2533, %v2537
        %v2539 = vadd.f32 %v2538, 1.0
        %v2540 = vmul.f32 %v2539, %v2524
        %vm2541 = vweird.f32 %v688
        %v2542 = vadd.s32 %v2525, 3
        %v2543 = vand.u32 %v2542, 3
        %vm2544 = vcmp.lt.s32.totalorder %v2543, 2
        %vm2545 = vcmp.eq.s32.totalorder %v2543, 0
        %v2546 = vxor.u32 %v2540, 2147483648
        %v2547 = vsel %vm2545, %v2532, %v2546
        %vm2548 = vcmp.eq.s32.totalorder %v2543, 2
        %v2549 = vxor.u32 %v2532, 2147483648
        %v2550 = vsel %vm2548, %v2549, %v2540
        %v2551 = vsel %vm2544, %v2547, %v2550
        %v2552 = vsel %vm2541, nan, %v2551
        %v2553 = vand.u32 2147483647, %v604
        %vm2554 = vcmp.le.f32.partialorder %v2553, 0.7853982
        %vm2555 = vcmp.lt.s32.totalorder %v604, 0
        %v2556 = vand.u32 %v604, 2139095040
        %v2557 = vshrl.u32 %v2556, 23
        %v2558 = vsub.s32 %v2557, 127
        %v2559 = vand.u32 2147483647, %v604
        %v2560 = vand.u32 %v2559, 8388607
        %v2561 = vor.u32 %v2560, 8388608
        %v2562 = vsub.s32 0, %v2561
        %v2563 = vadd.s32 %v2558, 1
        %vm2564 = vcmp.gt.s32.totalorder %v2563, 0
        %v2565 = vsel %vm2564, %v2563, 0
        %v2566 = vshrl.u32 %v2565, 5
        %v2567 = vand.u32 %v2565, 31
        %v2568 = vsub.s32 32, %v2567
        %v2569 = vshrl.u32 683565275, %v2568
        %v2570 = vshll.u32 683565275, %v2567
        %v2571 = vshrl.u32 2475754826, %v2568
        %v2572 = vor.u32 %v2570, %v2571
        %v2573 = vshll.u32 2475754826, %v2567
        %v2574 = vshrl.u32 2131351028, %v2568
        %v2575 = vor.u32 %v2573, %v2574
        %v2576 = vshll.u32 2131351028, %v2567
        %v2577 = vshrl.u32 2102212464, %v2568
        %v2578 = vor.u32 %v2576, %v2577
        %v2579 = vshll.u32 2102212464, %v2567
        %v2580 = vshrl.u32 920167782, %v2568
        %v2581 = vor.u32 %v2579, %v2580
        %v2582 = vshll.u32 920167782, %v2567
        %v2583 = vshrl.u32 1326507024, %v2568
        %v2584 = vor.u32 %v2582, %v2583
        %vm2585 = vcmp.lt.s32.totalorder %v2566, 1
        %vm2586 = vcmp.lt.s32.totalorder %v2566, 2
        %vm2587 = vcmp.lt.s32.totalorder %v2566, 3
        %vm2588 = vcmp.lt.s32.totalorder %v2566, 4
        %v2589 = vsel %vm2585, %v2569, %v2572
        %v2590 = vsel %vm2588, %v2578, 2102212464
        %v2591 = vsel %vm2587, %v2575, %v2590
        %v2592 = vsel %vm2586, %v2589, %v2591
        %v2593 = vsel %vm2585, %v2572, %v2575
        %v2594 = vsel %vm2588, %v2581, 920167782
        %v2595 = vsel %vm2587, %v2578, %v2594
        %v2596 = vsel %vm2586, %v2593, %v2595
        %v2597 = vsel %vm2585, %v2575, %v2578
        %v2598 = vsel %vm2588, %v2584, 1326507024
        %v2599 = vsel %vm2587, %v2581, %v2598
        %v2600 = vsel %vm2586, %v2597, %v2599
        %v2601 = vshll.u32 %v2561, 8
        %v2602 = vand.u32 %v2601, 65535
        %v2603 = vshrl.u32 %v2601, 16
        %v2604 = vand.u32 %v2600, 65535
        %v2605 = vshrl.u32 %v2600, 16
        %v2606 = vmul.u32 %v2602, %v2604
        %v2607 = vmul.u32 %v2602, %v2605
        %v2608 = vmul.u32 %v2603, %v2604
        %v2609 = vmul.u32 %v2603, %v2605
        %v2610 = vshll.u32 %v2607, 16
        %v2611 = vshrl.u32 %v2607, 16
        %v2612 = vshll.u32 %v2608, 16
        %v2613 = vshrl.u32 %v2608, 16
        %vm2614 = vc.u32 %v2606, %v2610
        %v2615 = vsel %vm2614, 1, 0
        %v2616 = vadd.s32 %v2606, %v2610
        %v2617 = vadd.s32 %v2609, %v2615
        %vm2618 = vc.u32 %v2616, %v2612
        %v2619 = vsel %vm2618, 1, 0
        %v2620 = vadd.s32 %v2616, %v2612
        %v2621 = vadd.s32 %v2617, %v2619
        %v2622 = vadd.s32 %v2621, %v2611
        %v2623 = vadd.s32 %v2622, %v2613
        %v2624 = vand.u32 %v2601, 65535
        %v2625 = vshrl.u32 %v2601, 16
        %v2626 = vand.u32 %v2596, 65535
        %v2627 = vshrl.u32 %v2596, 16
        %v2628 = vmul.u32 %v2624, %v2626
        %v2629 = vmul.u32 %v2624, %v2627
        %v2630 = vmul.u32 %v2625, %v2626
        %v2631 = vmul.u32 %v2625, %v2627
        %v2632 = vshll.u32 %v2629, 16
        %v2633 = vshrl.u32 %v2629, 16
        %v2634 = vshll.u32 %v2630, 16
        %v2635 = vshrl.u32 %v2630, 16
        %vm2636 = vc.u32 %v2628, %v2632
        %v2637 = vsel %vm2636, 1, 0
        %v2638 = vadd.s32 %v2628, %v2632
        %v2639 = vadd.s32 %v2631, %v2637
        %vm2640 = vc.u32 %v2638, %v2634
        %v2641 = vsel %vm2640, 1, 0
        %v2642 = vadd.s32 %v2638, %v2634
        %v2643 = vadd.s32 %v2639, %v2641
        %v2644 = vadd.s32 %v2643, %v2633
        %v2645 = vadd.s32 %v2644, %v2635
        %v2646 = vmul.u32 %v2601, %v2592
        %v2647 = vadd.s32 %v2623, %v2642
        %vm2648 = vc.u32 %v2623, %v2642
        %v2649 = vadd.s32 %v2645, 1
        %v2650 = vsel %vm2648, %v2649, %v2645
        %v2651 = vadd.s32 %v2646, %v2650
        %v2652 = vadd.s32 %v2651, 536870912
        %v2653 = vshrl.u32 %v2652, 30
        %v2654 = vshll.u32 %v2653, 30
        %v2655 = vsub.s32 %v2651, %v2654
        %vm2656 = vcmp.lt.s32.totalorder %v2655, 0
        %v2657 = vsub.s32 0, %v2655
        %v2658 = vsel %vm2656, %v2657, %v2655
        %v2659 = vclz %v2658
        %v2660 = vsub.s32 %v2659, 2
        %vm2661 = vcmp.gt.s32.totalorder 0, %v2660
        %v2662 = vsel %vm2661, 0, %v2660
        %v2663 = vsub.s32 32, %v2662
        %v2664 = vshll.u32 %v2655, %v2662
        %v2665 = vshrl.u32 %v2647, %v2663
        %v2666 = vor.u32 %v2664, %v2665
        %v2667 = vsub.s32 4294967266, %v2662
        %v2668 = vadd.s32 %v2667, 127
        %v2669 = vshll.u32 %v2668, 23
        %v2670 = vor.u32 4788187, %v2669
        %v2671 = vand.u32 2147483647, %v2670
        %v2673 = vcvt.s32.f32 %v2666
        %v2674 = vmul.f32 %v2673, %v2671
        %v2675 = vxor.u32 %v2674, 2147483648
        %v2676 = vsel %vm2555, %v2675, %v2674
        %v2677 = vsub.s32 4, %v2653
        %v2678 = vsel %vm2555, %v2677, %v2653
        %v2679 = vsel %vm2554, %v604, %v2676
        %v2680 = vsel %vm2554, 0, %v2678
        %v2681 = vmul.f32 %v2679, %v2679
        %v2682 = vmul.f32 %v2681, -0.001358992
        %v2683 = vadd.f32 %v2682, 0.041655596
        %v2684 = vmul.f32 %v2681, %v2683
        %v2685 = vadd.f32 %v2684, -0.4999988
        %v2686 = vmul.f32 %v2681, %v2685
        %v2687 = vadd.f32 1.0, %v2686
        %v2688 = vmul.f32 %v2679, %v2679
        %v2689 = vmul.f32 %v2688, -0.00019511016
        %v2690 = vadd.f32 %v2689, 0.008332121
        %v2691 = vmul.f32 %v2688, %v2690
        %v2692 = vadd.f32 %v2691, -0.16666654
        %v2693 = vmul.f32 %v2688, %v2692
        %v2694 = vadd.f32 %v2693, 1.0
        %v2695 = vmul.f32 %v2694, %v2679
        %vm2696 = vweird.f32 %v604
        %v2697 = vadd.s32 %v2680, 3
        %v2698 = vand.u32 %v2697, 3
        %vm2699 = vcmp.lt.s32.totalorder %v2698, 2
        %vm2700 = vcmp.eq.s32.totalorder %v2698, 0
        %v2701 = vxor.u32 %v2695, 2147483648
        %v2702 = vsel %vm2700, %v2687, %v2701
        %vm2703 = vcmp.eq.s32.totalorder %v2698, 2
        %v2704 = vxor.u32 %v2687, 2147483648
        %v2705 = vsel %vm2703, %v2704, %v2695
        %v2706 = vsel %vm2699, %v2702, %v2705
        %v2707 = vsel %vm2696, nan, %v2706
        %v2708 = vand.u32 2147483647, %v633
        %vm2709 = vcmp.le.f32.partialorder %v2708, 0.7853982
        %vm2710 = vcmp.lt.s32.totalorder %v633, 0
        %v2711 = vand.u32 %v633, 2139095040
        %v2712 = vshrl.u32 %v2711, 23
        %v2713 = vsub.s32 %v2712, 127
        %v2714 = vand.u32 2147483647, %v633
        %v2715 = vand.u32 %v2714, 8388607
        %v2716 = vor.u32 %v2715, 8388608
        %v2717 = vsub.s32 0, %v2716
        %v2718 = vadd.s32 %v2713, 1
        %vm2719 = vcmp.gt.s32.totalorder %v2718, 0
        %v2720 = vsel %vm2719, %v2718, 0
        %v2721 = vshrl.u32 %v2720, 5
        %v2722 = vand.u32 %v2720, 31
        %v2723 = vsub.s32 32, %v2722
        %v2724 = vshrl.u32 683565275, %v2723
        %v2725 = vshll.u32 683565275, %v2722
        %v2726 = vshrl.u32 2475754826, %v2723
        %v2727 = vor.u32 %v2725, %v2726
        %v2728 = vshll.u32 2475754826, %v2722
        %v2729 = vshrl.u32 2131351028, %v2723
        %v2730 = vor.u32 %v2728, %v2729
        %v2731 = vshll.u32 2131351028, %v2722
        %v2732 = vshrl.u32 2102212464, %v2723
        %v2733 = vor.u32 %v2731, %v2732
        %v2734 = vshll.u32 2102212464, %v2722
        %v2735 = vshrl.u32 920167782, %v2723
        %v2736 = vor.u32 %v2734, %v2735
        %v2737 = vshll.u32 920167782, %v2722
        %v2738 = vshrl.u32 1326507024, %v2723
        %v2739 = vor.u32 %v2737, %v2738
        %vm2740 = vcmp.lt.s32.totalorder %v2721, 1
        %vm2741 = vcmp.lt.s32.totalorder %v2721, 2
        %vm2742 = vcmp.lt.s32.totalorder %v2721, 3
        %vm2743 = vcmp.lt.s32.totalorder %v2721, 4
        %v2744 = vsel %vm2740, %v2724, %v2727
        %v2745 = vsel %vm2743, %v2733, 2102212464
        %v2746 = vsel %vm2742, %v2730, %v2745
        %v2747 = vsel %vm2741, %v2744, %v2746
        %v2748 = vsel %vm2740, %v2727, %v2730
        %v2749 = vsel %vm2743, %v2736, 920167782
        %v2750 = vsel %vm2742, %v2733, %v2749
        %v2751 = vsel %vm2741, %v2748, %v2750
        %v2752 = vsel %vm2740, %v2730, %v2733
        %v2753 = vsel %vm2743, %v2739, 1326507024
        %v2754 = vsel %vm2742, %v2736, %v2753
        %v2755 = vsel %vm2741, %v2752, %v2754
        %v2756 = vshll.u32 %v2716, 8
        %v2757 = vand.u32 %v2756, 65535
        %v2758 = vshrl.u32 %v2756, 16
        %v2759 = vand.u32 %v2755, 65535
        %v2760 = vshrl.u32 %v2755, 16
        %v2761 = vmul.u32 %v2757, %v2759
        %v2762 = vmul.u32 %v2757, %v2760
        %v2763 = vmul.u32 %v2758, %v2759
        %v2764 = vmul.u32 %v2758, %v2760
        %v2765 = vshll.u32 %v2762, 16
        %v2766 = vshrl.u32 %v2762, 16
        %v2767 = vshll.u32 %v2763, 16
        %v2768 = vshrl.u32 %v2763, 16
        %vm2769 = vc.u32 %v2761, %v2765
        %v2770 = vsel %vm2769, 1, 0
        %v2771 = vadd.s32 %v2761, %v2765
        %v2772 = vadd.s32 %v2764, %v2770
        %vm2773 = vc.u32 %v2771, %v2767
        %v2774 = vsel %vm2773, 1, 0
        %v2775 = vadd.s32 %v2771, %v2767
        %v2776 = vadd.s32 %v2772, %v2774
        %v2777 = vadd.s32 %v2776, %v2766
        %v2778 = vadd.s32 %v2777, %v2768
        %v2779 = vand.u32 %v2756, 65535
        %v2780 = vshrl.u32 %v2756, 16
        %v2781 = vand.u32 %v2751, 65535
        %v2782 = vshrl.u32 %v2751, 16
        %v2783 = vmul.u32 %v2779, %v2781
        %v2784 = vmul.u32 %v2779, %v2782
        %v2785 = vmul.u32 %v2780, %v2781
        %v2786 = vmul.u32 %v2780, %v2782
        %v2787 = vshll.u32 %v2784, 16
        %v2788 = vshrl.u32 %v2784, 16
        %v2789 = vshll.u32 %v2785, 16
        %v2790 = vshrl.u32 %v2785, 16
        %vm2791 = vc.u32 %v2783, %v2787
        %v2792 = vsel %vm2791, 1, 0
        %v2793 = vadd.s32 %v2783, %v2787
        %v2794 = vadd.s32 %v2786, %v2792
        %vm2795 = vc.u32 %v2793, %v2789
        %v2796 = vsel %vm2795, 1, 0
        %v2797 = vadd.s32 %v2793, %v2789
        %v2798 = vadd.s32 %v2794, %v2796
        %v2799 = vadd.s32 %v2798, %v2788
        %v2800 = vadd.s32 %v2799, %v2790
        %v2801 = vmul.u32 %v2756, %v2747
        %v2802 = vadd.s32 %v2778, %v2797
        %vm2803 = vc.u32 %v2778, %v2797
        %v2804 = vadd.s32 %v2800, 1
        %v2805 = vsel %vm2803, %v2804, %v2800
        %v2806 = vadd.s32 %v2801, %v2805
        %v2807 = vadd.s32 %v2806, 536870912
        %v2808 = vshrl.u32 %v2807, 30
        %v2809 = vshll.u32 %v2808, 30
        %v2810 = vsub.s32 %v2806, %v2809
        %vm2811 = vcmp.lt.s32.totalorder %v2810, 0
        %v2812 = vsub.s32 0, %v2810
        %v2813 = vsel %vm2811, %v2812, %v2810
        %v2814 = vclz %v2813
        %v2815 = vsub.s32 %v2814, 2
        %vm2816 = vcmp.gt.s32.totalorder 0, %v2815
        %v2817 = vsel %vm2816, 0, %v2815
        %v2818 = vsub.s32 32, %v2817
        %v2819 = vshll.u32 %v2810, %v2817
        %v2820 = vshrl.u32 %v2802, %v2818
        %v2821 = vor.u32 %v2819, %v2820
        %v2822 = vsub.s32 4294967266, %v2817
        %v2823 = vadd.s32 %v2822, 127
        %v2824 = vshll.u32 %v2823, 23
        %v2825 = vor.u32 4788187, %v2824
        %v2826 = vand.u32 2147483647, %v2825
        %v2828 = vcvt.s32.f32 %v2821
        %v2829 = vmul.f32 %v2828, %v2826
        %v2830 = vxor.u32 %v2829, 2147483648
        %v2831 = vsel %vm2710, %v2830, %v2829
        %v2832 = vsub.s32 4, %v2808
        %v2833 = vsel %vm2710, %v2832, %v2808
        %v2834 = vsel %vm2709, %v633, %v2831
        %v2835 = vsel %vm2709, 0, %v2833
        %v2836 = vmul.f32 %v2834, %v2834
        %v2837 = vmul.f32 %v2836, -0.001358992
        %v2838 = vadd.f32 %v2837, 0.041655596
        %v2839 = vmul.f32 %v2836, %v2838
        %v2840 = vadd.f32 %v2839, -0.4999988
        %v2841 = vmul.f32 %v2836, %v2840
        %v2842 = vadd.f32 1.0, %v2841
        %v2843 = vmul.f32 %v2834, %v2834
        %v2844 = vmul.f32 %v2843, -0.00019511016
        %v2845 = vadd.f32 %v2844, 0.008332121
        %v2846 = vmul.f32 %v2843, %v2845
        %v2847 = vadd.f32 %v2846, -0.16666654
        %v2848 = vmul.f32 %v2843, %v2847
        %v2849 = vadd.f32 %v2848, 1.0
        %v2850 = vmul.f32 %v2849, %v2834
        %vm2851 = vweird.f32 %v633
        %v2852 = vadd.s32 %v2835, 3
        %v2853 = vand.u32 %v2852, 3
        %vm2854 = vcmp.lt.s32.totalorder %v2853, 2
        %vm2855 = vcmp.eq.s32.totalorder %v2853, 0
        %v2856 = vxor.u32 %v2850, 2147483648
        %v2857 = vsel %vm2855, %v2842, %v2856
        %vm2858 = vcmp.eq.s32.totalorder %v2853, 2
        %v2859 = vxor.u32 %v2842, 2147483648
        %v2860 = vsel %vm2858, %v2859, %v2850
        %v2861 = vsel %vm2854, %v2857, %v2860
        %v2862 = vsel %vm2851, nan, %v2861
        %v2863 = vand.u32 2147483647, %v662
        %vm2864 = vcmp.le.f32.partialorder %v2863, 0.7853982
        %vm2865 = vcmp.lt.s32.totalorder %v662, 0
        %v2866 = vand.u32 %v662, 2139095040
        %v2867 = vshrl.u32 %v2866, 23
        %v2868 = vsub.s32 %v2867, 127
        %v2869 = vand.u32 2147483647, %v662
        %v2870 = vand.u32 %v2869, 8388607
        %v2871 = vor.u32 %v2870, 8388608
        %v2872 = vsub.s32 0, %v2871
        %v2873 = vadd.s32 %v2868, 1
        %vm2874 = vcmp.gt.s32.totalorder %v2873, 0
        %v2875 = vsel %vm2874, %v2873, 0
        %v2876 = vshrl.u32 %v2875, 5
        %v2877 = vand.u32 %v2875, 31
        %v2878 = vsub.s32 32, %v2877
        %v2879 = vshrl.u32 683565275, %v2878
        %v2880 = vshll.u32 683565275, %v2877
        %v2881 = vshrl.u32 2475754826, %v2878
        %v2882 = vor.u32 %v2880, %v2881
        %v2883 = vshll.u32 2475754826, %v2877
        %v2884 = vshrl.u32 2131351028, %v2878
        %v2885 = vor.u32 %v2883, %v2884
        %v2886 = vshll.u32 2131351028, %v2877
        %v2887 = vshrl.u32 2102212464, %v2878
        %v2888 = vor.u32 %v2886, %v2887
        %v2889 = vshll.u32 2102212464, %v2877
        %v2890 = vshrl.u32 920167782, %v2878
        %v2891 = vor.u32 %v2889, %v2890
        %v2892 = vshll.u32 920167782, %v2877
        %v2893 = vshrl.u32 1326507024, %v2878
        %v2894 = vor.u32 %v2892, %v2893
        %vm2895 = vcmp.lt.s32.totalorder %v2876, 1
        %vm2896 = vcmp.lt.s32.totalorder %v2876, 2
        %vm2897 = vcmp.lt.s32.totalorder %v2876, 3
        %vm2898 = vcmp.lt.s32.totalorder %v2876, 4
        %v2899 = vsel %vm2895, %v2879, %v2882
        %v2900 = vsel %vm2898, %v2888, 2102212464
        %v2901 = vsel %vm2897, %v2885, %v2900
        %v2902 = vsel %vm2896, %v2899, %v2901
        %v2903 = vsel %vm2895, %v2882, %v2885
        %v2904 = vsel %vm2898, %v2891, 920167782
        %v2905 = vsel %vm2897, %v2888, %v2904
        %v2906 = vsel %vm2896, %v2903, %v2905
        %v2907 = vsel %vm2895, %v2885, %v2888
        %v2908 = vsel %vm2898, %v2894, 1326507024
        %v2909 = vsel %vm2897, %v2891, %v2908
        %v2910 = vsel %vm2896, %v2907, %v2909
        %v2911 = vshll.u32 %v2871, 8
        %v2912 = vand.u32 %v2911, 65535
        %v2913 = vshrl.u32 %v2911, 16
        %v2914 = vand.u32 %v2910, 65535
        %v2915 = vshrl.u32 %v2910, 16
        %v2916 = vmul.u32 %v2912, %v2914
        %v2917 = vmul.u32 %v2912, %v2915
        %v2918 = vmul.u32 %v2913, %v2914
        %v2919 = vmul.u32 %v2913, %v2915
        %v2920 = vshll.u32 %v2917, 16
        %v2921 = vshrl.u32 %v2917, 16
        %v2922 = vshll.u32 %v2918, 16
        %v2923 = vshrl.u32 %v2918, 16
        %vm2924 = vc.u32 %v2916, %v2920
        %v2925 = vsel %vm2924, 1, 0
        %v2926 = vadd.s32 %v2916, %v2920
        %v2927 = vadd.s32 %v2919, %v2925
        %vm2928 = vc.u32 %v2926, %v2922
        %v2929 = vsel %vm2928, 1, 0
        %v2930 = vadd.s32 %v2926, %v2922
        %v2931 = vadd.s32 %v2927, %v2929
        %v2932 = vadd.s32 %v2931, %v2921
        %v2933 = vadd.s32 %v2932, %v2923
        %v2934 = vand.u32 %v2911, 65535
        %v2935 = vshrl.u32 %v2911, 16
        %v2936 = vand.u32 %v2906, 65535
        %v2937 = vshrl.u32 %v2906, 16
        %v2938 = vmul.u32 %v2934, %v2936
        %v2939 = vmul.u32 %v2934, %v2937
        %v2940 = vmul.u32 %v2935, %v2936
        %v2941 = vmul.u32 %v2935, %v2937
        %v2942 = vshll.u32 %v2939, 16
        %v2943 = vshrl.u32 %v2939, 16
        %v2944 = vshll.u32 %v2940, 16
        %v2945 = vshrl.u32 %v2940, 16
        %vm2946 = vc.u32 %v2938, %v2942
        %v2947 = vsel %vm2946, 1, 0
        %v2948 = vadd.s32 %v2938, %v2942
        %v2949 = vadd.s32 %v2941, %v2947
        %vm2950 = vc.u32 %v2948, %v2944
        %v2951 = vsel %vm2950, 1, 0
        %v2952 = vadd.s32 %v2948, %v2944
        %v2953 = vadd.s32 %v2949, %v2951
        %v2954 = vadd.s32 %v2953, %v2943
        %v2955 = vadd.s32 %v2954, %v2945
        %v2956 = vmul.u32 %v2911, %v2902
        %v2957 = vadd.s32 %v2933, %v2952
        %vm2958 = vc.u32 %v2933, %v2952
        %v2959 = vadd.s32 %v2955, 1
        %v2960 = vsel %vm2958, %v2959, %v2955
        %v2961 = vadd.s32 %v2956, %v2960
        %v2962 = vadd.s32 %v2961, 536870912
        %v2963 = vshrl.u32 %v2962, 30
        %v2964 = vshll.u32 %v2963, 30
        %v2965 = vsub.s32 %v2961, %v2964
        %vm2966 = vcmp.lt.s32.totalorder %v2965, 0
        %v2967 = vsub.s32 0, %v2965
        %v2968 = vsel %vm2966, %v2967, %v2965
        %v2969 = vclz %v2968
        %v2970 = vsub.s32 %v2969, 2
        %vm2971 = vcmp.gt.s32.totalorder 0, %v2970
        %v2972 = vsel %vm2971, 0, %v2970
        %v2973 = vsub.s32 32, %v2972
        %v2974 = vshll.u32 %v2965, %v2972
        %v2975 = vshrl.u32 %v2957, %v2973
        %v2976 = vor.u32 %v2974, %v2975
        %v2977 = vsub.s32 4294967266, %v2972
        %v2978 = vadd.s32 %v2977, 127
        %v2979 = vshll.u32 %v2978, 23
        %v2980 = vor.u32 4788187, %v2979
        %v2981 = vand.u32 2147483647, %v2980
        %v2983 = vcvt.s32.f32 %v2976
        %v2984 = vmul.f32 %v2983, %v2981
        %v2985 = vxor.u32 %v2984, 2147483648
        %v2986 = vsel %vm2865, %v2985, %v2984
        %v2987 = vsub.s32 4, %v2963
        %v2988 = vsel %vm2865, %v2987, %v2963
        %v2989 = vsel %vm2864, %v662, %v2986
        %v2990 = vsel %vm2864, 0, %v2988
        %v2991 = vmul.f32 %v2989, %v2989
        %v2992 = vmul.f32 %v2991, -0.001358992
        %v2993 = vadd.f32 %v2992, 0.041655596
        %v2994 = vmul.f32 %v2991, %v2993
        %v2995 = vadd.f32 %v2994, -0.4999988
        %v2996 = vmul.f32 %v2991, %v2995
        %v2997 = vadd.f32 1.0, %v2996
        %v2998 = vmul.f32 %v2989, %v2989
        %v2999 = vmul.f32 %v2998, -0.00019511016
        %v3000 = vadd.f32 %v2999, 0.008332121
        %v3001 = vmul.f32 %v2998, %v3000
        %v3002 = vadd.f32 %v3001, -0.16666654
        %v3003 = vmul.f32 %v2998, %v3002
        %v3004 = vadd.f32 %v3003, 1.0
        %v3005 = vmul.f32 %v3004, %v2989
        %vm3006 = vweird.f32 %v662
        %v3007 = vadd.s32 %v2990, 3
        %v3008 = vand.u32 %v3007, 3
        %vm3009 = vcmp.lt.s32.totalorder %v3008, 2
        %vm3010 = vcmp.eq.s32.totalorder %v3008, 0
        %v3011 = vxor.u32 %v3005, 2147483648
        %v3012 = vsel %vm3010, %v2997, %v3011
        %vm3013 = vcmp.eq.s32.totalorder %v3008, 2
        %v3014 = vxor.u32 %v2997, 2147483648
        %v3015 = vsel %vm3013, %v3014, %v3005
        %v3016 = vsel %vm3009, %v3012, %v3015
        %v3017 = vsel %vm3006, nan, %v3016
        %v3018 = vand.u32 2147483647, %v691
        %vm3019 = vcmp.le.f32.partialorder %v3018, 0.7853982
        %vm3020 = vcmp.lt.s32.totalorder %v691, 0
        %v3021 = vand.u32 %v691, 2139095040
        %v3022 = vshrl.u32 %v3021, 23
        %v3023 = vsub.s32 %v3022, 127
        %v3024 = vand.u32 2147483647, %v691
        %v3025 = vand.u32 %v3024, 8388607
        %v3026 = vor.u32 %v3025, 8388608
        %v3027 = vsub.s32 0, %v3026
        %v3028 = vadd.s32 %v3023, 1
        %vm3029 = vcmp.gt.s32.totalorder %v3028, 0
        %v3030 = vsel %vm3029, %v3028, 0
        %v3031 = vshrl.u32 %v3030, 5
        %v3032 = vand.u32 %v3030, 31
        %v3033 = vsub.s32 32, %v3032
        %v3034 = vshrl.u32 683565275, %v3033
        %v3035 = vshll.u32 683565275, %v3032
        %v3036 = vshrl.u32 2475754826, %v3033
        %v3037 = vor.u32 %v3035, %v3036
        %v3038 = vshll.u32 2475754826, %v3032
        %v3039 = vshrl.u32 2131351028, %v3033
        %v3040 = vor.u32 %v3038, %v3039
        %v3041 = vshll.u32 2131351028, %v3032
        %v3042 = vshrl.u32 2102212464, %v3033
        %v3043 = vor.u32 %v3041, %v3042
        %v3044 = vshll.u32 2102212464, %v3032
        %v3045 = vshrl.u32 920167782, %v3033
        %v3046 = vor.u32 %v3044, %v3045
        %v3047 = vshll.u32 920167782, %v3032
        %v3048 = vshrl.u32 1326507024, %v3033
        %v3049 = vor.u32 %v3047, %v3048
        %vm3050 = vcmp.lt.s32.totalorder %v3031, 1
        %vm3051 = vcmp.lt.s32.totalorder %v3031, 2
        %vm3052 = vcmp.lt.s32.totalorder %v3031, 3
        %vm3053 = vcmp.lt.s32.totalorder %v3031, 4
        %v3054 = vsel %vm3050, %v3034, %v3037
        %v3055 = vsel %vm3053, %v3043, 2102212464
        %v3056 = vsel %vm3052, %v3040, %v3055
        %v3057 = vsel %vm3051, %v3054, %v3056
        %v3058 = vsel %vm3050, %v3037, %v3040
        %v3059 = vsel %vm3053, %v3046, 920167782
        %v3060 = vsel %vm3052, %v3043, %v3059
        %v3061 = vsel %vm3051, %v3058, %v3060
        %v3062 = vsel %vm3050, %v3040, %v3043
        %v3063 = vsel %vm3053, %v3049, 1326507024
        %v3064 = vsel %vm3052, %v3046, %v3063
        %v3065 = vsel %vm3051, %v3062, %v3064
        %v3066 = vshll.u32 %v3026, 8
        %v3067 = vand.u32 %v3066, 65535
        %v3068 = vshrl.u32 %v3066, 16
        %v3069 = vand.u32 %v3065, 65535
        %v3070 = vshrl.u32 %v3065, 16
        %v3071 = vmul.u32 %v3067, %v3069
        %v3072 = vmul.u32 %v3067, %v3070
        %v3073 = vmul.u32 %v3068, %v3069
        %v3074 = vmul.u32 %v3068, %v3070
        %v3075 = vshll.u32 %v3072, 16
        %v3076 = vshrl.u32 %v3072, 16
        %v3077 = vshll.u32 %v3073, 16
        %v3078 = vshrl.u32 %v3073, 16
        %vm3079 = vc.u32 %v3071, %v3075
        %v3080 = vsel %vm3079, 1, 0
        %v3081 = vadd.s32 %v3071, %v3075
        %v3082 = vadd.s32 %v3074, %v3080
        %vm3083 = vc.u32 %v3081, %v3077
        %v3084 = vsel %vm3083, 1, 0
        %v3085 = vadd.s32 %v3081, %v3077
        %v3086 = vadd.s32 %v3082, %v3084
        %v3087 = vadd.s32 %v3086, %v3076
        %v3088 = vadd.s32 %v3087, %v3078
        %v3089 = vand.u32 %v3066, 65535
        %v3090 = vshrl.u32 %v3066, 16
        %v3091 = vand.u32 %v3061, 65535
        %v3092 = vshrl.u32 %v3061, 16
        %v3093 = vmul.u32 %v3089, %v3091
        %v3094 = vmul.u32 %v3089, %v3092
        %v3095 = vmul.u32 %v3090, %v3091
        %v3096 = vmul.u32 %v3090, %v3092
        %v3097 = vshll.u32 %v3094, 16
        %v3098 = vshrl.u32 %v3094, 16
        %v3099 = vshll.u32 %v3095, 16
        %v3100 = vshrl.u32 %v3095, 16
        %vm3101 = vc.u32 %v3093, %v3097
        %v3102 = vsel %vm3101, 1, 0
        %v3103 = vadd.s32 %v3093, %v3097
        %v3104 = vadd.s32 %v3096, %v3102
        %vm3105 = vc.u32 %v3103, %v3099
        %v3106 = vsel %vm3105, 1, 0
        %v3107 = vadd.s32 %v3103, %v3099
        %v3108 = vadd.s32 %v3104, %v3106
        %v3109 = vadd.s32 %v3108, %v3098
        %v3110 = vadd.s32 %v3109, %v3100
        %v3111 = vmul.u32 %v3066, %v3057
        %v3112 = vadd.s32 %v3088, %v3107
        %vm3113 = vc.u32 %v3088, %v3107
        %v3114 = vadd.s32 %v3110, 1
        %v3115 = vsel %vm3113, %v3114, %v3110
        %v3116 = vadd.s32 %v3111, %v3115
        %v3117 = vadd.s32 %v3116, 536870912
        %v3118 = vshrl.u32 %v3117, 30
        %v3119 = vshll.u32 %v3118, 30
        %v3120 = vsub.s32 %v3116, %v3119
        %vm3121 = vcmp.lt.s32.totalorder %v3120, 0
        %v3122 = vsub.s32 0, %v3120
        %v3123 = vsel %vm3121, %v3122, %v3120
        %v3124 = vclz %v3123
        %v3125 = vsub.s32 %v3124, 2
        %vm3126 = vcmp.gt.s32.totalorder 0, %v3125
        %v3127 = vsel %vm3126, 0, %v3125
        %v3128 = vsub.s32 32, %v3127
        %v3129 = vshll.u32 %v3120, %v3127
        %v3130 = vshrl.u32 %v3112, %v3128
        %v3131 = vor.u32 %v3129, %v3130
        %v3132 = vsub.s32 4294967266, %v3127
        %v3133 = vadd.s32 %v3132, 127
        %v3134 = vshll.u32 %v3133, 23
        %v3135 = vor.u32 4788187, %v3134
        %v3136 = vand.u32 2147483647, %v3135
        %v3138 = vcvt.s32.f32 %v3131
        %v3139 = vmul.f32 %v3138, %v3136
        %v3140 = vxor.u32 %v3139, 2147483648
        %v3141 = vsel %vm3020, %v3140, %v3139
        %v3142 = vsub.s32 4, %v3118
        %v3143 = vsel %vm3020, %v3142, %v3118
        %v3144 = vsel %vm3019, %v691, %v3141
        %v3145 = vsel %vm3019, 0, %v3143
        %v3146 = vmul.f32 %v3144, %v3144
        %v3147 = vmul.f32 %v3146, -0.001358992
        %v3148 = vadd.f32 %v3147, 0.041655596
        %v3149 = vmul.f32 %v3146, %v3148
        %v3150 = vadd.f32 %v3149, -0.4999988
        %v3151 = vmul.f32 %v3146, %v3150
        %v3152 = vadd.f32 1.0, %v3151
        %v3153 = vmul.f32 %v3144, %v3144
        %v3154 = vmul.f32 %v3153, -0.00019511016
        %v3155 = vadd.f32 %v3154, 0.008332121
        %v3156 = vmul.f32 %v3153, %v3155
        %v3157 = vadd.f32 %v3156, -0.16666654
        %v3158 = vmul.f32 %v3153, %v3157
        %v3159 = vadd.f32 %v3158, 1.0
        %v3160 = vmul.f32 %v3159, %v3144
        %vm3161 = vweird.f32 %v691
        %v3162 = vadd.s32 %v3145, 3
        %v3163 = vand.u32 %v3162, 3
        %vm3164 = vcmp.lt.s32.totalorder %v3163, 2
        %vm3165 = vcmp.eq.s32.totalorder %v3163, 0
        %v3166 = vxor.u32 %v3160, 2147483648
        %v3167 = vsel %vm3165, %v3152, %v3166
        %vm3168 = vcmp.eq.s32.totalorder %v3163, 2
        %v3169 = vxor.u32 %v3152, 2147483648
        %v3170 = vsel %vm3168, %v3169, %v3160
        %v3171 = vsel %vm3164, %v3167, %v3170
        %v3172 = vsel %vm3161, nan, %v3171
        %v3173 = vld [vmem:[%s3] sm:$0xff]
        %v3174 = vld [vmem:[%s3 + $0x8] sm:$0xff]
        %v3175 = vld [vmem:[%s3 + $0x10] sm:$0xff]
        %v3176 = vld [vmem:[%s3 + $0x18] sm:$0xff]
        %v3177 = vld [vmem:[%s4] sm:$0xff]
        %v3178 = vld [vmem:[%s4 + $0x8] sm:$0xff]
        %v3179 = vld [vmem:[%s4 + $0x10] sm:$0xff]
        %v3180 = vld [vmem:[%s4 + $0x18] sm:$0xff]
        %3182 = vset.pattern.permute.xlu0 0
        %3183 = vperm.xlu0 %3182, %v3177
        %v3184 = vpop.permute.xlu0 %3183
        %3187 = vset.pattern.permute.xlu0 0
        %3188 = vperm.xlu0 %3187, %v3178
        %v3189 = vpop.permute.xlu0 %3188
        %3192 = vset.pattern.permute.xlu0 0
        %3193 = vperm.xlu0 %3192, %v3179
        %v3194 = vpop.permute.xlu0 %3193
        %3197 = vset.pattern.permute.xlu0 0
        %3198 = vperm.xlu0 %3197, %v3180
        %v3199 = vpop.permute.xlu0 %3198
        %vm3201 = vcmask 261120
        %v3203 = vsel %vm3201, %v3173, 0
        %v3206 = vsel %vm3201, %v3174, 0
        %v3209 = vsel %vm3201, %v3175, 0
        %v3212 = vsel %vm3201, %v3176, 0
        %3214 = vmatpush.msra.mxu0 0.0
        %3215 = vmatpush.msra.mxu0 0.0
        %3216 = vmatpush.msra.mxu0 0.0
        %3217 = vmatpush.msra.mxu0 0.0
        %3218 = vmatpush.msra.mxu0 0.0
        %3219 = vmatpush.msra.mxu0 0.0
        %3220 = vmatpush.msra.mxu0 0.0
        %3221 = vmatpush.msra.mxu0 0.0
        %3222 = vmatpush.msra.mxu0 0.0
        %3223 = vmatpush.msra.mxu0 0.0
        %3224 = vmatpush.msra.mxu0 0.0
        %3225 = vmatpush.msra.mxu0 0.0
        %3226 = vmatpush.msra.mxu0 %v2707
        %3227 = vmatpush.msra.mxu0 %v2087
        %3228 = vmatpush.msra.mxu0 %v1467
        %3229 = vmatpush.msra.mxu0 %v847
        %3230 = vmatmul.f32.gmra.mxu0 %v3203
        %v3231 = vpop.f32.mrf.mxu0
        %v3232 = vadd.f32 %v3184, %v3231
        %3233 = vmatmul.f32.gmra.mxu0 %v3206
        %v3234 = vpop.f32.mrf.mxu0
        %v3235 = vadd.f32 %v3189, %v3234
        %3236 = vmatmul.f32.gmra.mxu0 %v3209
        %v3237 = vpop.f32.mrf.mxu0
        %v3238 = vadd.f32 %v3194, %v3237
        %3239 = vmatmul.f32.gmra.mxu0 %v3212
        %v3240 = vpop.f32.mrf.mxu0
        %v3241 = vadd.f32 %v3199, %v3240
        %3242 = vdwg.mxu0
        %3243 = vmatpush.msra.mxu0 0.0
        %3244 = vmatpush.msra.mxu0 0.0
        %3245 = vmatpush.msra.mxu0 0.0
        %3246 = vmatpush.msra.mxu0 0.0
        %3247 = vmatpush.msra.mxu0 0.0
        %3248 = vmatpush.msra.mxu0 0.0
        %3249 = vmatpush.msra.mxu0 0.0
        %3250 = vmatpush.msra.mxu0 0.0
        %3251 = vmatpush.msra.mxu0 0.0
        %3252 = vmatpush.msra.mxu0 0.0
        %3253 = vmatpush.msra.mxu0 0.0
        %3254 = vmatpush.msra.mxu0 0.0
        %3255 = vmatpush.msra.mxu0 %v2862
        %3256 = vmatpush.msra.mxu0 %v2242
        %3257 = vmatpush.msra.mxu0 %v1622
        %3258 = vmatpush.msra.mxu0 %v1002
        %3259 = vmatmul.f32.gmra.mxu0 %v3203
        %v3260 = vpop.f32.mrf.mxu0
        %v3261 = vadd.f32 %v3184, %v3260
        %3262 = vmatmul.f32.gmra.mxu0 %v3206
        %v3263 = vpop.f32.mrf.mxu0
        %v3264 = vadd.f32 %v3189, %v3263
        %3265 = vmatmul.f32.gmra.mxu0 %v3209
        %v3266 = vpop.f32.mrf.mxu0
        %v3267 = vadd.f32 %v3194, %v3266
        %3268 = vmatmul.f32.gmra.mxu0 %v3212
        %v3269 = vpop.f32.mrf.mxu0
        %v3270 = vadd.f32 %v3199, %v3269
        %3271 = vdwg.mxu0
        %3272 = vmatpush.msra.mxu0 0.0
        %3273 = vmatpush.msra.mxu0 0.0
        %3274 = vmatpush.msra.mxu0 0.0
        %3275 = vmatpush.msra.mxu0 0.0
        %3276 = vmatpush.msra.mxu0 0.0
        %3277 = vmatpush.msra.mxu0 0.0
        %3278 = vmatpush.msra.mxu0 0.0
        %3279 = vmatpush.msra.mxu0 0.0
        %3280 = vmatpush.msra.mxu0 0.0
        %3281 = vmatpush.msra.mxu0 0.0
        %3282 = vmatpush.msra.mxu0 0.0
        %3283 = vmatpush.msra.mxu0 0.0
        %3284 = vmatpush.msra.mxu0 %v3017
        %3285 = vmatpush.msra.mxu0 %v2397
        %3286 = vmatpush.msra.mxu0 %v1777
        %3287 = vmatpush.msra.mxu0 %v1157
        %3288 = vmatmul.f32.gmra.mxu0 %v3203
        %v3289 = vpop.f32.mrf.mxu0
        %v3290 = vadd.f32 %v3184, %v3289
        %3291 = vmatmul.f32.gmra.mxu0 %v3206
        %v3292 = vpop.f32.mrf.mxu0
        %v3293 = vadd.f32 %v3189, %v3292
        %3294 = vmatmul.f32.gmra.mxu0 %v3209
        %v3295 = vpop.f32.mrf.mxu0
        %v3296 = vadd.f32 %v3194, %v3295
        %3297 = vmatmul.f32.gmra.mxu0 %v3212
        %v3298 = vpop.f32.mrf.mxu0
        %v3299 = vadd.f32 %v3199, %v3298
        %3300 = vdwg.mxu0
        %3301 = vmatpush.msra.mxu0 0.0
        %3302 = vmatpush.msra.mxu0 0.0
        %3303 = vmatpush.msra.mxu0 0.0
        %3304 = vmatpush.msra.mxu0 0.0
        %3305 = vmatpush.msra.mxu0 0.0
        %3306 = vmatpush.msra.mxu0 0.0
        %3307 = vmatpush.msra.mxu0 0.0
        %3308 = vmatpush.msra.mxu0 0.0
        %3309 = vmatpush.msra.mxu0 0.0
        %3310 = vmatpush.msra.mxu0 0.0
        %3311 = vmatpush.msra.mxu0 0.0
        %3312 = vmatpush.msra.mxu0 0.0
        %3313 = vmatpush.msra.mxu0 %v3172
        %3314 = vmatpush.msra.mxu0 %v2552
        %3315 = vmatpush.msra.mxu0 %v1932
        %3316 = vmatpush.msra.mxu0 %v1312
        %3317 = vmatmul.f32.gmra.mxu0 %v3203
        %v3318 = vpop.f32.mrf.mxu0
        %v3319 = vadd.f32 %v3184, %v3318
        %3320 = vmatmul.f32.gmra.mxu0 %v3206
        %v3321 = vpop.f32.mrf.mxu0
        %v3322 = vadd.f32 %v3189, %v3321
        %3323 = vmatmul.f32.gmra.mxu0 %v3209
        %v3324 = vpop.f32.mrf.mxu0
        %v3325 = vadd.f32 %v3194, %v3324
        %3326 = vmatmul.f32.gmra.mxu0 %v3212
        %v3327 = vpop.f32.mrf.mxu0
        %v3328 = vadd.f32 %v3199, %v3327
        %3329 = vdwg.mxu0
        %v3330 = vmax.f32 %v3232, 0.0
        %v3331 = vmax.f32 %v3261, 0.0
        %v3332 = vmax.f32 %v3290, 0.0
        %v3333 = vmax.f32 %v3319, 0.0
        %v3334 = vmax.f32 %v3235, 0.0
        %v3335 = vmax.f32 %v3264, 0.0
        %v3336 = vmax.f32 %v3293, 0.0
        %v3337 = vmax.f32 %v3322, 0.0
        %v3338 = vmax.f32 %v3238, 0.0
        %v3339 = vmax.f32 %v3267, 0.0
        %v3340 = vmax.f32 %v3296, 0.0
        %v3341 = vmax.f32 %v3325, 0.0
        %v3342 = vmax.f32 %v3241, 0.0
        %v3343 = vmax.f32 %v3270, 0.0
        %v3344 = vmax.f32 %v3299, 0.0
        %v3345 = vmax.f32 %v3328, 0.0
        %vm3346 = vcmp.ne.f32.partialorder %v3232, %v3232
        %vm3347 = vcmp.ne.f32.partialorder %v3261, %v3261
        %vm3348 = vcmp.ne.f32.partialorder %v3290, %v3290
        %vm3349 = vcmp.ne.f32.partialorder %v3319, %v3319
        %vm3350 = vcmp.ne.f32.partialorder %v3235, %v3235
        %vm3351 = vcmp.ne.f32.partialorder %v3264, %v3264
        %vm3352 = vcmp.ne.f32.partialorder %v3293, %v3293
        %vm3353 = vcmp.ne.f32.partialorder %v3322, %v3322
        %vm3354 = vcmp.ne.f32.partialorder %v3238, %v3238
        %vm3355 = vcmp.ne.f32.partialorder %v3267, %v3267
        %vm3356 = vcmp.ne.f32.partialorder %v3296, %v3296
        %vm3357 = vcmp.ne.f32.partialorder %v3325, %v3325
        %vm3358 = vcmp.ne.f32.partialorder %v3241, %v3241
        %vm3359 = vcmp.ne.f32.partialorder %v3270, %v3270
        %vm3360 = vcmp.ne.f32.partialorder %v3299, %v3299
        %vm3361 = vcmp.ne.f32.partialorder %v3328, %v3328
        %v3362 = vadd.f32 %v3232, 0.0
        %v3363 = vadd.f32 %v3261, 0.0
        %v3364 = vadd.f32 %v3290, 0.0
        %v3365 = vadd.f32 %v3319, 0.0
        %v3366 = vadd.f32 %v3235, 0.0
        %v3367 = vadd.f32 %v3264, 0.0
        %v3368 = vadd.f32 %v3293, 0.0
        %v3369 = vadd.f32 %v3322, 0.0
        %v3370 = vadd.f32 %v3238, 0.0
        %v3371 = vadd.f32 %v3267, 0.0
        %v3372 = vadd.f32 %v3296, 0.0
        %v3373 = vadd.f32 %v3325, 0.0
        %v3374 = vadd.f32 %v3241, 0.0
        %v3375 = vadd.f32 %v3270, 0.0
        %v3376 = vadd.f32 %v3299, 0.0
        %v3377 = vadd.f32 %v3328, 0.0
        %v3378 = vand.u32 2147483647, %v3232
        %v3379 = vand.u32 2147483647, %v3261
        %v3380 = vand.u32 2147483647, %v3290
        %v3381 = vand.u32 2147483647, %v3319
        %v3382 = vand.u32 2147483647, %v3235
        %v3383 = vand.u32 2147483647, %v3264
        %v3384 = vand.u32 2147483647, %v3293
        %v3385 = vand.u32 2147483647, %v3322
        %v3386 = vand.u32 2147483647, %v3238
        %v3387 = vand.u32 2147483647, %v3267
        %v3388 = vand.u32 2147483647, %v3296
        %v3389 = vand.u32 2147483647, %v3325
        %v3390 = vand.u32 2147483647, %v3241
        %v3391 = vand.u32 2147483647, %v3270
        %v3392 = vand.u32 2147483647, %v3299
        %v3393 = vand.u32 2147483647, %v3328
        %v3394 = vsub.f32 0.0, %v3378
        %v3395 = vsub.f32 0.0, %v3379
        %v3396 = vsub.f32 0.0, %v3380
        %v3397 = vsub.f32 0.0, %v3381
        %v3398 = vsub.f32 0.0, %v3382
        %v3399 = vsub.f32 0.0, %v3383
        %v3400 = vsub.f32 0.0, %v3384
        %v3401 = vsub.f32 0.0, %v3385
        %v3402 = vsub.f32 0.0, %v3386
        %v3403 = vsub.f32 0.0, %v3387
        %v3404 = vsub.f32 0.0, %v3388
        %v3405 = vsub.f32 0.0, %v3389
        %v3406 = vsub.f32 0.0, %v3390
        %v3407 = vsub.f32 0.0, %v3391
        %v3408 = vsub.f32 0.0, %v3392
        %v3409 = vsub.f32 0.0, %v3393
        %v3410 = vmul.f32 %v3394, 1.442695
        %v3411 = vpow.pop %v3410
        %v3412 = vmul.f32 %v3395, 1.442695
        %v3413 = vpow.pop %v3412
        %v3414 = vmul.f32 %v3396, 1.442695
        %v3415 = vpow.pop %v3414
        %v3416 = vmul.f32 %v3397, 1.442695
        %v3417 = vpow.pop %v3416
        %v3418 = vmul.f32 %v3398, 1.442695
        %v3419 = vpow.pop %v3418
        %v3420 = vmul.f32 %v3399, 1.442695
        %v3421 = vpow.pop %v3420
        %v3422 = vmul.f32 %v3400, 1.442695
        %v3423 = vpow.pop %v3422
        %v3424 = vmul.f32 %v3401, 1.442695
        %v3425 = vpow.pop %v3424
        %v3426 = vmul.f32 %v3402, 1.442695
        %v3427 = vpow.pop %v3426
        %v3428 = vmul.f32 %v3403, 1.442695
        %v3429 = vpow.pop %v3428
        %v3430 = vmul.f32 %v3404, 1.442695
        %v3431 = vpow.pop %v3430
        %v3432 = vmul.f32 %v3405, 1.442695
        %v3433 = vpow.pop %v3432
        %v3434 = vmul.f32 %v3406, 1.442695
        %v3435 = vpow.pop %v3434
        %v3436 = vmul.f32 %v3407, 1.442695
        %v3437 = vpow.pop %v3436
        %v3438 = vmul.f32 %v3408, 1.442695
        %v3439 = vpow.pop %v3438
        %v3440 = vmul.f32 %v3409, 1.442695
        %v3441 = vpow.pop %v3440
        %v3442 = vadd.f32 %v3411, 1.0
        %v3443 = vlog2.pop %v3442
        %v3444 = vmul.f32 %v3443, 0.6931472
        %v3445 = vmul.f32 -0.5, %v3411
        %v3446 = vadd.f32 %v3445, 1.0
        %v3447 = vmul.f32 %v3446, %v3411
        %v3448 = vand.u32 2147483647, %v3411
        %vm3449 = vcmp.lt.f32.partialorder %v3448, 0.0004427343
        %v3450 = vsel %vm3449, %v3447, %v3444
        %v3451 = vadd.f32 %v3413, 1.0
        %v3452 = vlog2.pop %v3451
        %v3453 = vmul.f32 %v3452, 0.6931472
        %v3454 = vmul.f32 -0.5, %v3413
        %v3455 = vadd.f32 %v3454, 1.0
        %v3456 = vmul.f32 %v3455, %v3413
        %v3457 = vand.u32 2147483647, %v3413
        %vm3458 = vcmp.lt.f32.partialorder %v3457, 0.0004427343
        %v3459 = vsel %vm3458, %v3456, %v3453
        %v3460 = vadd.f32 %v3415, 1.0
        %v3461 = vlog2.pop %v3460
        %v3462 = vmul.f32 %v3461, 0.6931472
        %v3463 = vmul.f32 -0.5, %v3415
        %v3464 = vadd.f32 %v3463, 1.0
        %v3465 = vmul.f32 %v3464, %v3415
        %v3466 = vand.u32 2147483647, %v3415
        %vm3467 = vcmp.lt.f32.partialorder %v3466, 0.0004427343
        %v3468 = vsel %vm3467, %v3465, %v3462
        %v3469 = vadd.f32 %v3417, 1.0
        %v3470 = vlog2.pop %v3469
        %v3471 = vmul.f32 %v3470, 0.6931472
        %v3472 = vmul.f32 -0.5, %v3417
        %v3473 = vadd.f32 %v3472, 1.0
        %v3474 = vmul.f32 %v3473, %v3417
        %v3475 = vand.u32 2147483647, %v3417
        %vm3476 = vcmp.lt.f32.partialorder %v3475, 0.0004427343
        %v3477 = vsel %vm3476, %v3474, %v3471
        %v3478 = vadd.f32 %v3419, 1.0
        %v3479 = vlog2.pop %v3478
        %v3480 = vmul.f32 %v3479, 0.6931472
        %v3481 = vmul.f32 -0.5, %v3419
        %v3482 = vadd.f32 %v3481, 1.0
        %v3483 = vmul.f32 %v3482, %v3419
        %v3484 = vand.u32 2147483647, %v3419
        %vm3485 = vcmp.lt.f32.partialorder %v3484, 0.0004427343
        %v3486 = vsel %vm3485, %v3483, %v3480
        %v3487 = vadd.f32 %v3421, 1.0
        %v3488 = vlog2.pop %v3487
        %v3489 = vmul.f32 %v3488, 0.6931472
        %v3490 = vmul.f32 -0.5, %v3421
        %v3491 = vadd.f32 %v3490, 1.0
        %v3492 = vmul.f32 %v3491, %v3421
        %v3493 = vand.u32 2147483647, %v3421
        %vm3494 = vcmp.lt.f32.partialorder %v3493, 0.0004427343
        %v3495 = vsel %vm3494, %v3492, %v3489
        %v3496 = vadd.f32 %v3423, 1.0
        %v3497 = vlog2.pop %v3496
        %v3498 = vmul.f32 %v3497, 0.6931472
        %v3499 = vmul.f32 -0.5, %v3423
        %v3500 = vadd.f32 %v3499, 1.0
        %v3501 = vmul.f32 %v3500, %v3423
        %v3502 = vand.u32 2147483647, %v3423
        %vm3503 = vcmp.lt.f32.partialorder %v3502, 0.0004427343
        %v3504 = vsel %vm3503, %v3501, %v3498
        %v3505 = vadd.f32 %v3425, 1.0
        %v3506 = vlog2.pop %v3505
        %v3507 = vmul.f32 %v3506, 0.6931472
        %v3508 = vmul.f32 -0.5, %v3425
        %v3509 = vadd.f32 %v3508, 1.0
        %v3510 = vmul.f32 %v3509, %v3425
        %v3511 = vand.u32 2147483647, %v3425
        %vm3512 = vcmp.lt.f32.partialorder %v3511, 0.0004427343
        %v3513 = vsel %vm3512, %v3510, %v3507
        %v3514 = vadd.f32 %v3427, 1.0
        %v3515 = vlog2.pop %v3514
        %v3516 = vmul.f32 %v3515, 0.6931472
        %v3517 = vmul.f32 -0.5, %v3427
        %v3518 = vadd.f32 %v3517, 1.0
        %v3519 = vmul.f32 %v3518, %v3427
        %v3520 = vand.u32 2147483647, %v3427
        %vm3521 = vcmp.lt.f32.partialorder %v3520, 0.0004427343
        %v3522 = vsel %vm3521, %v3519, %v3516
        %v3523 = vadd.f32 %v3429, 1.0
        %v3524 = vlog2.pop %v3523
        %v3525 = vmul.f32 %v3524, 0.6931472
        %v3526 = vmul.f32 -0.5, %v3429
        %v3527 = vadd.f32 %v3526, 1.0
        %v3528 = vmul.f32 %v3527, %v3429
        %v3529 = vand.u32 2147483647, %v3429
        %vm3530 = vcmp.lt.f32.partialorder %v3529, 0.0004427343
        %v3531 = vsel %vm3530, %v3528, %v3525
        %v3532 = vadd.f32 %v3431, 1.0
        %v3533 = vlog2.pop %v3532
        %v3534 = vmul.f32 %v3533, 0.6931472
        %v3535 = vmul.f32 -0.5, %v3431
        %v3536 = vadd.f32 %v3535, 1.0
        %v3537 = vmul.f32 %v3536, %v3431
        %v3538 = vand.u32 2147483647, %v3431
        %vm3539 = vcmp.lt.f32.partialorder %v3538, 0.0004427343
        %v3540 = vsel %vm3539, %v3537, %v3534
        %v3541 = vadd.f32 %v3433, 1.0
        %v3542 = vlog2.pop %v3541
        %v3543 = vmul.f32 %v3542, 0.6931472
        %v3544 = vmul.f32 -0.5, %v3433
        %v3545 = vadd.f32 %v3544, 1.0
        %v3546 = vmul.f32 %v3545, %v3433
        %v3547 = vand.u32 2147483647, %v3433
        %vm3548 = vcmp.lt.f32.partialorder %v3547, 0.0004427343
        %v3549 = vsel %vm3548, %v3546, %v3543
        %v3550 = vadd.f32 %v3435, 1.0
        %v3551 = vlog2.pop %v3550
        %v3552 = vmul.f32 %v3551, 0.6931472
        %v3553 = vmul.f32 -0.5, %v3435
        %v3554 = vadd.f32 %v3553, 1.0
        %v3555 = vmul.f32 %v3554, %v3435
        %v3556 = vand.u32 2147483647, %v3435
        %vm3557 = vcmp.lt.f32.partialorder %v3556, 0.0004427343
        %v3558 = vsel %vm3557, %v3555, %v3552
        %v3559 = vadd.f32 %v3437, 1.0
        %v3560 = vlog2.pop %v3559
        %v3561 = vmul.f32 %v3560, 0.6931472
        %v3562 = vmul.f32 -0.5, %v3437
        %v3563 = vadd.f32 %v3562, 1.0
        %v3564 = vmul.f32 %v3563, %v3437
        %v3565 = vand.u32 2147483647, %v3437
        %vm3566 = vcmp.lt.f32.partialorder %v3565, 0.0004427343
        %v3567 = vsel %vm3566, %v3564, %v3561
        %v3568 = vadd.f32 %v3439, 1.0
        %v3569 = vlog2.pop %v3568
        %v3570 = vmul.f32 %v3569, 0.6931472
        %v3571 = vmul.f32 -0.5, %v3439
        %v3572 = vadd.f32 %v3571, 1.0
        %v3573 = vmul.f32 %v3572, %v3439
        %v3574 = vand.u32 2147483647, %v3439
        %vm3575 = vcmp.lt.f32.partialorder %v3574, 0.0004427343
        %v3576 = vsel %vm3575, %v3573, %v3570
        %v3577 = vadd.f32 %v3441, 1.0
        %v3578 = vlog2.pop %v3577
        %v3579 = vmul.f32 %v3578, 0.6931472
        %v3580 = vmul.f32 -0.5, %v3441
        %v3581 = vadd.f32 %v3580, 1.0
        %v3582 = vmul.f32 %v3581, %v3441
        %v3583 = vand.u32 2147483647, %v3441
        %vm3584 = vcmp.lt.f32.partialorder %v3583, 0.0004427343
        %v3585 = vsel %vm3584, %v3582, %v3579
        %v3586 = vadd.f32 %v3330, %v3450
        %v3587 = vadd.f32 %v3331, %v3459
        %v3588 = vadd.f32 %v3332, %v3468
        %v3589 = vadd.f32 %v3333, %v3477
        %v3590 = vadd.f32 %v3334, %v3486
        %v3591 = vadd.f32 %v3335, %v3495
        %v3592 = vadd.f32 %v3336, %v3504
        %v3593 = vadd.f32 %v3337, %v3513
        %v3594 = vadd.f32 %v3338, %v3522
        %v3595 = vadd.f32 %v3339, %v3531
        %v3596 = vadd.f32 %v3340, %v3540
        %v3597 = vadd.f32 %v3341, %v3549
        %v3598 = vadd.f32 %v3342, %v3558
        %v3599 = vadd.f32 %v3343, %v3567
        %v3600 = vadd.f32 %v3344, %v3576
        %v3601 = vadd.f32 %v3345, %v3585
        %v3602 = vsel %vm3346, %v3362, %v3586
        %v3603 = vsel %vm3347, %v3363, %v3587
        %v3604 = vsel %vm3348, %v3364, %v3588
        %v3605 = vsel %vm3349, %v3365, %v3589
        %v3606 = vsel %vm3350, %v3366, %v3590
        %v3607 = vsel %vm3351, %v3367, %v3591
        %v3608 = vsel %vm3352, %v3368, %v3592
        %v3609 = vsel %vm3353, %v3369, %v3593
        %v3610 = vsel %vm3354, %v3370, %v3594
        %v3611 = vsel %vm3355, %v3371, %v3595
        %v3612 = vsel %vm3356, %v3372, %v3596
        %v3613 = vsel %vm3357, %v3373, %v3597
        %v3614 = vsel %vm3358, %v3374, %v3598
        %v3615 = vsel %vm3359, %v3375, %v3599
        %v3616 = vsel %vm3360, %v3376, %v3600
        %v3617 = vsel %vm3361, %v3377, %v3601
        %s3618 = scalar_lea.vmem %s3, 32
        %v3619 = vld [vmem:[%s3618] sm:$0xff]
        %v3620 = vld [vmem:[%s3618 + $0x8] sm:$0xff]
        %v3621 = vld [vmem:[%s3618 + $0x10] sm:$0xff]
        %v3622 = vld [vmem:[%s3618 + $0x18] sm:$0xff]
        %s3623 = scalar_lea.vmem %s4, 32
        %v3624 = vld [vmem:[%s3623] sm:$0xff]
        %v3625 = vld [vmem:[%s3623 + $0x8] sm:$0xff]
        %v3626 = vld [vmem:[%s3623 + $0x10] sm:$0xff]
        %v3627 = vld [vmem:[%s3623 + $0x18] sm:$0xff]
        %3629 = vset.pattern.permute.xlu0 0
        %3630 = vperm.xlu0 %3629, %v3624
        %v3631 = vpop.permute.xlu0 %3630
        %3634 = vset.pattern.permute.xlu0 0
        %3635 = vperm.xlu0 %3634, %v3625
        %v3636 = vpop.permute.xlu0 %3635
        %3639 = vset.pattern.permute.xlu0 0
        %3640 = vperm.xlu0 %3639, %v3626
        %v3641 = vpop.permute.xlu0 %3640
        %3644 = vset.pattern.permute.xlu0 0
        %3645 = vperm.xlu0 %3644, %v3627
        %v3646 = vpop.permute.xlu0 %3645
        %v3649 = vsel %vm3201, %v3619, 0
        %v3652 = vsel %vm3201, %v3620, 0
        %v3655 = vsel %vm3201, %v3621, 0
        %v3658 = vsel %vm3201, %v3622, 0
        %3660 = vmatpush.msra.mxu0 0.0
        %3661 = vmatpush.msra.mxu0 0.0
        %3662 = vmatpush.msra.mxu0 0.0
        %3663 = vmatpush.msra.mxu0 0.0
        %3664 = vmatpush.msra.mxu0 0.0
        %3665 = vmatpush.msra.mxu0 0.0
        %3666 = vmatpush.msra.mxu0 0.0
        %3667 = vmatpush.msra.mxu0 0.0
        %3668 = vmatpush.msra.mxu0 0.0
        %3669 = vmatpush.msra.mxu0 0.0
        %3670 = vmatpush.msra.mxu0 0.0
        %3671 = vmatpush.msra.mxu0 0.0
        %3672 = vmatpush.msra.mxu0 %v3614
        %3673 = vmatpush.msra.mxu0 %v3610
        %3674 = vmatpush.msra.mxu0 %v3606
        %3675 = vmatpush.msra.mxu0 %v3602
        %3676 = vmatmul.f32.gmra.mxu0 %v3649
        %v3677 = vpop.f32.mrf.mxu0
        %v3678 = vadd.f32 %v3631, %v3677
        %3679 = vmatmul.f32.gmra.mxu0 %v3652
        %v3680 = vpop.f32.mrf.mxu0
        %v3681 = vadd.f32 %v3636, %v3680
        %3682 = vmatmul.f32.gmra.mxu0 %v3655
        %v3683 = vpop.f32.mrf.mxu0
        %v3684 = vadd.f32 %v3641, %v3683
        %3685 = vmatmul.f32.gmra.mxu0 %v3658
        %v3686 = vpop.f32.mrf.mxu0
        %v3687 = vadd.f32 %v3646, %v3686
        %3688 = vdwg.mxu0
        %3689 = vmatpush.msra.mxu0 0.0
        %3690 = vmatpush.msra.mxu0 0.0
        %3691 = vmatpush.msra.mxu0 0.0
        %3692 = vmatpush.msra.mxu0 0.0
        %3693 = vmatpush.msra.mxu0 0.0
        %3694 = vmatpush.msra.mxu0 0.0
        %3695 = vmatpush.msra.mxu0 0.0
        %3696 = vmatpush.msra.mxu0 0.0
        %3697 = vmatpush.msra.mxu0 0.0
        %3698 = vmatpush.msra.mxu0 0.0
        %3699 = vmatpush.msra.mxu0 0.0
        %3700 = vmatpush.msra.mxu0 0.0
        %3701 = vmatpush.msra.mxu0 %v3615
        %3702 = vmatpush.msra.mxu0 %v3611
        %3703 = vmatpush.msra.mxu0 %v3607
        %3704 = vmatpush.msra.mxu0 %v3603
        %3705 = vmatmul.f32.gmra.mxu0 %v3649
        %v3706 = vpop.f32.mrf.mxu0
        %v3707 = vadd.f32 %v3631, %v3706
        %3708 = vmatmul.f32.gmra.mxu0 %v3652
        %v3709 = vpop.f32.mrf.mxu0
        %v3710 = vadd.f32 %v3636, %v3709
        %3711 = vmatmul.f32.gmra.mxu0 %v3655
        %v3712 = vpop.f32.mrf.mxu0
        %v3713 = vadd.f32 %v3641, %v3712
        %3714 = vmatmul.f32.gmra.mxu0 %v3658
        %v3715 = vpop.f32.mrf.mxu0
        %v3716 = vadd.f32 %v3646, %v3715
        %3717 = vdwg.mxu0
        %3718 = vmatpush.msra.mxu0 0.0
        %3719 = vmatpush.msra.mxu0 0.0
        %3720 = vmatpush.msra.mxu0 0.0
        %3721 = vmatpush.msra.mxu0 0.0
        %3722 = vmatpush.msra.mxu0 0.0
        %3723 = vmatpush.msra.mxu0 0.0
        %3724 = vmatpush.msra.mxu0 0.0
        %3725 = vmatpush.msra.mxu0 0.0
        %3726 = vmatpush.msra.mxu0 0.0
        %3727 = vmatpush.msra.mxu0 0.0
        %3728 = vmatpush.msra.mxu0 0.0
        %3729 = vmatpush.msra.mxu0 0.0
        %3730 = vmatpush.msra.mxu0 %v3616
        %3731 = vmatpush.msra.mxu0 %v3612
        %3732 = vmatpush.msra.mxu0 %v3608
        %3733 = vmatpush.msra.mxu0 %v3604
        %3734 = vmatmul.f32.gmra.mxu0 %v3649
        %v3735 = vpop.f32.mrf.mxu0
        %v3736 = vadd.f32 %v3631, %v3735
        %3737 = vmatmul.f32.gmra.mxu0 %v3652
        %v3738 = vpop.f32.mrf.mxu0
        %v3739 = vadd.f32 %v3636, %v3738
        %3740 = vmatmul.f32.gmra.mxu0 %v3655
        %v3741 = vpop.f32.mrf.mxu0
        %v3742 = vadd.f32 %v3641, %v3741
        %3743 = vmatmul.f32.gmra.mxu0 %v3658
        %v3744 = vpop.f32.mrf.mxu0
        %v3745 = vadd.f32 %v3646, %v3744
        %3746 = vdwg.mxu0
        %3747 = vmatpush.msra.mxu0 0.0
        %3748 = vmatpush.msra.mxu0 0.0
        %3749 = vmatpush.msra.mxu0 0.0
        %3750 = vmatpush.msra.mxu0 0.0
        %3751 = vmatpush.msra.mxu0 0.0
        %3752 = vmatpush.msra.mxu0 0.0
        %3753 = vmatpush.msra.mxu0 0.0
        %3754 = vmatpush.msra.mxu0 0.0
        %3755 = vmatpush.msra.mxu0 0.0
        %3756 = vmatpush.msra.mxu0 0.0
        %3757 = vmatpush.msra.mxu0 0.0
        %3758 = vmatpush.msra.mxu0 0.0
        %3759 = vmatpush.msra.mxu0 %v3617
        %3760 = vmatpush.msra.mxu0 %v3613
        %3761 = vmatpush.msra.mxu0 %v3609
        %3762 = vmatpush.msra.mxu0 %v3605
        %3763 = vmatmul.f32.gmra.mxu0 %v3649
        %v3764 = vpop.f32.mrf.mxu0
        %v3765 = vadd.f32 %v3631, %v3764
        %3766 = vmatmul.f32.gmra.mxu0 %v3652
        %v3767 = vpop.f32.mrf.mxu0
        %v3768 = vadd.f32 %v3636, %v3767
        %3769 = vmatmul.f32.gmra.mxu0 %v3655
        %v3770 = vpop.f32.mrf.mxu0
        %v3771 = vadd.f32 %v3641, %v3770
        %3772 = vmatmul.f32.gmra.mxu0 %v3658
        %v3773 = vpop.f32.mrf.mxu0
        %v3774 = vadd.f32 %v3646, %v3773
        %3775 = vdwg.mxu0
        %v3776 = vmax.f32 %v3678, 0.0
        %v3777 = vmax.f32 %v3707, 0.0
        %v3778 = vmax.f32 %v3736, 0.0
        %v3779 = vmax.f32 %v3765, 0.0
        %v3780 = vmax.f32 %v3681, 0.0
        %v3781 = vmax.f32 %v3710, 0.0
        %v3782 = vmax.f32 %v3739, 0.0
        %v3783 = vmax.f32 %v3768, 0.0
        %v3784 = vmax.f32 %v3684, 0.0
        %v3785 = vmax.f32 %v3713, 0.0
        %v3786 = vmax.f32 %v3742, 0.0
        %v3787 = vmax.f32 %v3771, 0.0
        %v3788 = vmax.f32 %v3687, 0.0
        %v3789 = vmax.f32 %v3716, 0.0
        %v3790 = vmax.f32 %v3745, 0.0
        %v3791 = vmax.f32 %v3774, 0.0
        %vm3792 = vcmp.ne.f32.partialorder %v3678, %v3678
        %vm3793 = vcmp.ne.f32.partialorder %v3707, %v3707
        %vm3794 = vcmp.ne.f32.partialorder %v3736, %v3736
        %vm3795 = vcmp.ne.f32.partialorder %v3765, %v3765
        %vm3796 = vcmp.ne.f32.partialorder %v3681, %v3681
        %vm3797 = vcmp.ne.f32.partialorder %v3710, %v3710
        %vm3798 = vcmp.ne.f32.partialorder %v3739, %v3739
        %vm3799 = vcmp.ne.f32.partialorder %v3768, %v3768
        %vm3800 = vcmp.ne.f32.partialorder %v3684, %v3684
        %vm3801 = vcmp.ne.f32.partialorder %v3713, %v3713
        %vm3802 = vcmp.ne.f32.partialorder %v3742, %v3742
        %vm3803 = vcmp.ne.f32.partialorder %v3771, %v3771
        %vm3804 = vcmp.ne.f32.partialorder %v3687, %v3687
        %vm3805 = vcmp.ne.f32.partialorder %v3716, %v3716
        %vm3806 = vcmp.ne.f32.partialorder %v3745, %v3745
        %vm3807 = vcmp.ne.f32.partialorder %v3774, %v3774
        %v3808 = vadd.f32 %v3678, 0.0
        %v3809 = vadd.f32 %v3707, 0.0
        %v3810 = vadd.f32 %v3736, 0.0
        %v3811 = vadd.f32 %v3765, 0.0
        %v3812 = vadd.f32 %v3681, 0.0
        %v3813 = vadd.f32 %v3710, 0.0
        %v3814 = vadd.f32 %v3739, 0.0
        %v3815 = vadd.f32 %v3768, 0.0
        %v3816 = vadd.f32 %v3684, 0.0
        %v3817 = vadd.f32 %v3713, 0.0
        %v3818 = vadd.f32 %v3742, 0.0
        %v3819 = vadd.f32 %v3771, 0.0
        %v3820 = vadd.f32 %v3687, 0.0
        %v3821 = vadd.f32 %v3716, 0.0
        %v3822 = vadd.f32 %v3745, 0.0
        %v3823 = vadd.f32 %v3774, 0.0
        %v3824 = vand.u32 2147483647, %v3678
        %v3825 = vand.u32 2147483647, %v3707
        %v3826 = vand.u32 2147483647, %v3736
        %v3827 = vand.u32 2147483647, %v3765
        %v3828 = vand.u32 2147483647, %v3681
        %v3829 = vand.u32 2147483647, %v3710
        %v3830 = vand.u32 2147483647, %v3739
        %v3831 = vand.u32 2147483647, %v3768
        %v3832 = vand.u32 2147483647, %v3684
        %v3833 = vand.u32 2147483647, %v3713
        %v3834 = vand.u32 2147483647, %v3742
        %v3835 = vand.u32 2147483647, %v3771
        %v3836 = vand.u32 2147483647, %v3687
        %v3837 = vand.u32 2147483647, %v3716
        %v3838 = vand.u32 2147483647, %v3745
        %v3839 = vand.u32 2147483647, %v3774
        %v3840 = vsub.f32 0.0, %v3824
        %v3841 = vsub.f32 0.0, %v3825
        %v3842 = vsub.f32 0.0, %v3826
        %v3843 = vsub.f32 0.0, %v3827
        %v3844 = vsub.f32 0.0, %v3828
        %v3845 = vsub.f32 0.0, %v3829
        %v3846 = vsub.f32 0.0, %v3830
        %v3847 = vsub.f32 0.0, %v3831
        %v3848 = vsub.f32 0.0, %v3832
        %v3849 = vsub.f32 0.0, %v3833
        %v3850 = vsub.f32 0.0, %v3834
        %v3851 = vsub.f32 0.0, %v3835
        %v3852 = vsub.f32 0.0, %v3836
        %v3853 = vsub.f32 0.0, %v3837
        %v3854 = vsub.f32 0.0, %v3838
        %v3855 = vsub.f32 0.0, %v3839
        %v3856 = vmul.f32 %v3840, 1.442695
        %v3857 = vpow.pop %v3856
        %v3858 = vmul.f32 %v3841, 1.442695
        %v3859 = vpow.pop %v3858
        %v3860 = vmul.f32 %v3842, 1.442695
        %v3861 = vpow.pop %v3860
        %v3862 = vmul.f32 %v3843, 1.442695
        %v3863 = vpow.pop %v3862
        %v3864 = vmul.f32 %v3844, 1.442695
        %v3865 = vpow.pop %v3864
        %v3866 = vmul.f32 %v3845, 1.442695
        %v3867 = vpow.pop %v3866
        %v3868 = vmul.f32 %v3846, 1.442695
        %v3869 = vpow.pop %v3868
        %v3870 = vmul.f32 %v3847, 1.442695
        %v3871 = vpow.pop %v3870
        %v3872 = vmul.f32 %v3848, 1.442695
        %v3873 = vpow.pop %v3872
        %v3874 = vmul.f32 %v3849, 1.442695
        %v3875 = vpow.pop %v3874
        %v3876 = vmul.f32 %v3850, 1.442695
        %v3877 = vpow.pop %v3876
        %v3878 = vmul.f32 %v3851, 1.442695
        %v3879 = vpow.pop %v3878
        %v3880 = vmul.f32 %v3852, 1.442695
        %v3881 = vpow.pop %v3880
        %v3882 = vmul.f32 %v3853, 1.442695
        %v3883 = vpow.pop %v3882
        %v3884 = vmul.f32 %v3854, 1.442695
        %v3885 = vpow.pop %v3884
        %v3886 = vmul.f32 %v3855, 1.442695
        %v3887 = vpow.pop %v3886
        %v3888 = vadd.f32 %v3857, 1.0
        %v3889 = vlog2.pop %v3888
        %v3890 = vmul.f32 %v3889, 0.6931472
        %v3891 = vmul.f32 -0.5, %v3857
        %v3892 = vadd.f32 %v3891, 1.0
        %v3893 = vmul.f32 %v3892, %v3857
        %v3894 = vand.u32 2147483647, %v3857
        %vm3895 = vcmp.lt.f32.partialorder %v3894, 0.0004427343
        %v3896 = vsel %vm3895, %v3893, %v3890
        %v3897 = vadd.f32 %v3859, 1.0
        %v3898 = vlog2.pop %v3897
        %v3899 = vmul.f32 %v3898, 0.6931472
        %v3900 = vmul.f32 -0.5, %v3859
        %v3901 = vadd.f32 %v3900, 1.0
        %v3902 = vmul.f32 %v3901, %v3859
        %v3903 = vand.u32 2147483647, %v3859
        %vm3904 = vcmp.lt.f32.partialorder %v3903, 0.0004427343
        %v3905 = vsel %vm3904, %v3902, %v3899
        %v3906 = vadd.f32 %v3861, 1.0
        %v3907 = vlog2.pop %v3906
        %v3908 = vmul.f32 %v3907, 0.6931472
        %v3909 = vmul.f32 -0.5, %v3861
        %v3910 = vadd.f32 %v3909, 1.0
        %v3911 = vmul.f32 %v3910, %v3861
        %v3912 = vand.u32 2147483647, %v3861
        %vm3913 = vcmp.lt.f32.partialorder %v3912, 0.0004427343
        %v3914 = vsel %vm3913, %v3911, %v3908
        %v3915 = vadd.f32 %v3863, 1.0
        %v3916 = vlog2.pop %v3915
        %v3917 = vmul.f32 %v3916, 0.6931472
        %v3918 = vmul.f32 -0.5, %v3863
        %v3919 = vadd.f32 %v3918, 1.0
        %v3920 = vmul.f32 %v3919, %v3863
        %v3921 = vand.u32 2147483647, %v3863
        %vm3922 = vcmp.lt.f32.partialorder %v3921, 0.0004427343
        %v3923 = vsel %vm3922, %v3920, %v3917
        %v3924 = vadd.f32 %v3865, 1.0
        %v3925 = vlog2.pop %v3924
        %v3926 = vmul.f32 %v3925, 0.6931472
        %v3927 = vmul.f32 -0.5, %v3865
        %v3928 = vadd.f32 %v3927, 1.0
        %v3929 = vmul.f32 %v3928, %v3865
        %v3930 = vand.u32 2147483647, %v3865
        %vm3931 = vcmp.lt.f32.partialorder %v3930, 0.0004427343
        %v3932 = vsel %vm3931, %v3929, %v3926
        %v3933 = vadd.f32 %v3867, 1.0
        %v3934 = vlog2.pop %v3933
        %v3935 = vmul.f32 %v3934, 0.6931472
        %v3936 = vmul.f32 -0.5, %v3867
        %v3937 = vadd.f32 %v3936, 1.0
        %v3938 = vmul.f32 %v3937, %v3867
        %v3939 = vand.u32 2147483647, %v3867
        %vm3940 = vcmp.lt.f32.partialorder %v3939, 0.0004427343
        %v3941 = vsel %vm3940, %v3938, %v3935
        %v3942 = vadd.f32 %v3869, 1.0
        %v3943 = vlog2.pop %v3942
        %v3944 = vmul.f32 %v3943, 0.6931472
        %v3945 = vmul.f32 -0.5, %v3869
        %v3946 = vadd.f32 %v3945, 1.0
        %v3947 = vmul.f32 %v3946, %v3869
        %v3948 = vand.u32 2147483647, %v3869
        %vm3949 = vcmp.lt.f32.partialorder %v3948, 0.0004427343
        %v3950 = vsel %vm3949, %v3947, %v3944
        %v3951 = vadd.f32 %v3871, 1.0
        %v3952 = vlog2.pop %v3951
        %v3953 = vmul.f32 %v3952, 0.6931472
        %v3954 = vmul.f32 -0.5, %v3871
        %v3955 = vadd.f32 %v3954, 1.0
        %v3956 = vmul.f32 %v3955, %v3871
        %v3957 = vand.u32 2147483647, %v3871
        %vm3958 = vcmp.lt.f32.partialorder %v3957, 0.0004427343
        %v3959 = vsel %vm3958, %v3956, %v3953
        %v3960 = vadd.f32 %v3873, 1.0
        %v3961 = vlog2.pop %v3960
        %v3962 = vmul.f32 %v3961, 0.6931472
        %v3963 = vmul.f32 -0.5, %v3873
        %v3964 = vadd.f32 %v3963, 1.0
        %v3965 = vmul.f32 %v3964, %v3873
        %v3966 = vand.u32 2147483647, %v3873
        %vm3967 = vcmp.lt.f32.partialorder %v3966, 0.0004427343
        %v3968 = vsel %vm3967, %v3965, %v3962
        %v3969 = vadd.f32 %v3875, 1.0
        %v3970 = vlog2.pop %v3969
        %v3971 = vmul.f32 %v3970, 0.6931472
        %v3972 = vmul.f32 -0.5, %v3875
        %v3973 = vadd.f32 %v3972, 1.0
        %v3974 = vmul.f32 %v3973, %v3875
        %v3975 = vand.u32 2147483647, %v3875
        %vm3976 = vcmp.lt.f32.partialorder %v3975, 0.0004427343
        %v3977 = vsel %vm3976, %v3974, %v3971
        %v3978 = vadd.f32 %v3877, 1.0
        %v3979 = vlog2.pop %v3978
        %v3980 = vmul.f32 %v3979, 0.6931472
        %v3981 = vmul.f32 -0.5, %v3877
        %v3982 = vadd.f32 %v3981, 1.0
        %v3983 = vmul.f32 %v3982, %v3877
        %v3984 = vand.u32 2147483647, %v3877
        %vm3985 = vcmp.lt.f32.partialorder %v3984, 0.0004427343
        %v3986 = vsel %vm3985, %v3983, %v3980
        %v3987 = vadd.f32 %v3879, 1.0
        %v3988 = vlog2.pop %v3987
        %v3989 = vmul.f32 %v3988, 0.6931472
        %v3990 = vmul.f32 -0.5, %v3879
        %v3991 = vadd.f32 %v3990, 1.0
        %v3992 = vmul.f32 %v3991, %v3879
        %v3993 = vand.u32 2147483647, %v3879
        %vm3994 = vcmp.lt.f32.partialorder %v3993, 0.0004427343
        %v3995 = vsel %vm3994, %v3992, %v3989
        %v3996 = vadd.f32 %v3881, 1.0
        %v3997 = vlog2.pop %v3996
        %v3998 = vmul.f32 %v3997, 0.6931472
        %v3999 = vmul.f32 -0.5, %v3881
        %v4000 = vadd.f32 %v3999, 1.0
        %v4001 = vmul.f32 %v4000, %v3881
        %v4002 = vand.u32 2147483647, %v3881
        %vm4003 = vcmp.lt.f32.partialorder %v4002, 0.0004427343
        %v4004 = vsel %vm4003, %v4001, %v3998
        %v4005 = vadd.f32 %v3883, 1.0
        %v4006 = vlog2.pop %v4005
        %v4007 = vmul.f32 %v4006, 0.6931472
        %v4008 = vmul.f32 -0.5, %v3883
        %v4009 = vadd.f32 %v4008, 1.0
        %v4010 = vmul.f32 %v4009, %v3883
        %v4011 = vand.u32 2147483647, %v3883
        %vm4012 = vcmp.lt.f32.partialorder %v4011, 0.0004427343
        %v4013 = vsel %vm4012, %v4010, %v4007
        %v4014 = vadd.f32 %v3885, 1.0
        %v4015 = vlog2.pop %v4014
        %v4016 = vmul.f32 %v4015, 0.6931472
        %v4017 = vmul.f32 -0.5, %v3885
        %v4018 = vadd.f32 %v4017, 1.0
        %v4019 = vmul.f32 %v4018, %v3885
        %v4020 = vand.u32 2147483647, %v3885
        %vm4021 = vcmp.lt.f32.partialorder %v4020, 0.0004427343
        %v4022 = vsel %vm4021, %v4019, %v4016
        %v4023 = vadd.f32 %v3887, 1.0
        %v4024 = vlog2.pop %v4023
        %v4025 = vmul.f32 %v4024, 0.6931472
        %v4026 = vmul.f32 -0.5, %v3887
        %v4027 = vadd.f32 %v4026, 1.0
        %v4028 = vmul.f32 %v4027, %v3887
        %v4029 = vand.u32 2147483647, %v3887
        %vm4030 = vcmp.lt.f32.partialorder %v4029, 0.0004427343
        %v4031 = vsel %vm4030, %v4028, %v4025
        %v4032 = vadd.f32 %v3776, %v3896
        %v4033 = vadd.f32 %v3777, %v3905
        %v4034 = vadd.f32 %v3778, %v3914
        %v4035 = vadd.f32 %v3779, %v3923
        %v4036 = vadd.f32 %v3780, %v3932
        %v4037 = vadd.f32 %v3781, %v3941
        %v4038 = vadd.f32 %v3782, %v3950
        %v4039 = vadd.f32 %v3783, %v3959
        %v4040 = vadd.f32 %v3784, %v3968
        %v4041 = vadd.f32 %v3785, %v3977
        %v4042 = vadd.f32 %v3786, %v3986
        %v4043 = vadd.f32 %v3787, %v3995
        %v4044 = vadd.f32 %v3788, %v4004
        %v4045 = vadd.f32 %v3789, %v4013
        %v4046 = vadd.f32 %v3790, %v4022
        %v4047 = vadd.f32 %v3791, %v4031
        %v4048 = vsel %vm3792, %v3808, %v4032
        %v4049 = vsel %vm3793, %v3809, %v4033
        %v4050 = vsel %vm3794, %v3810, %v4034
        %v4051 = vsel %vm3795, %v3811, %v4035
        %v4052 = vsel %vm3796, %v3812, %v4036
        %v4053 = vsel %vm3797, %v3813, %v4037
        %v4054 = vsel %vm3798, %v3814, %v4038
        %v4055 = vsel %vm3799, %v3815, %v4039
        %v4056 = vsel %vm3800, %v3816, %v4040
        %v4057 = vsel %vm3801, %v3817, %v4041
        %v4058 = vsel %vm3802, %v3818, %v4042
        %v4059 = vsel %vm3803, %v3819, %v4043
        %v4060 = vsel %vm3804, %v3820, %v4044
        %v4061 = vsel %vm3805, %v3821, %v4045
        %v4062 = vsel %vm3806, %v3822, %v4046
        %v4063 = vsel %vm3807, %v3823, %v4047
        %s4064 = scalar_lea.vmem %s3, 64
        %v4065 = vld [vmem:[%s4064] sm:$0xff]
        %v4066 = vld [vmem:[%s4064 + $0x8] sm:$0xff]
        %v4067 = vld [vmem:[%s4064 + $0x10] sm:$0xff]
        %v4068 = vld [vmem:[%s4064 + $0x18] sm:$0xff]
        %s4069 = scalar_lea.vmem %s4, 64
        %v4070 = vld [vmem:[%s4069] sm:$0xff]
        %v4071 = vld [vmem:[%s4069 + $0x8] sm:$0xff]
        %v4072 = vld [vmem:[%s4069 + $0x10] sm:$0xff]
        %v4073 = vld [vmem:[%s4069 + $0x18] sm:$0xff]
        %4075 = vset.pattern.permute.xlu0 0
        %4076 = vperm.xlu0 %4075, %v4070
        %v4077 = vpop.permute.xlu0 %4076
        %4080 = vset.pattern.permute.xlu0 0
        %4081 = vperm.xlu0 %4080, %v4071
        %v4082 = vpop.permute.xlu0 %4081
        %4085 = vset.pattern.permute.xlu0 0
        %4086 = vperm.xlu0 %4085, %v4072
        %v4087 = vpop.permute.xlu0 %4086
        %4090 = vset.pattern.permute.xlu0 0
        %4091 = vperm.xlu0 %4090, %v4073
        %v4092 = vpop.permute.xlu0 %4091
        %v4095 = vsel %vm3201, %v4065, 0
        %v4098 = vsel %vm3201, %v4066, 0
        %v4101 = vsel %vm3201, %v4067, 0
        %v4104 = vsel %vm3201, %v4068, 0
        %4106 = vmatpush.msra.mxu0 0.0
        %4107 = vmatpush.msra.mxu0 0.0
        %4108 = vmatpush.msra.mxu0 0.0
        %4109 = vmatpush.msra.mxu0 0.0
        %4110 = vmatpush.msra.mxu0 0.0
        %4111 = vmatpush.msra.mxu0 0.0
        %4112 = vmatpush.msra.mxu0 0.0
        %4113 = vmatpush.msra.mxu0 0.0
        %4114 = vmatpush.msra.mxu0 0.0
        %4115 = vmatpush.msra.mxu0 0.0
        %4116 = vmatpush.msra.mxu0 0.0
        %4117 = vmatpush.msra.mxu0 0.0
        %4118 = vmatpush.msra.mxu0 %v4060
        %4119 = vmatpush.msra.mxu0 %v4056
        %4120 = vmatpush.msra.mxu0 %v4052
        %4121 = vmatpush.msra.mxu0 %v4048
        %4122 = vmatmul.f32.gmra.mxu0 %v4095
        %v4123 = vpop.f32.mrf.mxu0
        %v4124 = vadd.f32 %v4077, %v4123
        %4125 = vmatmul.f32.gmra.mxu0 %v4098
        %v4126 = vpop.f32.mrf.mxu0
        %v4127 = vadd.f32 %v4082, %v4126
        %4128 = vmatmul.f32.gmra.mxu0 %v4101
        %v4129 = vpop.f32.mrf.mxu0
        %v4130 = vadd.f32 %v4087, %v4129
        %4131 = vmatmul.f32.gmra.mxu0 %v4104
        %v4132 = vpop.f32.mrf.mxu0
        %v4133 = vadd.f32 %v4092, %v4132
        %4134 = vdwg.mxu0
        %4135 = vmatpush.msra.mxu0 0.0
        %4136 = vmatpush.msra.mxu0 0.0
        %4137 = vmatpush.msra.mxu0 0.0
        %4138 = vmatpush.msra.mxu0 0.0
        %4139 = vmatpush.msra.mxu0 0.0
        %4140 = vmatpush.msra.mxu0 0.0
        %4141 = vmatpush.msra.mxu0 0.0
        %4142 = vmatpush.msra.mxu0 0.0
        %4143 = vmatpush.msra.mxu0 0.0
        %4144 = vmatpush.msra.mxu0 0.0
        %4145 = vmatpush.msra.mxu0 0.0
        %4146 = vmatpush.msra.mxu0 0.0
        %4147 = vmatpush.msra.mxu0 %v4061
        %4148 = vmatpush.msra.mxu0 %v4057
        %4149 = vmatpush.msra.mxu0 %v4053
        %4150 = vmatpush.msra.mxu0 %v4049
        %4151 = vmatmul.f32.gmra.mxu0 %v4095
        %v4152 = vpop.f32.mrf.mxu0
        %v4153 = vadd.f32 %v4077, %v4152
        %4154 = vmatmul.f32.gmra.mxu0 %v4098
        %v4155 = vpop.f32.mrf.mxu0
        %v4156 = vadd.f32 %v4082, %v4155
        %4157 = vmatmul.f32.gmra.mxu0 %v4101
        %v4158 = vpop.f32.mrf.mxu0
        %v4159 = vadd.f32 %v4087, %v4158
        %4160 = vmatmul.f32.gmra.mxu0 %v4104
        %v4161 = vpop.f32.mrf.mxu0
        %v4162 = vadd.f32 %v4092, %v4161
        %4163 = vdwg.mxu0
        %4164 = vmatpush.msra.mxu0 0.0
        %4165 = vmatpush.msra.mxu0 0.0
        %4166 = vmatpush.msra.mxu0 0.0
        %4167 = vmatpush.msra.mxu0 0.0
        %4168 = vmatpush.msra.mxu0 0.0
        %4169 = vmatpush.msra.mxu0 0.0
        %4170 = vmatpush.msra.mxu0 0.0
        %4171 = vmatpush.msra.mxu0 0.0
        %4172 = vmatpush.msra.mxu0 0.0
        %4173 = vmatpush.msra.mxu0 0.0
        %4174 = vmatpush.msra.mxu0 0.0
        %4175 = vmatpush.msra.mxu0 0.0
        %4176 = vmatpush.msra.mxu0 %v4062
        %4177 = vmatpush.msra.mxu0 %v4058
        %4178 = vmatpush.msra.mxu0 %v4054
        %4179 = vmatpush.msra.mxu0 %v4050
        %4180 = vmatmul.f32.gmra.mxu0 %v4095
        %v4181 = vpop.f32.mrf.mxu0
        %v4182 = vadd.f32 %v4077, %v4181
        %4183 = vmatmul.f32.gmra.mxu0 %v4098
        %v4184 = vpop.f32.mrf.mxu0
        %v4185 = vadd.f32 %v4082, %v4184
        %4186 = vmatmul.f32.gmra.mxu0 %v4101
        %v4187 = vpop.f32.mrf.mxu0
        %v4188 = vadd.f32 %v4087, %v4187
        %4189 = vmatmul.f32.gmra.mxu0 %v4104
        %v4190 = vpop.f32.mrf.mxu0
        %v4191 = vadd.f32 %v4092, %v4190
        %4192 = vdwg.mxu0
        %4193 = vmatpush.msra.mxu0 0.0
        %4194 = vmatpush.msra.mxu0 0.0
        %4195 = vmatpush.msra.mxu0 0.0
        %4196 = vmatpush.msra.mxu0 0.0
        %4197 = vmatpush.msra.mxu0 0.0
        %4198 = vmatpush.msra.mxu0 0.0
        %4199 = vmatpush.msra.mxu0 0.0
        %4200 = vmatpush.msra.mxu0 0.0
        %4201 = vmatpush.msra.mxu0 0.0
        %4202 = vmatpush.msra.mxu0 0.0
        %4203 = vmatpush.msra.mxu0 0.0
        %4204 = vmatpush.msra.mxu0 0.0
        %4205 = vmatpush.msra.mxu0 %v4063
        %4206 = vmatpush.msra.mxu0 %v4059
        %4207 = vmatpush.msra.mxu0 %v4055
        %4208 = vmatpush.msra.mxu0 %v4051
        %4209 = vmatmul.f32.gmra.mxu0 %v4095
        %v4210 = vpop.f32.mrf.mxu0
        %v4211 = vadd.f32 %v4077, %v4210
        %4212 = vmatmul.f32.gmra.mxu0 %v4098
        %v4213 = vpop.f32.mrf.mxu0
        %v4214 = vadd.f32 %v4082, %v4213
        %4215 = vmatmul.f32.gmra.mxu0 %v4101
        %v4216 = vpop.f32.mrf.mxu0
        %v4217 = vadd.f32 %v4087, %v4216
        %4218 = vmatmul.f32.gmra.mxu0 %v4104
        %v4219 = vpop.f32.mrf.mxu0
        %v4220 = vadd.f32 %v4092, %v4219
        %4221 = vdwg.mxu0
        %v4222 = vmax.f32 %v4124, 0.0
        %v4223 = vmax.f32 %v4153, 0.0
        %v4224 = vmax.f32 %v4182, 0.0
        %v4225 = vmax.f32 %v4211, 0.0
        %v4226 = vmax.f32 %v4127, 0.0
        %v4227 = vmax.f32 %v4156, 0.0
        %v4228 = vmax.f32 %v4185, 0.0
        %v4229 = vmax.f32 %v4214, 0.0
        %v4230 = vmax.f32 %v4130, 0.0
        %v4231 = vmax.f32 %v4159, 0.0
        %v4232 = vmax.f32 %v4188, 0.0
        %v4233 = vmax.f32 %v4217, 0.0
        %v4234 = vmax.f32 %v4133, 0.0
        %v4235 = vmax.f32 %v4162, 0.0
        %v4236 = vmax.f32 %v4191, 0.0
        %v4237 = vmax.f32 %v4220, 0.0
        %vm4238 = vcmp.ne.f32.partialorder %v4124, %v4124
        %vm4239 = vcmp.ne.f32.partialorder %v4153, %v4153
        %vm4240 = vcmp.ne.f32.partialorder %v4182, %v4182
        %vm4241 = vcmp.ne.f32.partialorder %v4211, %v4211
        %vm4242 = vcmp.ne.f32.partialorder %v4127, %v4127
        %vm4243 = vcmp.ne.f32.partialorder %v4156, %v4156
        %vm4244 = vcmp.ne.f32.partialorder %v4185, %v4185
        %vm4245 = vcmp.ne.f32.partialorder %v4214, %v4214
        %vm4246 = vcmp.ne.f32.partialorder %v4130, %v4130
        %vm4247 = vcmp.ne.f32.partialorder %v4159, %v4159
        %vm4248 = vcmp.ne.f32.partialorder %v4188, %v4188
        %vm4249 = vcmp.ne.f32.partialorder %v4217, %v4217
        %vm4250 = vcmp.ne.f32.partialorder %v4133, %v4133
        %vm4251 = vcmp.ne.f32.partialorder %v4162, %v4162
        %vm4252 = vcmp.ne.f32.partialorder %v4191, %v4191
        %vm4253 = vcmp.ne.f32.partialorder %v4220, %v4220
        %v4254 = vadd.f32 %v4124, 0.0
        %v4255 = vadd.f32 %v4153, 0.0
        %v4256 = vadd.f32 %v4182, 0.0
        %v4257 = vadd.f32 %v4211, 0.0
        %v4258 = vadd.f32 %v4127, 0.0
        %v4259 = vadd.f32 %v4156, 0.0
        %v4260 = vadd.f32 %v4185, 0.0
        %v4261 = vadd.f32 %v4214, 0.0
        %v4262 = vadd.f32 %v4130, 0.0
        %v4263 = vadd.f32 %v4159, 0.0
        %v4264 = vadd.f32 %v4188, 0.0
        %v4265 = vadd.f32 %v4217, 0.0
        %v4266 = vadd.f32 %v4133, 0.0
        %v4267 = vadd.f32 %v4162, 0.0
        %v4268 = vadd.f32 %v4191, 0.0
        %v4269 = vadd.f32 %v4220, 0.0
        %v4270 = vand.u32 2147483647, %v4124
        %v4271 = vand.u32 2147483647, %v4153
        %v4272 = vand.u32 2147483647, %v4182
        %v4273 = vand.u32 2147483647, %v4211
        %v4274 = vand.u32 2147483647, %v4127
        %v4275 = vand.u32 2147483647, %v4156
        %v4276 = vand.u32 2147483647, %v4185
        %v4277 = vand.u32 2147483647, %v4214
        %v4278 = vand.u32 2147483647, %v4130
        %v4279 = vand.u32 2147483647, %v4159
        %v4280 = vand.u32 2147483647, %v4188
        %v4281 = vand.u32 2147483647, %v4217
        %v4282 = vand.u32 2147483647, %v4133
        %v4283 = vand.u32 2147483647, %v4162
        %v4284 = vand.u32 2147483647, %v4191
        %v4285 = vand.u32 2147483647, %v4220
        %v4286 = vsub.f32 0.0, %v4270
        %v4287 = vsub.f32 0.0, %v4271
        %v4288 = vsub.f32 0.0, %v4272
        %v4289 = vsub.f32 0.0, %v4273
        %v4290 = vsub.f32 0.0, %v4274
        %v4291 = vsub.f32 0.0, %v4275
        %v4292 = vsub.f32 0.0, %v4276
        %v4293 = vsub.f32 0.0, %v4277
        %v4294 = vsub.f32 0.0, %v4278
        %v4295 = vsub.f32 0.0, %v4279
        %v4296 = vsub.f32 0.0, %v4280
        %v4297 = vsub.f32 0.0, %v4281
        %v4298 = vsub.f32 0.0, %v4282
        %v4299 = vsub.f32 0.0, %v4283
        %v4300 = vsub.f32 0.0, %v4284
        %v4301 = vsub.f32 0.0, %v4285
        %v4302 = vmul.f32 %v4286, 1.442695
        %v4303 = vpow.pop %v4302
        %v4304 = vmul.f32 %v4287, 1.442695
        %v4305 = vpow.pop %v4304
        %v4306 = vmul.f32 %v4288, 1.442695
        %v4307 = vpow.pop %v4306
        %v4308 = vmul.f32 %v4289, 1.442695
        %v4309 = vpow.pop %v4308
        %v4310 = vmul.f32 %v4290, 1.442695
        %v4311 = vpow.pop %v4310
        %v4312 = vmul.f32 %v4291, 1.442695
        %v4313 = vpow.pop %v4312
        %v4314 = vmul.f32 %v4292, 1.442695
        %v4315 = vpow.pop %v4314
        %v4316 = vmul.f32 %v4293, 1.442695
        %v4317 = vpow.pop %v4316
        %v4318 = vmul.f32 %v4294, 1.442695
        %v4319 = vpow.pop %v4318
        %v4320 = vmul.f32 %v4295, 1.442695
        %v4321 = vpow.pop %v4320
        %v4322 = vmul.f32 %v4296, 1.442695
        %v4323 = vpow.pop %v4322
        %v4324 = vmul.f32 %v4297, 1.442695
        %v4325 = vpow.pop %v4324
        %v4326 = vmul.f32 %v4298, 1.442695
        %v4327 = vpow.pop %v4326
        %v4328 = vmul.f32 %v4299, 1.442695
        %v4329 = vpow.pop %v4328
        %v4330 = vmul.f32 %v4300, 1.442695
        %v4331 = vpow.pop %v4330
        %v4332 = vmul.f32 %v4301, 1.442695
        %v4333 = vpow.pop %v4332
        %v4334 = vadd.f32 %v4303, 1.0
        %v4335 = vlog2.pop %v4334
        %v4336 = vmul.f32 %v4335, 0.6931472
        %v4337 = vmul.f32 -0.5, %v4303
        %v4338 = vadd.f32 %v4337, 1.0
        %v4339 = vmul.f32 %v4338, %v4303
        %v4340 = vand.u32 2147483647, %v4303
        %vm4341 = vcmp.lt.f32.partialorder %v4340, 0.0004427343
        %v4342 = vsel %vm4341, %v4339, %v4336
        %v4343 = vadd.f32 %v4305, 1.0
        %v4344 = vlog2.pop %v4343
        %v4345 = vmul.f32 %v4344, 0.6931472
        %v4346 = vmul.f32 -0.5, %v4305
        %v4347 = vadd.f32 %v4346, 1.0
        %v4348 = vmul.f32 %v4347, %v4305
        %v4349 = vand.u32 2147483647, %v4305
        %vm4350 = vcmp.lt.f32.partialorder %v4349, 0.0004427343
        %v4351 = vsel %vm4350, %v4348, %v4345
        %v4352 = vadd.f32 %v4307, 1.0
        %v4353 = vlog2.pop %v4352
        %v4354 = vmul.f32 %v4353, 0.6931472
        %v4355 = vmul.f32 -0.5, %v4307
        %v4356 = vadd.f32 %v4355, 1.0
        %v4357 = vmul.f32 %v4356, %v4307
        %v4358 = vand.u32 2147483647, %v4307
        %vm4359 = vcmp.lt.f32.partialorder %v4358, 0.0004427343
        %v4360 = vsel %vm4359, %v4357, %v4354
        %v4361 = vadd.f32 %v4309, 1.0
        %v4362 = vlog2.pop %v4361
        %v4363 = vmul.f32 %v4362, 0.6931472
        %v4364 = vmul.f32 -0.5, %v4309
        %v4365 = vadd.f32 %v4364, 1.0
        %v4366 = vmul.f32 %v4365, %v4309
        %v4367 = vand.u32 2147483647, %v4309
        %vm4368 = vcmp.lt.f32.partialorder %v4367, 0.0004427343
        %v4369 = vsel %vm4368, %v4366, %v4363
        %v4370 = vadd.f32 %v4311, 1.0
        %v4371 = vlog2.pop %v4370
        %v4372 = vmul.f32 %v4371, 0.6931472
        %v4373 = vmul.f32 -0.5, %v4311
        %v4374 = vadd.f32 %v4373, 1.0
        %v4375 = vmul.f32 %v4374, %v4311
        %v4376 = vand.u32 2147483647, %v4311
        %vm4377 = vcmp.lt.f32.partialorder %v4376, 0.0004427343
        %v4378 = vsel %vm4377, %v4375, %v4372
        %v4379 = vadd.f32 %v4313, 1.0
        %v4380 = vlog2.pop %v4379
        %v4381 = vmul.f32 %v4380, 0.6931472
        %v4382 = vmul.f32 -0.5, %v4313
        %v4383 = vadd.f32 %v4382, 1.0
        %v4384 = vmul.f32 %v4383, %v4313
        %v4385 = vand.u32 2147483647, %v4313
        %vm4386 = vcmp.lt.f32.partialorder %v4385, 0.0004427343
        %v4387 = vsel %vm4386, %v4384, %v4381
        %v4388 = vadd.f32 %v4315, 1.0
        %v4389 = vlog2.pop %v4388
        %v4390 = vmul.f32 %v4389, 0.6931472
        %v4391 = vmul.f32 -0.5, %v4315
        %v4392 = vadd.f32 %v4391, 1.0
        %v4393 = vmul.f32 %v4392, %v4315
        %v4394 = vand.u32 2147483647, %v4315
        %vm4395 = vcmp.lt.f32.partialorder %v4394, 0.0004427343
        %v4396 = vsel %vm4395, %v4393, %v4390
        %v4397 = vadd.f32 %v4317, 1.0
        %v4398 = vlog2.pop %v4397
        %v4399 = vmul.f32 %v4398, 0.6931472
        %v4400 = vmul.f32 -0.5, %v4317
        %v4401 = vadd.f32 %v4400, 1.0
        %v4402 = vmul.f32 %v4401, %v4317
        %v4403 = vand.u32 2147483647, %v4317
        %vm4404 = vcmp.lt.f32.partialorder %v4403, 0.0004427343
        %v4405 = vsel %vm4404, %v4402, %v4399
        %v4406 = vadd.f32 %v4319, 1.0
        %v4407 = vlog2.pop %v4406
        %v4408 = vmul.f32 %v4407, 0.6931472
        %v4409 = vmul.f32 -0.5, %v4319
        %v4410 = vadd.f32 %v4409, 1.0
        %v4411 = vmul.f32 %v4410, %v4319
        %v4412 = vand.u32 2147483647, %v4319
        %vm4413 = vcmp.lt.f32.partialorder %v4412, 0.0004427343
        %v4414 = vsel %vm4413, %v4411, %v4408
        %v4415 = vadd.f32 %v4321, 1.0
        %v4416 = vlog2.pop %v4415
        %v4417 = vmul.f32 %v4416, 0.6931472
        %v4418 = vmul.f32 -0.5, %v4321
        %v4419 = vadd.f32 %v4418, 1.0
        %v4420 = vmul.f32 %v4419, %v4321
        %v4421 = vand.u32 2147483647, %v4321
        %vm4422 = vcmp.lt.f32.partialorder %v4421, 0.0004427343
        %v4423 = vsel %vm4422, %v4420, %v4417
        %v4424 = vadd.f32 %v4323, 1.0
        %v4425 = vlog2.pop %v4424
        %v4426 = vmul.f32 %v4425, 0.6931472
        %v4427 = vmul.f32 -0.5, %v4323
        %v4428 = vadd.f32 %v4427, 1.0
        %v4429 = vmul.f32 %v4428, %v4323
        %v4430 = vand.u32 2147483647, %v4323
        %vm4431 = vcmp.lt.f32.partialorder %v4430, 0.0004427343
        %v4432 = vsel %vm4431, %v4429, %v4426
        %v4433 = vadd.f32 %v4325, 1.0
        %v4434 = vlog2.pop %v4433
        %v4435 = vmul.f32 %v4434, 0.6931472
        %v4436 = vmul.f32 -0.5, %v4325
        %v4437 = vadd.f32 %v4436, 1.0
        %v4438 = vmul.f32 %v4437, %v4325
        %v4439 = vand.u32 2147483647, %v4325
        %vm4440 = vcmp.lt.f32.partialorder %v4439, 0.0004427343
        %v4441 = vsel %vm4440, %v4438, %v4435
        %v4442 = vadd.f32 %v4327, 1.0
        %v4443 = vlog2.pop %v4442
        %v4444 = vmul.f32 %v4443, 0.6931472
        %v4445 = vmul.f32 -0.5, %v4327
        %v4446 = vadd.f32 %v4445, 1.0
        %v4447 = vmul.f32 %v4446, %v4327
        %v4448 = vand.u32 2147483647, %v4327
        %vm4449 = vcmp.lt.f32.partialorder %v4448, 0.0004427343
        %v4450 = vsel %vm4449, %v4447, %v4444
        %v4451 = vadd.f32 %v4329, 1.0
        %v4452 = vlog2.pop %v4451
        %v4453 = vmul.f32 %v4452, 0.6931472
        %v4454 = vmul.f32 -0.5, %v4329
        %v4455 = vadd.f32 %v4454, 1.0
        %v4456 = vmul.f32 %v4455, %v4329
        %v4457 = vand.u32 2147483647, %v4329
        %vm4458 = vcmp.lt.f32.partialorder %v4457, 0.0004427343
        %v4459 = vsel %vm4458, %v4456, %v4453
        %v4460 = vadd.f32 %v4331, 1.0
        %v4461 = vlog2.pop %v4460
        %v4462 = vmul.f32 %v4461, 0.6931472
        %v4463 = vmul.f32 -0.5, %v4331
        %v4464 = vadd.f32 %v4463, 1.0
        %v4465 = vmul.f32 %v4464, %v4331
        %v4466 = vand.u32 2147483647, %v4331
        %vm4467 = vcmp.lt.f32.partialorder %v4466, 0.0004427343
        %v4468 = vsel %vm4467, %v4465, %v4462
        %v4469 = vadd.f32 %v4333, 1.0
        %v4470 = vlog2.pop %v4469
        %v4471 = vmul.f32 %v4470, 0.6931472
        %v4472 = vmul.f32 -0.5, %v4333
        %v4473 = vadd.f32 %v4472, 1.0
        %v4474 = vmul.f32 %v4473, %v4333
        %v4475 = vand.u32 2147483647, %v4333
        %vm4476 = vcmp.lt.f32.partialorder %v4475, 0.0004427343
        %v4477 = vsel %vm4476, %v4474, %v4471
        %v4478 = vadd.f32 %v4222, %v4342
        %v4479 = vadd.f32 %v4223, %v4351
        %v4480 = vadd.f32 %v4224, %v4360
        %v4481 = vadd.f32 %v4225, %v4369
        %v4482 = vadd.f32 %v4226, %v4378
        %v4483 = vadd.f32 %v4227, %v4387
        %v4484 = vadd.f32 %v4228, %v4396
        %v4485 = vadd.f32 %v4229, %v4405
        %v4486 = vadd.f32 %v4230, %v4414
        %v4487 = vadd.f32 %v4231, %v4423
        %v4488 = vadd.f32 %v4232, %v4432
        %v4489 = vadd.f32 %v4233, %v4441
        %v4490 = vadd.f32 %v4234, %v4450
        %v4491 = vadd.f32 %v4235, %v4459
        %v4492 = vadd.f32 %v4236, %v4468
        %v4493 = vadd.f32 %v4237, %v4477
        %v4494 = vsel %vm4238, %v4254, %v4478
        %v4495 = vsel %vm4239, %v4255, %v4479
        %v4496 = vsel %vm4240, %v4256, %v4480
        %v4497 = vsel %vm4241, %v4257, %v4481
        %v4498 = vsel %vm4242, %v4258, %v4482
        %v4499 = vsel %vm4243, %v4259, %v4483
        %v4500 = vsel %vm4244, %v4260, %v4484
        %v4501 = vsel %vm4245, %v4261, %v4485
        %v4502 = vsel %vm4246, %v4262, %v4486
        %v4503 = vsel %vm4247, %v4263, %v4487
        %v4504 = vsel %vm4248, %v4264, %v4488
        %v4505 = vsel %vm4249, %v4265, %v4489
        %v4506 = vsel %vm4250, %v4266, %v4490
        %v4507 = vsel %vm4251, %v4267, %v4491
        %v4508 = vsel %vm4252, %v4268, %v4492
        %v4509 = vsel %vm4253, %v4269, %v4493
        %v4510 = vld [vmem:[%s5] sm:$0x7]
        %v4511 = vld [vmem:[%s6] sm:$0x7]
        %4513 = vset.pattern.permute.xlu0 0
        %4514 = vperm.xlu0 %4513, %v4511
        %v4515 = vpop.permute.xlu0 %4514
        %v4518 = vsel %vm3201, %v4510, 0
        %4520 = vmatpush.msra.mxu0 0.0
        %4521 = vmatpush.msra.mxu0 0.0
        %4522 = vmatpush.msra.mxu0 0.0
        %4523 = vmatpush.msra.mxu0 0.0
        %4524 = vmatpush.msra.mxu0 0.0
        %4525 = vmatpush.msra.mxu0 0.0
        %4526 = vmatpush.msra.mxu0 0.0
        %4527 = vmatpush.msra.mxu0 0.0
        %4528 = vmatpush.msra.mxu0 0.0
        %4529 = vmatpush.msra.mxu0 0.0
        %4530 = vmatpush.msra.mxu0 0.0
        %4531 = vmatpush.msra.mxu0 0.0
        %4532 = vmatpush.msra.mxu0 %v4506
        %4533 = vmatpush.msra.mxu0 %v4502
        %4534 = vmatpush.msra.mxu0 %v4498
        %4535 = vmatpush.msra.mxu0 %v4494
        %4536 = vmatmul.f32.gmra.mxu0 %v4518
        %v4537 = vpop.f32.mrf.mxu0
        %v4538 = vadd.f32 %v4515, %v4537
        %4539 = vdwg.mxu0
        %4540 = vmatpush.msra.mxu0 0.0
        %4541 = vmatpush.msra.mxu0 0.0
        %4542 = vmatpush.msra.mxu0 0.0
        %4543 = vmatpush.msra.mxu0 0.0
        %4544 = vmatpush.msra.mxu0 0.0
        %4545 = vmatpush.msra.mxu0 0.0
        %4546 = vmatpush.msra.mxu0 0.0
        %4547 = vmatpush.msra.mxu0 0.0
        %4548 = vmatpush.msra.mxu0 0.0
        %4549 = vmatpush.msra.mxu0 0.0
        %4550 = vmatpush.msra.mxu0 0.0
        %4551 = vmatpush.msra.mxu0 0.0
        %4552 = vmatpush.msra.mxu0 %v4507
        %4553 = vmatpush.msra.mxu0 %v4503
        %4554 = vmatpush.msra.mxu0 %v4499
        %4555 = vmatpush.msra.mxu0 %v4495
        %4556 = vmatmul.f32.gmra.mxu0 %v4518
        %v4557 = vpop.f32.mrf.mxu0
        %v4558 = vadd.f32 %v4515, %v4557
        %4559 = vdwg.mxu0
        %4560 = vmatpush.msra.mxu0 0.0
        %4561 = vmatpush.msra.mxu0 0.0
        %4562 = vmatpush.msra.mxu0 0.0
        %4563 = vmatpush.msra.mxu0 0.0
        %4564 = vmatpush.msra.mxu0 0.0
        %4565 = vmatpush.msra.mxu0 0.0
        %4566 = vmatpush.msra.mxu0 0.0
        %4567 = vmatpush.msra.mxu0 0.0
        %4568 = vmatpush.msra.mxu0 0.0
        %4569 = vmatpush.msra.mxu0 0.0
        %4570 = vmatpush.msra.mxu0 0.0
        %4571 = vmatpush.msra.mxu0 0.0
        %4572 = vmatpush.msra.mxu0 %v4508
        %4573 = vmatpush.msra.mxu0 %v4504
        %4574 = vmatpush.msra.mxu0 %v4500
        %4575 = vmatpush.msra.mxu0 %v4496
        %4576 = vmatmul.f32.gmra.mxu0 %v4518
        %v4577 = vpop.f32.mrf.mxu0
        %v4578 = vadd.f32 %v4515, %v4577
        %4579 = vdwg.mxu0
        %4580 = vmatpush.msra.mxu0 0.0
        %4581 = vmatpush.msra.mxu0 0.0
        %4582 = vmatpush.msra.mxu0 0.0
        %4583 = vmatpush.msra.mxu0 0.0
        %4584 = vmatpush.msra.mxu0 0.0
        %4585 = vmatpush.msra.mxu0 0.0
        %4586 = vmatpush.msra.mxu0 0.0
        %4587 = vmatpush.msra.mxu0 0.0
        %4588 = vmatpush.msra.mxu0 0.0
        %4589 = vmatpush.msra.mxu0 0.0
        %4590 = vmatpush.msra.mxu0 0.0
        %4591 = vmatpush.msra.mxu0 0.0
        %4592 = vmatpush.msra.mxu0 %v4509
        %4593 = vmatpush.msra.mxu0 %v4505
        %4594 = vmatpush.msra.mxu0 %v4501
        %4595 = vmatpush.msra.mxu0 %v4497
        %4596 = vmatmul.f32.gmra.mxu0 %v4518
        %v4597 = vpop.f32.mrf.mxu0
        %v4598 = vadd.f32 %v4515, %v4597
        %4599 = vdwg.mxu0
        %v4604 = vrot.slane %v4558, 4
        %v4605 = vrot.slane %v4598, 4
        %vm4606 = vcmask 1043456
        %v4607 = vsel %vm4606, %v4538, %v4604
        %v4608 = vsel %vm4606, %v4578, %v4605
        %4611 = vst [vmem:[%s272] sm:$0x77] %v4607
        %4612 = vst [vmem:[%s272 + $0x8] sm:$0x77] %v4608
        %s4613 = sand.u32 %s181, 1
        %s4614 = scalar_lea.sflag [#allocation3], %s4613
        %s4615 = sand.u32 %s181, 1
        %s4616 = smul.addr %s4615, 16
        %s4617 = scalar_lea.vmem [#allocation2], %s4616
        // Predicated region
        $region49: #{tpu_custom_call.1} parent=47 // pred_check
          %p4618 = pneg %p191
        $region50: #{tpu_custom_call.1} parent=47 // pred_check_branch
          %4620 = sbr.rel (%p4618) target = $region52
        $region51: #{tpu_custom_call.1} parent=47 // pred_region
          %s4621 = smul.u32 4, %s21
          %4623 = vsyncadd %s4614, 0
          %s4624 = smul.addr %s4621, 4
          %s4625 = scalar_lea.hbm %s7, %s4624
          %s4627 = sshll.u32 %s4617, 4
          %s4628 = int_to_ptr.vmem [resolvable:$true] %s4627
          %s4629 = sshll.u32 %s4625, 4
          %s4630 = int_to_ptr.hbm [resolvable:$true] %s4629
          %4632 = dma.vmem_to_hbm [thread:$0]  %s4628, 256, %s4630, %s4614
        $region52: #{tpu_custom_call.1} parent=47 // pred_fallthru
          _
      $region48: #{tpu_custom_call.1} parent=5 // pred_fallthru
        _
      %p4633 = scmp.le.s32.totalorder 2, %s16
      // Predicated region
      $region53: #{tpu_custom_call.1} parent=5 // pred_check
        %p4634 = pneg %p4633
      $region54: #{tpu_custom_call.1} parent=5 // pred_check_branch
        %4636 = sbr.rel (%p4634) target = $region56
      $region55: #{tpu_custom_call.1} parent=5 // pred_region
        %s4637 = ssub.s32 %s16, 2
        // Predicated region
        $region57: #{tpu_custom_call.1} parent=55 // pred_check
          %p4638 = pneg %p197
        $region58: #{tpu_custom_call.1} parent=55 // pred_check_branch
          %4640 = sbr.rel (%p4638) target = $region60
        $region59: #{tpu_custom_call.1} parent=55 // pred_region
          %s4641 = sand.u32 %s182, 1
          %s4642 = scalar_lea.sflag [#allocation3], %s4641
          %s4643 = sand.u32 %s182, 1
          %s4644 = smul.addr %s4643, 16
          %s4645 = scalar_lea.vmem [#allocation2], %s4644
          %4647 = dma.done %s4642, 256
        $region60: #{tpu_custom_call.1} parent=55 // pred_fallthru
          _
      $region56: #{tpu_custom_call.1} parent=5 // pred_fallthru
        _
    $region6: #{tpu_custom_call.1} parent=1 // loop_footer
      %s20 = sadd.s32 1, %s16
    $region7: #{tpu_custom_call.1} parent=1 // loop_footer_branch
      %15 = sbr.rel target = $region3
    $region8: #{tpu_custom_call.1} parent=1 // loop_exit
      _
    %4648 = vsyncpa [#allocation3], 1
    %s4649 = scalar_lea.sflag [#allocation3], 1
    %4650 = vsyncpa %s4649, 1

</llo_original>
